<compile_context>
chip_gen: v5e
topology: v5e:2x2
jax: 0.10.0
libtpu: 0.0.40
codegen_flags: <defaults>
</compile_context>

<pallas_src>
import jax
import jax.numpy as jnp
from jax.experimental import pallas as pl
from jax.experimental.pallas import tpu as pltpu

EMBED_DIM = 32            # embedding_dim
N_PER_TYPE = 16           # nodes per node type
BN_EPS = 1e-5
NUM_CNT_EMBEDDINGS = 5
NUM_NODES = {"user": N_PER_TYPE, "item": N_PER_TYPE}

# kg.canonical_etypes of the synthetic knowledge graph
CANONICAL_ETYPES = (
    ("user", "clicks", "item"),      # has integer 'cnt' edge feature -> edge embedding
    ("item", "similar", "item"),     # no 'cnt'
    ("item", "clicked_by", "user"),  # no 'cnt'
)
EDGE_EMB_ETYPES = ("clicks",)
NTYPES = ("user", "item")

# ---- packed-operand layouts --------------------------------------------------
ND = N_PER_TYPE * EMBED_DIM                    # 512  (one flat edge slab width)

# w_big columns: per etype [tile(wk,16) | tile(wq,16) | wv (pad to 128)] then
# [w_self_user (pad 128) | w_self_item (pad 128)].  Every block starts on a
# 128-lane boundary.
ETYPE_STRIDE = 2 * ND + 128                    # 1152
K_OFF, Q_OFF, V_OFF = 0, ND, 2 * ND
SELF_COL = {"user": 3 * ETYPE_STRIDE, "item": 3 * ETYPE_STRIDE + 128}
W_COLS = 3 * ETYPE_STRIDE + 256                # 3712

# aux512 rows: [block-diag cnt-embedding (128) | block-diag mask (16) |
#               tiled fc_q biases (3) | pad (5)]
AUX_EMB0, AUX_BM0, AUX_BQ0, AUX_ROWS = 0, 128, 144, 152

# tall32 rows: [small vector params + w_agg (80) | R_item (1024) | R_user (512)]
T_SMALL_ROWS = 80
T_RITEM0, T_RUSER0, T_ROWS = 80, 80 + 2 * ND, 80 + 3 * ND
SM_GAMMA = {"user": 0, "item": 2}
SM_BETA = {"user": 1, "item": 3}
SM_BAGG = {"user": 4, "item": 5}
SM_ALPHA = {"user": 6, "item": 7}
SM_WAGG = {"user": 16, "item": 48}

# graph cols: [cnt one-hot (128) | item masks [clicks|similar] (32) |
#              user mask  [clicked_by|zeros] (32)]
G_OH0 = 0
G_MASK = {"item": 128, "user": 160}
G_COLS = 192

_COMPILER_PARAMS = pltpu.CompilerParams(dimension_semantics=("arbitrary",))


def build_vtype2eutypes():
    v2eu = {}
    for utype, etype, vtype in CANONICAL_ETYPES:
        v2eu.setdefault(vtype, []).append((etype, utype))
    return v2eu


V2EU = build_vtype2eutypes()


def _spec(shape):
    return pl.BlockSpec(shape, lambda i, n=len(shape): (0,) * n)


# ----------------------------------------------------------------------------- kernel

def _fused_forward_kernel(ft_ref, wbig_ref, aux_ref, tall_ref, graph_ref, out_ref):
    d = EMBED_DIM
    n = N_PER_TYPE

    small = tall_ref[0:T_SMALL_ROWS, :]                      # (80, 32)
    ft = ft_ref[...]                                         # (32, 32)

    # ---- per-ntype BatchNorm1d (training-mode batch statistics) -------------
    def bn(x, nt):
        mean = jnp.mean(x, axis=0, keepdims=True)
        var = jnp.mean(jnp.square(x - mean), axis=0, keepdims=True)
        g = small[SM_GAMMA[nt]:SM_GAMMA[nt] + 1, :]
        b = small[SM_BETA[nt]:SM_BETA[nt] + 1, :]
        return (x - mean) * jax.lax.rsqrt(var + BN_EPS) * g + b

    ftn_user = bn(ft[0:n, :], "user")
    ftn_item = bn(ft[n:2 * n, :], "item")
    ftn_all = jnp.concatenate([ftn_user, ftn_item], axis=0)  # (32, 32)

    # ---- single fused projection matmul --------------------------------------
    # Produces, lane-dense and 128-aligned: per etype k_tiled (16,512),
    # q_tiled (16,512), v (16,32); plus linear_self for both ntypes.
    proj = jnp.dot(ftn_all, wbig_ref[...],
                   preferred_element_type=jnp.float32)       # (32, 3712)

    row0 = {"user": 0, "item": n}

    def pslice(ntype, col, width):
        r = row0[ntype]
        return proj[r:r + n, col:col + width]

    # ---- 'cnt' edge-count embedding gather on the MXU ------------------------
    # onehot (16,128) @ block-diag emb (128,512) -> fte slab for item-dst rows.
    fte = jnp.dot(graph_ref[:, G_OH0:G_OH0 + 128], aux_ref[AUX_EMB0:AUX_BM0, :],
                  preferred_element_type=jnp.float32)        # (16, 512)

    blockmask = aux_ref[AUX_BM0:AUX_BM0 + n, :]              # (16, 512) 0/1
    ones_nn = jnp.ones((n, n), jnp.float32)

    # ---- per-etype flat edge slabs ee[dst, src*d + j] = q+k(+fte) ------------
    ee = {}
    vals = {}
    for e_idx, (utype, etype, vtype) in enumerate(CANONICAL_ETYPES):
        base = e_idx * ETYPE_STRIDE
        k_tiled = pslice(vtype, base + K_OFF, ND)            # k[dst,j] at col s*d+j
        q_tiled = pslice(utype, base + Q_OFF, ND)            # q[src,j] at every block
        bq_row = aux_ref[AUX_BQ0 + e_idx:AUX_BQ0 + e_idx + 1, :]   # tiled fc_q bias
        # q broadcast over dst rows via MXU: ones @ ((q_tiled + bq) * blockmask)
        q_bc = jnp.dot(ones_nn, (q_tiled + bq_row) * blockmask,
                       preferred_element_type=jnp.float32)   # (16, 512)
        slab = k_tiled + q_bc
        if etype in EDGE_EMB_ETYPES:
            slab = slab + fte
        ee[etype] = slab
        vals[etype] = pslice(utype, base + V_OFF, d)         # (16, 32)

    # ---- per-vtype: scores via MXU, masked edge_softmax, aggregate, output ---
    def vtype_out(sig, r0, r_rows, vtype, vmat, self_nt):
        scores = jnp.dot(sig, tall_ref[r0:r0 + r_rows, :],
                         preferred_element_type=jnp.float32)            # (16, 32)
        mask = graph_ref[:, G_MASK[vtype]:G_MASK[vtype] + 2 * n]        # (16, 32)
        masked = jnp.where(mask > 0, scores, -1e30)
        rowmax = jnp.max(masked, axis=-1, keepdims=True)
        p = jnp.exp(masked - rowmax) * mask                  # exactly 0 off-graph
        denom = jnp.sum(p, axis=-1, keepdims=True)
        inv = pl.reciprocal(jnp.where(denom > 0, denom, 1.0), approx=True)
        agg = jnp.dot(p, vmat, preferred_element_type=jnp.float32) * inv
        w_agg = small[SM_WAGG[vtype]:SM_WAGG[vtype] + d, :]
        pre = (jnp.dot(agg, w_agg, preferred_element_type=jnp.float32)
               + small[SM_BAGG[vtype]:SM_BAGG[vtype] + 1, :]
               + pslice(self_nt, SELF_COL[vtype], d))        # linear_self(ft_dst)
        alpha = small[SM_ALPHA[vtype]:SM_ALPHA[vtype] + 1, :]
        return jnp.where(pre > 0, pre, alpha * pre)          # PReLU

    # vtype 'item' <- (clicks: user src, similar: item src)
    sig_item = jax.nn.sigmoid(
        jnp.concatenate([ee["clicks"], ee["similar"]], axis=1))         # (16, 1024)
    v_item = jnp.concatenate([vals["clicks"], vals["similar"]], axis=0)  # (32, 32)
    out_item = vtype_out(sig_item, T_RITEM0, 2 * ND, "item", v_item, "item")

    # vtype 'user' <- (clicked_by: item src); columns 16:32 are masked-out pads
    sig_user = jax.nn.sigmoid(ee["clicked_by"])                          # (16, 512)
    v_user = jnp.concatenate(
        [vals["clicked_by"], jnp.zeros_like(vals["clicked_by"])], axis=0)
    out_user = vtype_out(sig_user, T_RUSER0, ND, "user", v_user, "user")

    # single lane-packed output block: rows 0:16 user, 16:32 item
    out_ref[...] = jnp.concatenate([out_user, out_item], axis=0)


# ----------------------------------------------------------------------------- wrapper

def pack_inputs(params, graph, ft_src):
    d = EMBED_DIM
    n = N_PER_TYPE
    f32 = jnp.float32

    # ---- big projection slab (32, 3712), every block 128-lane aligned -------
    cols = []
    for _, etype, _ in CANONICAL_ETYPES:
        p = params["edge_agg"][etype]
        cols.append(jnp.tile(p["wk"], (1, n)))               # 512: k in flat layout
        cols.append(jnp.tile(p["wq"], (1, n)))               # 512: q tiled (masked later)
        cols.append(p["wv"])                                  # 32
        cols.append(jnp.zeros((d, 128 - d), f32))             # pad to 1152
    for nt in NTYPES:
        cols.append(params["vtype"][nt]["w_self"])
        cols.append(jnp.zeros((d, 128 - d), f32))
    w_big = jnp.concatenate(cols, axis=1)                     # (32, 3712)
    assert w_big.shape == (d, W_COLS)

    # ---- aux slab (152, 512): block-diag cnt embedding, block mask, bq rows --
    eye = jnp.eye(n, dtype=f32)
    emb_pad = jnp.zeros((8, d), f32).at[:NUM_CNT_EMBEDDINGS].set(
        params["edge_emb"]["clicks"])
    emb_bd = jnp.kron(eye, emb_pad)                           # (128, 512)
    blockmask = jnp.kron(eye, jnp.ones((1, d), f32))          # (16, 512)
    bq_rows = jnp.concatenate(
        [jnp.tile(params["edge_agg"][etype]["bq"].reshape(1, d), (1, n))
         for _, etype, _ in CANONICAL_ETYPES], axis=0)        # (3, 512)
    aux = jnp.concatenate(
        [emb_bd, blockmask, bq_rows, jnp.zeros((AUX_ROWS - 147, ND), f32)], axis=0)
    assert aux.shape == (AUX_ROWS, ND)

    # ---- tall 32-wide slab: small vec params + w_agg + attn_e score matrices -
    def r_block(attn):                                        # (1,d) -> (512, 16)
        return jnp.kron(eye, attn.reshape(d, 1))

    z = jnp.zeros((ND, n), f32)
    r_item = jnp.concatenate(
        [jnp.concatenate([r_block(params["edge_agg"]["clicks"]["attn_e"]), z], 1),
         jnp.concatenate([z, r_block(params["edge_agg"]["similar"]["attn_e"])], 1)],
        axis=0)                                               # (1024, 32)
    r_user = jnp.concatenate(
        [r_block(params["edge_agg"]["clicked_by"]["attn_e"]), z], axis=1)  # (512, 32)

    small = jnp.zeros((16, d), f32)
    for nt in NTYPES:
        small = small.at[SM_GAMMA[nt]].set(params["bn"][nt]["gamma"].reshape(d))
        small = small.at[SM_BETA[nt]].set(params["bn"][nt]["beta"].reshape(d))
        small = small.at[SM_BAGG[nt]].set(params["vtype"][nt]["b_agg"].reshape(d))
        small = small.at[SM_ALPHA[nt]].set(params["vtype"][nt]["alpha"].reshape(d))
    small = jnp.concatenate(
        [small, params["vtype"]["user"]["w_agg"], params["vtype"]["item"]["w_agg"]],
        axis=0)                                               # (80, 32)
    tall = jnp.concatenate([small, r_item, r_user], axis=0)   # (1616, 32)
    assert tall.shape == (T_ROWS, d)

    # ---- graph slab (16, 192): cnt one-hot + per-vtype packed masks ----------
    onehot = jax.nn.one_hot(graph["cnt"]["clicks"].astype(jnp.int32), 8,
                            dtype=f32).reshape(n, 8 * n)      # (16, 128)
    mask_item = jnp.concatenate(
        [graph["mask"]["clicks"], graph["mask"]["similar"]], axis=1)     # (16, 32)
    mask_user = jnp.concatenate(
        [graph["mask"]["clicked_by"], jnp.zeros((n, n), f32)], axis=1)   # (16, 32)
    graph_pk = jnp.concatenate([onehot, mask_item, mask_user], axis=1)   # (16, 192)
    assert graph_pk.shape == (n, G_COLS)

    ft_all = jnp.concatenate([ft_src["user"], ft_src["item"]], axis=0)   # (32, 32)
    return ft_all, w_big, aux, tall, graph_pk


def hetero_attention_forward(params, graph, ft_src):
    # feat_drop / attn_drop are no-ops at p=0.0 in the reference module.
    args = pack_inputs(params, graph, ft_src)
    out = pl.pallas_call(
        _fused_forward_kernel,
        grid=(1,),
        in_specs=[_spec(a.shape) for a in args],
        out_specs=_spec((2 * N_PER_TYPE, EMBED_DIM)),
        out_shape=jax.ShapeDtypeStruct((2 * N_PER_TYPE, EMBED_DIM), jnp.float32),
        compiler_params=_COMPILER_PARAMS,
    )(*args)
    return {"user": out[:N_PER_TYPE], "item": out[N_PER_TYPE:]}

# TODO(synk): for realistic graph sizes the dense O(N_dst * N_src * d) working
# set must be tiled over dst-node blocks with a real grid axis marked
# "parallel" (so v7x's 2 TCs split it), vmem_limit_bytes re-derived for v7x's
# 64 MiB VMEM, and the MXU operands cast to bf16 (keeping softmax math in f32).
# At 16x16 nodes a single grid step trivially fits VMEM and bf16 casts only
# cost accuracy.


# ----------------------------------------------------------------------------- setup

def init_params(key):
    params = {"bn": {}, "edge_agg": {}, "edge_emb": {}, "vtype": {}}
    keys = iter(jax.random.split(key, 64))
    nk = lambda: next(keys)
    d = EMBED_DIM
    for _, etype, _ in CANONICAL_ETYPES:
        params["edge_agg"][etype] = {
            # Linear weights stored pre-transposed as [in, out] so kernels do x @ W.
            "wq": 0.1 * jax.random.normal(nk(), (d, d), jnp.float32),
            "bq": 0.1 * jax.random.normal(nk(), (1, d), jnp.float32),
            "wk": 0.1 * jax.random.normal(nk(), (d, d), jnp.float32),
            "wv": 0.1 * jax.random.normal(nk(), (d, d), jnp.float32),
            "attn_e": jax.random.normal(nk(), (1, d), jnp.float32),  # th.randn(1, val_feats)
        }
    params["edge_emb"]["clicks"] = 0.1 * jax.random.normal(
        nk(), (NUM_CNT_EMBEDDINGS, d), jnp.float32)
    for vtype in V2EU:
        params["vtype"][vtype] = {
            "w_agg": 0.1 * jax.random.normal(nk(), (d, d), jnp.float32),
            "b_agg": 0.1 * jax.random.normal(nk(), (1, d), jnp.float32),
            "w_self": 0.1 * jax.random.normal(nk(), (d, d), jnp.float32),
            "alpha": jnp.full((1, d), 0.25, jnp.float32),   # PReLU default init
        }
        params["bn"][vtype] = {
            "gamma": jnp.ones((1, d), jnp.float32),
            "beta": jnp.zeros((1, d), jnp.float32),
        }
    return params


def build_graph(key):
    k1, k2, k3, k4 = jax.random.split(key, 4)
    masks = {
        "clicks": jax.random.bernoulli(
            k1, 0.4, (NUM_NODES["item"], NUM_NODES["user"])).astype(jnp.float32),
        "similar": jax.random.bernoulli(
            k2, 0.4, (NUM_NODES["item"], NUM_NODES["item"])).astype(jnp.float32),
        "clicked_by": jax.random.bernoulli(
            k3, 0.4, (NUM_NODES["user"], NUM_NODES["item"])).astype(jnp.float32),
    }
    cnt = {"clicks": jax.random.randint(
        k4, (NUM_NODES["item"], NUM_NODES["user"]), 0, NUM_CNT_EMBEDDINGS)}
    return {"mask": masks, "cnt": cnt}


# ----------------------------------------------------------------------------- reference

def reference_forward(params, graph, ft_src):
    # Pure-JAX reference with identical dense-graph semantics (torch module math).
    def bn(x, g, b):
        m = jnp.mean(x, 0, keepdims=True)
        v = jnp.mean((x - m) ** 2, 0, keepdims=True)
        return (x - m) / jnp.sqrt(v + BN_EPS) * g + b

    ft = {nt: bn(x, params["bn"][nt]["gamma"], params["bn"][nt]["beta"])
          for nt, x in ft_src.items()}
    feats = {}
    for vtype, eutypes in V2EU.items():
        scores, vals, masks = [], [], []
        for etype, utype in eutypes:
            p = params["edge_agg"][etype]
            mask = graph["mask"][etype]
            nv, nu = mask.shape
            q = ft[utype] @ p["wq"] + p["bq"]
            k = ft[vtype] @ p["wk"]
            v = ft[utype] @ p["wv"]
            fte = (params["edge_emb"][etype][graph["cnt"][etype]]
                   if etype in params["edge_emb"]
                   else jnp.zeros((nv, nu, EMBED_DIM), jnp.float32))
            e = q[None, :, :] + k[:, None, :] + fte
            s = jnp.sum(p["attn_e"][None, :, :] * jax.nn.sigmoid(e), axis=-1)
            scores.append(s)
            vals.append(v)
            masks.append(mask)
        s = jnp.concatenate(scores, 1)
        m = jnp.concatenate(masks, 1)
        vv = jnp.concatenate(vals, 0)
        masked = jnp.where(m > 0, s, -1e30)
        pexp = jnp.exp(masked - jnp.max(masked, -1, keepdims=True)) * m
        denom = jnp.sum(pexp, -1, keepdims=True)
        a = pexp / jnp.where(denom > 0, denom, 1.0)
        agg = a @ vv
        pv = params["vtype"][vtype]
        pre = agg @ pv["w_agg"] + pv["b_agg"] + ft[vtype] @ pv["w_self"]
        feats[vtype] = jnp.where(pre > 0, pre, pv["alpha"] * pre)
    return feats

# TODO(synk): dropout (feat_drop/attn_drop) is a no-op at p=0.0 in the reference
# module and is therefore omitted; sparse DGL message passing is realized with
# dense per-etype adjacency masks (exact for simple graphs, num_heads=1).

if __name__ == "__main__":
    key = jax.random.PRNGKey(0)
    kp, kg, ku, ki = jax.random.split(key, 4)
    params = init_params(kp)
    graph = build_graph(kg)
    ft_src = {
        "user": jax.random.normal(ku, (NUM_NODES["user"], EMBED_DIM), jnp.float32),
        "item": jax.random.normal(ki, (NUM_NODES["item"], EMBED_DIM), jnp.float32),
    }

    out = hetero_attention_forward(params, graph, ft_src)
    out = {k: jax.block_until_ready(v) for k, v in out.items()}

    ref = reference_forward(params, graph, ft_src)
    for k in out:
        assert out[k].shape == (NUM_NODES[k], EMBED_DIM), out[k].shape
        err = float(jnp.max(jnp.abs(out[k] - ref[k])))
        assert err < 1e-2, (k, err)

    print("KERNEL_OK")
</pallas_src>

<mosaic_0001>
module attributes {stable_mosaic.version = 11 : i64} {
  func.func @_fused_forward_kernel(%arg0: i32, %arg1: memref<32x32xf32, #tpu.memory_space<vmem>>, %arg2: memref<32x3712xf32, #tpu.memory_space<vmem>>, %arg3: memref<152x512xf32, #tpu.memory_space<vmem>>, %arg4: memref<1616x32xf32, #tpu.memory_space<vmem>>, %arg5: memref<16x192xf32, #tpu.memory_space<vmem>>, %arg6: memref<32x32xf32, #tpu.memory_space<vmem>>) attributes {dimension_semantics = [#tpu.dimension_semantics<arbitrary>], iteration_bounds = array<i64: 1>, scalar_prefetch = 0 : i64, scratch_operands = 0 : i64, tpu.core_type = #tpu.core_type<tc>, window_params = [{pipeline_mode = #tpu.pipeline_mode<synchronous>, transform_indices = @transform_0, window_bounds = array<i64: 32, 32>}, {pipeline_mode = #tpu.pipeline_mode<synchronous>, transform_indices = @transform_1, window_bounds = array<i64: 32, 3712>}, {pipeline_mode = #tpu.pipeline_mode<synchronous>, transform_indices = @transform_2, window_bounds = array<i64: 152, 512>}, {pipeline_mode = #tpu.pipeline_mode<synchronous>, transform_indices = @transform_3, window_bounds = array<i64: 1616, 32>}, {pipeline_mode = #tpu.pipeline_mode<synchronous>, transform_indices = @transform_4, window_bounds = array<i64: 16, 192>}, {pipeline_mode = #tpu.pipeline_mode<synchronous>, transform_indices = @transform_5, window_bounds = array<i64: 32, 32>}]} {
    %c0 = arith.constant 0 : index
    %c0_0 = arith.constant 0 : index
    %0 = vector.load %arg4[%c0, %c0_0] : memref<1616x32xf32, #tpu.memory_space<vmem>>, vector<80x32xf32>
    %c0_1 = arith.constant 0 : index
    %c0_2 = arith.constant 0 : index
    %1 = vector.load %arg1[%c0_1, %c0_2] : memref<32x32xf32, #tpu.memory_space<vmem>>, vector<32x32xf32>
    %2 = vector.extract_strided_slice %1 {offsets = [0, 0], sizes = [16, 32], strides = [1, 1]} : vector<32x32xf32> to vector<16x32xf32>
    %cst = arith.constant dense<0.000000e+00> : vector<32xf32>
    %3 = vector.multi_reduction <add>, %2, %cst [0] : vector<16x32xf32> to vector<32xf32>
    %4 = vector.shape_cast %3 : vector<32xf32> to vector<1x32xf32>
    %cst_3 = arith.constant 1.600000e+01 : f32
    %5 = vector.broadcast %cst_3 : f32 to vector<1x32xf32>
    %6 = arith.divf %4, %5 : vector<1x32xf32>
    %7 = vector.broadcast %6 : vector<1x32xf32> to vector<16x32xf32>
    %8 = arith.subf %2, %7 : vector<16x32xf32>
    %9 = arith.mulf %8, %8 : vector<16x32xf32>
    %cst_4 = arith.constant dense<0.000000e+00> : vector<32xf32>
    %10 = vector.multi_reduction <add>, %9, %cst_4 [0] : vector<16x32xf32> to vector<32xf32>
    %11 = vector.shape_cast %10 : vector<32xf32> to vector<1x32xf32>
    %cst_5 = arith.constant 1.600000e+01 : f32
    %12 = vector.broadcast %cst_5 : f32 to vector<1x32xf32>
    %13 = arith.divf %11, %12 : vector<1x32xf32>
    %14 = vector.extract_strided_slice %0 {offsets = [0, 0], sizes = [1, 32], strides = [1, 1]} : vector<80x32xf32> to vector<1x32xf32>
    %15 = vector.extract_strided_slice %0 {offsets = [1, 0], sizes = [1, 32], strides = [1, 1]} : vector<80x32xf32> to vector<1x32xf32>
    %16 = vector.broadcast %6 : vector<1x32xf32> to vector<16x32xf32>
    %17 = arith.subf %2, %16 : vector<16x32xf32>
    %cst_6 = arith.constant 9.99999974E-6 : f32
    %18 = vector.broadcast %cst_6 : f32 to vector<1x32xf32>
    %19 = arith.addf %13, %18 : vector<1x32xf32>
    %20 = math.rsqrt %19 : vector<1x32xf32>
    %21 = vector.broadcast %20 : vector<1x32xf32> to vector<16x32xf32>
    %22 = arith.mulf %17, %21 : vector<16x32xf32>
    %23 = vector.broadcast %14 : vector<1x32xf32> to vector<16x32xf32>
    %24 = arith.mulf %22, %23 : vector<16x32xf32>
    %25 = vector.broadcast %15 : vector<1x32xf32> to vector<16x32xf32>
    %26 = arith.addf %24, %25 : vector<16x32xf32>
    %27 = vector.extract_strided_slice %1 {offsets = [16, 0], sizes = [16, 32], strides = [1, 1]} : vector<32x32xf32> to vector<16x32xf32>
    %cst_7 = arith.constant dense<0.000000e+00> : vector<32xf32>
    %28 = vector.multi_reduction <add>, %27, %cst_7 [0] : vector<16x32xf32> to vector<32xf32>
    %29 = vector.shape_cast %28 : vector<32xf32> to vector<1x32xf32>
    %cst_8 = arith.constant 1.600000e+01 : f32
    %30 = vector.broadcast %cst_8 : f32 to vector<1x32xf32>
    %31 = arith.divf %29, %30 : vector<1x32xf32>
    %32 = vector.broadcast %31 : vector<1x32xf32> to vector<16x32xf32>
    %33 = arith.subf %27, %32 : vector<16x32xf32>
    %34 = arith.mulf %33, %33 : vector<16x32xf32>
    %cst_9 = arith.constant dense<0.000000e+00> : vector<32xf32>
    %35 = vector.multi_reduction <add>, %34, %cst_9 [0] : vector<16x32xf32> to vector<32xf32>
    %36 = vector.shape_cast %35 : vector<32xf32> to vector<1x32xf32>
    %cst_10 = arith.constant 1.600000e+01 : f32
    %37 = vector.broadcast %cst_10 : f32 to vector<1x32xf32>
    %38 = arith.divf %36, %37 : vector<1x32xf32>
    %39 = vector.extract_strided_slice %0 {offsets = [2, 0], sizes = [1, 32], strides = [1, 1]} : vector<80x32xf32> to vector<1x32xf32>
    %40 = vector.extract_strided_slice %0 {offsets = [3, 0], sizes = [1, 32], strides = [1, 1]} : vector<80x32xf32> to vector<1x32xf32>
    %41 = vector.broadcast %31 : vector<1x32xf32> to vector<16x32xf32>
    %42 = arith.subf %27, %41 : vector<16x32xf32>
    %cst_11 = arith.constant 9.99999974E-6 : f32
    %43 = vector.broadcast %cst_11 : f32 to vector<1x32xf32>
    %44 = arith.addf %38, %43 : vector<1x32xf32>
    %45 = math.rsqrt %44 : vector<1x32xf32>
    %46 = vector.broadcast %45 : vector<1x32xf32> to vector<16x32xf32>
    %47 = arith.mulf %42, %46 : vector<16x32xf32>
    %48 = vector.broadcast %39 : vector<1x32xf32> to vector<16x32xf32>
    %49 = arith.mulf %47, %48 : vector<16x32xf32>
    %50 = vector.broadcast %40 : vector<1x32xf32> to vector<16x32xf32>
    %51 = arith.addf %49, %50 : vector<16x32xf32>
    %52 = tpu.concatenate %26, %51 in 0 : vector<16x32xf32>, vector<16x32xf32> -> vector<32x32xf32>
    %c0_12 = arith.constant 0 : index
    %c0_13 = arith.constant 0 : index
    %53 = vector.load %arg2[%c0_12, %c0_13] : memref<32x3712xf32, #tpu.memory_space<vmem>>, vector<32x3712xf32>
    %cst_14 = arith.constant dense<0.000000e+00> : vector<32x3712xf32>
    %54 = tpu.matmul %52, %53, %cst_14 {dimension_numbers = #tpu.dot_dimension_numbers<[1], [0], [0], [1], [0, 0, 1, 1], [], []>} : vector<32x32xf32>, vector<32x3712xf32>, vector<32x3712xf32> -> vector<32x3712xf32>
    %c0_15 = arith.constant 0 : index
    %c0_16 = arith.constant 0 : index
    %55 = vector.load %arg5[%c0_15, %c0_16] : memref<16x192xf32, #tpu.memory_space<vmem>>, vector<16x128xf32>
    %c0_17 = arith.constant 0 : index
    %c0_18 = arith.constant 0 : index
    %56 = vector.load %arg3[%c0_17, %c0_18] : memref<152x512xf32, #tpu.memory_space<vmem>>, vector<128x512xf32>
    %cst_19 = arith.constant dense<0.000000e+00> : vector<16x512xf32>
    %57 = tpu.matmul %55, %56, %cst_19 {dimension_numbers = #tpu.dot_dimension_numbers<[1], [0], [0], [1], [0, 0, 1, 1], [], []>} : vector<16x128xf32>, vector<128x512xf32>, vector<16x512xf32> -> vector<16x512xf32>
    %c128 = arith.constant 128 : index
    %c0_20 = arith.constant 0 : index
    %58 = vector.load %arg3[%c128, %c0_20] : memref<152x512xf32, #tpu.memory_space<vmem>>, vector<16x512xf32>
    %cst_21 = arith.constant 1.000000e+00 : f32
    %59 = vector.broadcast %cst_21 : f32 to vector<16x16xf32>
    %60 = vector.extract_strided_slice %54 {offsets = [16, 0], sizes = [16, 512], strides = [1, 1]} : vector<32x3712xf32> to vector<16x512xf32>
    %61 = vector.extract_strided_slice %54 {offsets = [0, 512], sizes = [16, 512], strides = [1, 1]} : vector<32x3712xf32> to vector<16x512xf32>
    %c144 = arith.constant 144 : index
    %c0_22 = arith.constant 0 : index
    %62 = vector.load %arg3[%c144, %c0_22] : memref<152x512xf32, #tpu.memory_space<vmem>>, vector<1x512xf32>
    %63 = vector.broadcast %62 : vector<1x512xf32> to vector<16x512xf32>
    %64 = arith.addf %61, %63 : vector<16x512xf32>
    %65 = arith.mulf %64, %58 : vector<16x512xf32>
    %cst_23 = arith.constant dense<0.000000e+00> : vector<16x512xf32>
    %66 = tpu.matmul %59, %65, %cst_23 {dimension_numbers = #tpu.dot_dimension_numbers<[1], [0], [0], [1], [0, 0, 1, 1], [], []>} : vector<16x16xf32>, vector<16x512xf32>, vector<16x512xf32> -> vector<16x512xf32>
    %67 = arith.addf %60, %66 : vector<16x512xf32>
    %68 = arith.addf %67, %57 : vector<16x512xf32>
    %69 = vector.extract_strided_slice %54 {offsets = [0, 1024], sizes = [16, 32], strides = [1, 1]} : vector<32x3712xf32> to vector<16x32xf32>
    %70 = vector.extract_strided_slice %54 {offsets = [16, 1152], sizes = [16, 512], strides = [1, 1]} : vector<32x3712xf32> to vector<16x512xf32>
    %71 = vector.extract_strided_slice %54 {offsets = [16, 1664], sizes = [16, 512], strides = [1, 1]} : vector<32x3712xf32> to vector<16x512xf32>
    %c145 = arith.constant 145 : index
    %c0_24 = arith.constant 0 : index
    %72 = vector.load %arg3[%c145, %c0_24] : memref<152x512xf32, #tpu.memory_space<vmem>>, vector<1x512xf32>
    %73 = vector.broadcast %72 : vector<1x512xf32> to vector<16x512xf32>
    %74 = arith.addf %71, %73 : vector<16x512xf32>
    %75 = arith.mulf %74, %58 : vector<16x512xf32>
    %cst_25 = arith.constant dense<0.000000e+00> : vector<16x512xf32>
    %76 = tpu.matmul %59, %75, %cst_25 {dimension_numbers = #tpu.dot_dimension_numbers<[1], [0], [0], [1], [0, 0, 1, 1], [], []>} : vector<16x16xf32>, vector<16x512xf32>, vector<16x512xf32> -> vector<16x512xf32>
    %77 = arith.addf %70, %76 : vector<16x512xf32>
    %78 = vector.extract_strided_slice %54 {offsets = [16, 2176], sizes = [16, 32], strides = [1, 1]} : vector<32x3712xf32> to vector<16x32xf32>
    %79 = vector.extract_strided_slice %54 {offsets = [0, 2304], sizes = [16, 512], strides = [1, 1]} : vector<32x3712xf32> to vector<16x512xf32>
    %80 = vector.extract_strided_slice %54 {offsets = [16, 2816], sizes = [16, 512], strides = [1, 1]} : vector<32x3712xf32> to vector<16x512xf32>
    %c146 = arith.constant 146 : index
    %c0_26 = arith.constant 0 : index
    %81 = vector.load %arg3[%c146, %c0_26] : memref<152x512xf32, #tpu.memory_space<vmem>>, vector<1x512xf32>
    %82 = vector.broadcast %81 : vector<1x512xf32> to vector<16x512xf32>
    %83 = arith.addf %80, %82 : vector<16x512xf32>
    %84 = arith.mulf %83, %58 : vector<16x512xf32>
    %cst_27 = arith.constant dense<0.000000e+00> : vector<16x512xf32>
    %85 = tpu.matmul %59, %84, %cst_27 {dimension_numbers = #tpu.dot_dimension_numbers<[1], [0], [0], [1], [0, 0, 1, 1], [], []>} : vector<16x16xf32>, vector<16x512xf32>, vector<16x512xf32> -> vector<16x512xf32>
    %86 = arith.addf %79, %85 : vector<16x512xf32>
    %87 = vector.extract_strided_slice %54 {offsets = [16, 3328], sizes = [16, 32], strides = [1, 1]} : vector<32x3712xf32> to vector<16x32xf32>
    %88 = tpu.concatenate %68, %77 in 1 : vector<16x512xf32>, vector<16x512xf32> -> vector<16x1024xf32>
    %89 = arith.negf %88 : vector<16x1024xf32>
    %90 = math.exp %89 : vector<16x1024xf32>
    %cst_28 = arith.constant 1.000000e+00 : f32
    %91 = vector.broadcast %cst_28 : f32 to vector<16x1024xf32>
    %92 = arith.addf %91, %90 : vector<16x1024xf32>
    %93 = arith.divf %91, %92 : vector<16x1024xf32>
    %94 = tpu.concatenate %69, %78 in 0 : vector<16x32xf32>, vector<16x32xf32> -> vector<32x32xf32>
    %c80 = arith.constant 80 : index
    %c0_29 = arith.constant 0 : index
    %95 = vector.load %arg4[%c80, %c0_29] : memref<1616x32xf32, #tpu.memory_space<vmem>>, vector<1024x32xf32>
    %cst_30 = arith.constant dense<0.000000e+00> : vector<16x32xf32>
    %96 = tpu.matmul %93, %95, %cst_30 {dimension_numbers = #tpu.dot_dimension_numbers<[1], [0], [0], [1], [0, 0, 1, 1], [], []>} : vector<16x1024xf32>, vector<1024x32xf32>, vector<16x32xf32> -> vector<16x32xf32>
    %c0_31 = arith.constant 0 : index
    %c128_32 = arith.constant 128 : index
    %97 = vector.load %arg5[%c0_31, %c128_32] : memref<16x192xf32, #tpu.memory_space<vmem>>, vector<16x32xf32>
    %cst_33 = arith.constant 0.000000e+00 : f32
    %98 = vector.broadcast %cst_33 : f32 to vector<16x32xf32>
    %99 = arith.cmpf ogt, %97, %98 : vector<16x32xf32>
    %cst_34 = arith.constant -1.000000e+30 : f32
    %100 = vector.broadcast %cst_34 : f32 to vector<16x32xf32>
    %101 = arith.select %99, %96, %100 : vector<16x32xi1>, vector<16x32xf32>
    %cst_35 = arith.constant dense<0xFF800000> : vector<16xf32>
    %102 = vector.multi_reduction <maximumf>, %101, %cst_35 [1] : vector<16x32xf32> to vector<16xf32>
    %103 = vector.shape_cast %102 : vector<16xf32> to vector<16x1xf32>
    %104 = vector.broadcast %103 : vector<16x1xf32> to vector<16x32xf32>
    %105 = arith.subf %101, %104 : vector<16x32xf32>
    %106 = math.exp %105 : vector<16x32xf32>
    %107 = arith.mulf %106, %97 : vector<16x32xf32>
    %cst_36 = arith.constant dense<0.000000e+00> : vector<16xf32>
    %108 = vector.multi_reduction <add>, %107, %cst_36 [1] : vector<16x32xf32> to vector<16xf32>
    %109 = vector.shape_cast %108 : vector<16xf32> to vector<16x1xf32>
    %cst_37 = arith.constant 0.000000e+00 : f32
    %110 = vector.broadcast %cst_37 : f32 to vector<16x1xf32>
    %111 = arith.cmpf ogt, %109, %110 : vector<16x1xf32>
    %cst_38 = arith.constant 1.000000e+00 : f32
    %112 = vector.broadcast %cst_38 : f32 to vector<16x1xf32>
    %113 = arith.select %111, %109, %112 : vector<16x1xi1>, vector<16x1xf32>
    %114 = tpu.reciprocal %113 {approx = true} : vector<16x1xf32> -> vector<16x1xf32>
    %cst_39 = arith.constant dense<0.000000e+00> : vector<16x32xf32>
    %115 = tpu.matmul %107, %94, %cst_39 {dimension_numbers = #tpu.dot_dimension_numbers<[1], [0], [0], [1], [0, 0, 1, 1], [], []>} : vector<16x32xf32>, vector<32x32xf32>, vector<16x32xf32> -> vector<16x32xf32>
    %116 = vector.broadcast %114 : vector<16x1xf32> to vector<16x32xf32>
    %117 = arith.mulf %115, %116 : vector<16x32xf32>
    %118 = vector.extract_strided_slice %0 {offsets = [48, 0], sizes = [32, 32], strides = [1, 1]} : vector<80x32xf32> to vector<32x32xf32>
    %cst_40 = arith.constant dense<0.000000e+00> : vector<16x32xf32>
    %119 = tpu.matmul %117, %118, %cst_40 {dimension_numbers = #tpu.dot_dimension_numbers<[1], [0], [0], [1], [0, 0, 1, 1], [], []>} : vector<16x32xf32>, vector<32x32xf32>, vector<16x32xf32> -> vector<16x32xf32>
    %120 = vector.extract_strided_slice %0 {offsets = [5, 0], sizes = [1, 32], strides = [1, 1]} : vector<80x32xf32> to vector<1x32xf32>
    %121 = vector.broadcast %120 : vector<1x32xf32> to vector<16x32xf32>
    %122 = arith.addf %119, %121 : vector<16x32xf32>
    %123 = vector.extract_strided_slice %54 {offsets = [16, 3584], sizes = [16, 32], strides = [1, 1]} : vector<32x3712xf32> to vector<16x32xf32>
    %124 = arith.addf %122, %123 : vector<16x32xf32>
    %125 = vector.extract_strided_slice %0 {offsets = [7, 0], sizes = [1, 32], strides = [1, 1]} : vector<80x32xf32> to vector<1x32xf32>
    %cst_41 = arith.constant 0.000000e+00 : f32
    %126 = vector.broadcast %cst_41 : f32 to vector<16x32xf32>
    %127 = arith.cmpf ogt, %124, %126 : vector<16x32xf32>
    %128 = vector.broadcast %125 : vector<1x32xf32> to vector<16x32xf32>
    %129 = arith.mulf %128, %124 : vector<16x32xf32>
    %130 = arith.select %127, %124, %129 : vector<16x32xi1>, vector<16x32xf32>
    %131 = arith.negf %86 : vector<16x512xf32>
    %132 = math.exp %131 : vector<16x512xf32>
    %cst_42 = arith.constant 1.000000e+00 : f32
    %133 = vector.broadcast %cst_42 : f32 to vector<16x512xf32>
    %134 = arith.addf %133, %132 : vector<16x512xf32>
    %135 = arith.divf %133, %134 : vector<16x512xf32>
    %cst_43 = arith.constant 0.000000e+00 : f32
    %136 = vector.broadcast %cst_43 : f32 to vector<16x32xf32>
    %137 = tpu.concatenate %87, %136 in 0 : vector<16x32xf32>, vector<16x32xf32> -> vector<32x32xf32>
    %c1104 = arith.constant 1104 : index
    %c0_44 = arith.constant 0 : index
    %138 = vector.load %arg4[%c1104, %c0_44] : memref<1616x32xf32, #tpu.memory_space<vmem>>, vector<512x32xf32>
    %cst_45 = arith.constant dense<0.000000e+00> : vector<16x32xf32>
    %139 = tpu.matmul %135, %138, %cst_45 {dimension_numbers = #tpu.dot_dimension_numbers<[1], [0], [0], [1], [0, 0, 1, 1], [], []>} : vector<16x512xf32>, vector<512x32xf32>, vector<16x32xf32> -> vector<16x32xf32>
    %c0_46 = arith.constant 0 : index
    %c160 = arith.constant 160 : index
    %140 = vector.load %arg5[%c0_46, %c160] : memref<16x192xf32, #tpu.memory_space<vmem>>, vector<16x32xf32>
    %cst_47 = arith.constant 0.000000e+00 : f32
    %141 = vector.broadcast %cst_47 : f32 to vector<16x32xf32>
    %142 = arith.cmpf ogt, %140, %141 : vector<16x32xf32>
    %cst_48 = arith.constant -1.000000e+30 : f32
    %143 = vector.broadcast %cst_48 : f32 to vector<16x32xf32>
    %144 = arith.select %142, %139, %143 : vector<16x32xi1>, vector<16x32xf32>
    %cst_49 = arith.constant dense<0xFF800000> : vector<16xf32>
    %145 = vector.multi_reduction <maximumf>, %144, %cst_49 [1] : vector<16x32xf32> to vector<16xf32>
    %146 = vector.shape_cast %145 : vector<16xf32> to vector<16x1xf32>
    %147 = vector.broadcast %146 : vector<16x1xf32> to vector<16x32xf32>
    %148 = arith.subf %144, %147 : vector<16x32xf32>
    %149 = math.exp %148 : vector<16x32xf32>
    %150 = arith.mulf %149, %140 : vector<16x32xf32>
    %cst_50 = arith.constant dense<0.000000e+00> : vector<16xf32>
    %151 = vector.multi_reduction <add>, %150, %cst_50 [1] : vector<16x32xf32> to vector<16xf32>
    %152 = vector.shape_cast %151 : vector<16xf32> to vector<16x1xf32>
    %cst_51 = arith.constant 0.000000e+00 : f32
    %153 = vector.broadcast %cst_51 : f32 to vector<16x1xf32>
    %154 = arith.cmpf ogt, %152, %153 : vector<16x1xf32>
    %cst_52 = arith.constant 1.000000e+00 : f32
    %155 = vector.broadcast %cst_52 : f32 to vector<16x1xf32>
    %156 = arith.select %154, %152, %155 : vector<16x1xi1>, vector<16x1xf32>
    %157 = tpu.reciprocal %156 {approx = true} : vector<16x1xf32> -> vector<16x1xf32>
    %cst_53 = arith.constant dense<0.000000e+00> : vector<16x32xf32>
    %158 = tpu.matmul %150, %137, %cst_53 {dimension_numbers = #tpu.dot_dimension_numbers<[1], [0], [0], [1], [0, 0, 1, 1], [], []>} : vector<16x32xf32>, vector<32x32xf32>, vector<16x32xf32> -> vector<16x32xf32>
    %159 = vector.broadcast %157 : vector<16x1xf32> to vector<16x32xf32>
    %160 = arith.mulf %158, %159 : vector<16x32xf32>
    %161 = vector.extract_strided_slice %0 {offsets = [16, 0], sizes = [32, 32], strides = [1, 1]} : vector<80x32xf32> to vector<32x32xf32>
    %cst_54 = arith.constant dense<0.000000e+00> : vector<16x32xf32>
    %162 = tpu.matmul %160, %161, %cst_54 {dimension_numbers = #tpu.dot_dimension_numbers<[1], [0], [0], [1], [0, 0, 1, 1], [], []>} : vector<16x32xf32>, vector<32x32xf32>, vector<16x32xf32> -> vector<16x32xf32>
    %163 = vector.extract_strided_slice %0 {offsets = [4, 0], sizes = [1, 32], strides = [1, 1]} : vector<80x32xf32> to vector<1x32xf32>
    %164 = vector.broadcast %163 : vector<1x32xf32> to vector<16x32xf32>
    %165 = arith.addf %162, %164 : vector<16x32xf32>
    %166 = vector.extract_strided_slice %54 {offsets = [0, 3456], sizes = [16, 32], strides = [1, 1]} : vector<32x3712xf32> to vector<16x32xf32>
    %167 = arith.addf %165, %166 : vector<16x32xf32>
    %168 = vector.extract_strided_slice %0 {offsets = [6, 0], sizes = [1, 32], strides = [1, 1]} : vector<80x32xf32> to vector<1x32xf32>
    %cst_55 = arith.constant 0.000000e+00 : f32
    %169 = vector.broadcast %cst_55 : f32 to vector<16x32xf32>
    %170 = arith.cmpf ogt, %167, %169 : vector<16x32xf32>
    %171 = vector.broadcast %168 : vector<1x32xf32> to vector<16x32xf32>
    %172 = arith.mulf %171, %167 : vector<16x32xf32>
    %173 = arith.select %170, %167, %172 : vector<16x32xi1>, vector<16x32xf32>
    %174 = tpu.concatenate %173, %130 in 0 : vector<16x32xf32>, vector<16x32xf32> -> vector<32x32xf32>
    %c0_56 = arith.constant 0 : index
    %c0_57 = arith.constant 0 : index
    %175 = vector.load %arg6[%c0_56, %c0_57] : memref<32x32xf32, #tpu.memory_space<vmem>>, vector<32x32xf32>
    tpu.vector_store %arg6[%c0_56, %c0_57], %174 {strides = array<i32>} : memref<32x32xf32, #tpu.memory_space<vmem>>, vector<32x32xf32>,
    return
  }
  func.func @transform_0(%arg0: i32) -> (i32, i32) {
    %c0_i32 = arith.constant 0 : i32
    %c0_i32_0 = arith.constant 0 : i32
    %c0_i32_1 = arith.constant 0 : i32
    return %c0_i32, %c0_i32_0 : i32, i32
  }
  func.func @transform_1(%arg0: i32) -> (i32, i32) {
    %c0_i32 = arith.constant 0 : i32
    %c0_i32_0 = arith.constant 0 : i32
    %c0_i32_1 = arith.constant 0 : i32
    return %c0_i32, %c0_i32_0 : i32, i32
  }
  func.func @transform_2(%arg0: i32) -> (i32, i32) {
    %c0_i32 = arith.constant 0 : i32
    %c0_i32_0 = arith.constant 0 : i32
    %c0_i32_1 = arith.constant 0 : i32
    return %c0_i32, %c0_i32_0 : i32, i32
  }
  func.func @transform_3(%arg0: i32) -> (i32, i32) {
    %c0_i32 = arith.constant 0 : i32
    %c0_i32_0 = arith.constant 0 : i32
    %c0_i32_1 = arith.constant 0 : i32
    return %c0_i32, %c0_i32_0 : i32, i32
  }
  func.func @transform_4(%arg0: i32) -> (i32, i32) {
    %c0_i32 = arith.constant 0 : i32
    %c0_i32_0 = arith.constant 0 : i32
    %c0_i32_1 = arith.constant 0 : i32
    return %c0_i32, %c0_i32_0 : i32, i32
  }
  func.func @transform_5(%arg0: i32) -> (i32, i32) {
    %c0_i32 = arith.constant 0 : i32
    %c0_i32_0 = arith.constant 0 : i32
    %c0_i32_1 = arith.constant 0 : i32
    return %c0_i32, %c0_i32_0 : i32, i32
  }
}

</mosaic_0001>

<llo_original>
// kernel: tpu_custom_call.1
$region0: #{tpu_custom_call.1}
  #allocation0 [shape = 'u32[]', space=smem, size = 0x4, offset = 0x4, fixed_abs, tag = 'smem constant byte address 0x4 - core index']
  #allocation1 [shape = 'u32[72,128]{1,0:T(1,128)}', space=vmem, size = 0x9000, scoped, tag = 'internal scratch']
  %s0 = inlined_call_operand.vmem [shape: f32[32,32], index: 0, kind: input, shape index: {}]
  %s1 = inlined_call_operand.vmem [shape: f32[32,3712], index: 1, kind: input, shape index: {}]
  %s2 = inlined_call_operand.vmem [shape: f32[152,512], index: 2, kind: input, shape index: {}]
  %s3 = inlined_call_operand.vmem [shape: f32[1616,32], index: 3, kind: input, shape index: {}]
  %s4 = inlined_call_operand.vmem [shape: f32[16,192], index: 4, kind: input, shape index: {}]
  %s5 = inlined_call_operand.hbm [shape: f32[32,32], index: 5, kind: output, shape index: {}]
  %s6 = sld [smem:[#allocation0]]
  $region30: #{tpu_custom_call.1} parent=0
    _
  %s8 = ssub.s32 1, %s6
  %s9 = scalar_select 0, %s8, %s6
  $region1: #{tpu_custom_call.1} parent=0
    #allocation2 [shape = 'u8[16384]{0}', space=vmem, size = 0x4000, scoped, tag = 'output window, operand 0, single buffered']
    #allocation3 [shape = 's32[1]{0}', space=sflag, size = 0x4, scoped, tag = 'scoped memory for tpu_custom_call.1']
    %10 = vsyncpa [#allocation3], 0
    // Predicated region
    $region2: #{tpu_custom_call.1} parent=1 // pred_check
      _
    $region3: #{tpu_custom_call.1} parent=1 // pred_check_branch
      %12 = sbr.rel (0) target = $region5
    $region4: #{tpu_custom_call.1} parent=1 // pred_region
      _
    $region5: #{tpu_custom_call.1} parent=1 // pred_fallthru
      _
    // Predicated region
    $region6: #{tpu_custom_call.1} parent=1 // pred_check
      _
    $region7: #{tpu_custom_call.1} parent=1 // pred_check_branch
      %14 = sbr.rel (0) target = $region9
    $region8: #{tpu_custom_call.1} parent=1 // pred_region
      _
    $region9: #{tpu_custom_call.1} parent=1 // pred_fallthru
      _
    // Predicated region
    $region10: #{tpu_custom_call.1} parent=1 // pred_check
      _
    $region11: #{tpu_custom_call.1} parent=1 // pred_check_branch
      %16 = sbr.rel (0) target = $region13
    $region12: #{tpu_custom_call.1} parent=1 // pred_region
      _
    $region13: #{tpu_custom_call.1} parent=1 // pred_fallthru
      _
    // Predicated region
    $region14: #{tpu_custom_call.1} parent=1 // pred_check
      _
    $region15: #{tpu_custom_call.1} parent=1 // pred_check_branch
      %18 = sbr.rel (0) target = $region17
    $region16: #{tpu_custom_call.1} parent=1 // pred_region
      _
    $region17: #{tpu_custom_call.1} parent=1 // pred_fallthru
      _
    // Predicated region
    $region18: #{tpu_custom_call.1} parent=1 // pred_check
      _
    $region19: #{tpu_custom_call.1} parent=1 // pred_check_branch
      %20 = sbr.rel (0) target = $region21
    $region20: #{tpu_custom_call.1} parent=1 // pred_region
      _
    $region21: #{tpu_custom_call.1} parent=1 // pred_fallthru
      _
    %v21 = vld [vmem:[%s3] sm:$0xff]
    %v22 = vld [vmem:[%s3 + $0x10] sm:$0xff]
    %v23 = vld [vmem:[%s3 + $0x18] sm:$0xff]
    %v24 = vld [vmem:[%s3 + $0x20] sm:$0xff]
    %v25 = vld [vmem:[%s3 + $0x28] sm:$0xff]
    %v26 = vld [vmem:[%s3 + $0x30] sm:$0xff]
    %v27 = vld [vmem:[%s3 + $0x38] sm:$0xff]
    %v28 = vld [vmem:[%s3 + $0x40] sm:$0xff]
    %v29 = vld [vmem:[%s3 + $0x48] sm:$0xff]
    %v30 = vld [vmem:[%s0] sm:$0xff]
    %v31 = vld [vmem:[%s0 + $0x8] sm:$0xff]
    %v32 = vld [vmem:[%s0 + $0x10] sm:$0xff]
    %v33 = vld [vmem:[%s0 + $0x18] sm:$0xff]
    %vm34 = vcmask 261120
    %v35 = vsel %vm34, %v30, 0.0
    %v36 = vsel %vm34, %v31, 0.0
    %v37 = vadd.f32 %v35, %v36
    %v38 = vrot.slane %v37, 4
    %v39 = vadd.f32 %v37, %v38
    %v40 = vrot.slane %v39, 2
    %v41 = vadd.f32 %v39, %v40
    %v42 = vrot.slane %v41, 1
    %v43 = vadd.f32 %v41, %v42
    %v44 = vrcp.pop 16.0
    %v45 = vmul.f32 16.0, %v44
    %v46 = vsub.f32 1.0, %v45
    %v47 = vmul.f32 %v44, %v46
    %v48 = vadd.f32 %v44, %v47
    %vm49 = vweird.f32 %v44
    %v50 = vsel %vm49, %v44, %v48
    %v51 = vmul.f32 %v43, %v50
    %v52 = vsub.f32 %v30, %v51
    %v53 = vsub.f32 %v31, %v51
    %v54 = vmul.f32 %v52, %v52
    %v55 = vmul.f32 %v53, %v53
    %v56 = vsel %vm34, %v54, 0.0
    %v57 = vsel %vm34, %v55, 0.0
    %v58 = vadd.f32 %v56, %v57
    %v59 = vrot.slane %v58, 4
    %v60 = vadd.f32 %v58, %v59
    %v61 = vrot.slane %v60, 2
    %v62 = vadd.f32 %v60, %v61
    %v63 = vrot.slane %v62, 1
    %v64 = vadd.f32 %v62, %v63
    %v65 = vmul.f32 %v64, %v50
    %v66 = vadd.f32 %v65, 1e-05
    %v67 = vrsqrt.pop %v66
    %v68 = vmul.f32 %v67, %v66
    %v69 = vmul.f32 %v68, %v67
    %v70 = vmul.f32 0.5, %v69
    %v71 = vsub.f32 1.5, %v70
    %v72 = vmul.f32 %v67, %v71
    %vm73 = vweird.f32 %v66
    %vm74 = vweird.f32 %v67
    %vm75 = vmor %vm73, %vm74
    %v76 = vsel %vm75, %v67, %v72
    %v77 = vmul.f32 %v52, %v76
    %v78 = vmul.f32 %v53, %v76
    %v79 = vperm.slane %v21, 0
    %v80 = vmul.f32 %v77, %v79
    %v81 = vmul.f32 %v78, %v79
    %v82 = vperm.slane %v21, 1
    %v83 = vadd.f32 %v80, %v82
    %v84 = vadd.f32 %v81, %v82
    %v85 = vsel %vm34, %v32, 0.0
    %v86 = vsel %vm34, %v33, 0.0
    %v87 = vadd.f32 %v85, %v86
    %v88 = vrot.slane %v87, 4
    %v89 = vadd.f32 %v87, %v88
    %v90 = vrot.slane %v89, 2
    %v91 = vadd.f32 %v89, %v90
    %v92 = vrot.slane %v91, 1
    %v93 = vadd.f32 %v91, %v92
    %v94 = vmul.f32 %v93, %v50
    %v95 = vsub.f32 %v32, %v94
    %v96 = vsub.f32 %v33, %v94
    %v97 = vmul.f32 %v95, %v95
    %v98 = vmul.f32 %v96, %v96
    %v99 = vsel %vm34, %v97, 0.0
    %v100 = vsel %vm34, %v98, 0.0
    %v101 = vadd.f32 %v99, %v100
    %v102 = vrot.slane %v101, 4
    %v103 = vadd.f32 %v101, %v102
    %v104 = vrot.slane %v103, 2
    %v105 = vadd.f32 %v103, %v104
    %v106 = vrot.slane %v105, 1
    %v107 = vadd.f32 %v105, %v106
    %v108 = vmul.f32 %v107, %v50
    %v109 = vadd.f32 %v108, 1e-05
    %v110 = vrsqrt.pop %v109
    %v111 = vmul.f32 %v110, %v109
    %v112 = vmul.f32 %v111, %v110
    %v113 = vmul.f32 0.5, %v112
    %v114 = vsub.f32 1.5, %v113
    %v115 = vmul.f32 %v110, %v114
    %vm116 = vweird.f32 %v109
    %vm117 = vweird.f32 %v110
    %vm118 = vmor %vm116, %vm117
    %v119 = vsel %vm118, %v110, %v115
    %v120 = vmul.f32 %v95, %v119
    %v121 = vmul.f32 %v96, %v119
    %v122 = vperm.slane %v21, 2
    %v123 = vmul.f32 %v120, %v122
    %v124 = vmul.f32 %v121, %v122
    %v125 = vperm.slane %v21, 3
    %v126 = vadd.f32 %v123, %v125
    %v127 = vadd.f32 %v124, %v125
    %v128 = vld [vmem:[%s1] sm:$0xff]
    %v129 = vld [vmem:[%s1 + $0x8] sm:$0xff]
    %v130 = vld [vmem:[%s1 + $0x10] sm:$0xff]
    %v131 = vld [vmem:[%s1 + $0x18] sm:$0xff]
    %v132 = vld [vmem:[%s1 + $0x20] sm:$0xff]
    %v133 = vld [vmem:[%s1 + $0x28] sm:$0xff]
    %v134 = vld [vmem:[%s1 + $0x30] sm:$0xff]
    %v135 = vld [vmem:[%s1 + $0x38] sm:$0xff]
    %v136 = vld [vmem:[%s1 + $0x40] sm:$0xff]
    %v137 = vld [vmem:[%s1 + $0x48] sm:$0xff]
    %v138 = vld [vmem:[%s1 + $0x50] sm:$0xff]
    %v139 = vld [vmem:[%s1 + $0x58] sm:$0xff]
    %v140 = vld [vmem:[%s1 + $0x60] sm:$0xff]
    %v141 = vld [vmem:[%s1 + $0x68] sm:$0xff]
    %v142 = vld [vmem:[%s1 + $0x70] sm:$0xff]
    %v143 = vld [vmem:[%s1 + $0x78] sm:$0xff]
    %v144 = vld [vmem:[%s1 + $0x80] sm:$0xff]
    %v145 = vld [vmem:[%s1 + $0x88] sm:$0xff]
    %v146 = vld [vmem:[%s1 + $0x90] sm:$0xff]
    %v147 = vld [vmem:[%s1 + $0x98] sm:$0xff]
    %v148 = vld [vmem:[%s1 + $0xa0] sm:$0xff]
    %v149 = vld [vmem:[%s1 + $0xa8] sm:$0xff]
    %v150 = vld [vmem:[%s1 + $0xb0] sm:$0xff]
    %v151 = vld [vmem:[%s1 + $0xb8] sm:$0xff]
    %v152 = vld [vmem:[%s1 + $0xc0] sm:$0xff]
    %v153 = vld [vmem:[%s1 + $0xc8] sm:$0xff]
    %v154 = vld [vmem:[%s1 + $0xd0] sm:$0xff]
    %v155 = vld [vmem:[%s1 + $0xd8] sm:$0xff]
    %v156 = vld [vmem:[%s1 + $0xe0] sm:$0xff]
    %v157 = vld [vmem:[%s1 + $0xe8] sm:$0xff]
    %v158 = vld [vmem:[%s1 + $0xf0] sm:$0xff]
    %v159 = vld [vmem:[%s1 + $0xf8] sm:$0xff]
    %v160 = vld [vmem:[%s1 + $0x100] sm:$0xff]
    %v161 = vld [vmem:[%s1 + $0x108] sm:$0xff]
    %v162 = vld [vmem:[%s1 + $0x110] sm:$0xff]
    %v163 = vld [vmem:[%s1 + $0x118] sm:$0xff]
    %v164 = vld [vmem:[%s1 + $0x120] sm:$0xff]
    %v165 = vld [vmem:[%s1 + $0x128] sm:$0xff]
    %v166 = vld [vmem:[%s1 + $0x130] sm:$0xff]
    %v167 = vld [vmem:[%s1 + $0x138] sm:$0xff]
    %v168 = vld [vmem:[%s1 + $0x140] sm:$0xff]
    %v169 = vld [vmem:[%s1 + $0x148] sm:$0xff]
    %v170 = vld [vmem:[%s1 + $0x150] sm:$0xff]
    %v171 = vld [vmem:[%s1 + $0x158] sm:$0xff]
    %v172 = vld [vmem:[%s1 + $0x160] sm:$0xff]
    %v173 = vld [vmem:[%s1 + $0x168] sm:$0xff]
    %v174 = vld [vmem:[%s1 + $0x170] sm:$0xff]
    %v175 = vld [vmem:[%s1 + $0x178] sm:$0xff]
    %v176 = vld [vmem:[%s1 + $0x180] sm:$0xff]
    %v177 = vld [vmem:[%s1 + $0x188] sm:$0xff]
    %v178 = vld [vmem:[%s1 + $0x190] sm:$0xff]
    %v179 = vld [vmem:[%s1 + $0x198] sm:$0xff]
    %v180 = vld [vmem:[%s1 + $0x1a0] sm:$0xff]
    %v181 = vld [vmem:[%s1 + $0x1a8] sm:$0xff]
    %v182 = vld [vmem:[%s1 + $0x1b0] sm:$0xff]
    %v183 = vld [vmem:[%s1 + $0x1b8] sm:$0xff]
    %v184 = vld [vmem:[%s1 + $0x1c0] sm:$0xff]
    %v185 = vld [vmem:[%s1 + $0x1c8] sm:$0xff]
    %v186 = vld [vmem:[%s1 + $0x1d0] sm:$0xff]
    %v187 = vld [vmem:[%s1 + $0x1d8] sm:$0xff]
    %v188 = vld [vmem:[%s1 + $0x1e0] sm:$0xff]
    %v189 = vld [vmem:[%s1 + $0x1e8] sm:$0xff]
    %v190 = vld [vmem:[%s1 + $0x1f0] sm:$0xff]
    %v191 = vld [vmem:[%s1 + $0x1f8] sm:$0xff]
    %v192 = vld [vmem:[%s1 + $0x200] sm:$0xff]
    %v193 = vld [vmem:[%s1 + $0x208] sm:$0xff]
    %v194 = vld [vmem:[%s1 + $0x210] sm:$0xff]
    %v195 = vld [vmem:[%s1 + $0x218] sm:$0xff]
    %v196 = vld [vmem:[%s1 + $0x220] sm:$0xff]
    %v197 = vld [vmem:[%s1 + $0x228] sm:$0xff]
    %v198 = vld [vmem:[%s1 + $0x230] sm:$0xff]
    %v199 = vld [vmem:[%s1 + $0x238] sm:$0xff]
    %v200 = vld [vmem:[%s1 + $0x240] sm:$0xff]
    %v201 = vld [vmem:[%s1 + $0x248] sm:$0xff]
    %v202 = vld [vmem:[%s1 + $0x250] sm:$0xff]
    %v203 = vld [vmem:[%s1 + $0x258] sm:$0xff]
    %v204 = vld [vmem:[%s1 + $0x260] sm:$0xff]
    %v205 = vld [vmem:[%s1 + $0x268] sm:$0xff]
    %v206 = vld [vmem:[%s1 + $0x270] sm:$0xff]
    %v207 = vld [vmem:[%s1 + $0x278] sm:$0xff]
    %v208 = vld [vmem:[%s1 + $0x280] sm:$0xff]
    %v209 = vld [vmem:[%s1 + $0x288] sm:$0xff]
    %v210 = vld [vmem:[%s1 + $0x290] sm:$0xff]
    %v211 = vld [vmem:[%s1 + $0x298] sm:$0xff]
    %v212 = vld [vmem:[%s1 + $0x2a0] sm:$0xff]
    %v213 = vld [vmem:[%s1 + $0x2a8] sm:$0xff]
    %v214 = vld [vmem:[%s1 + $0x2b0] sm:$0xff]
    %v215 = vld [vmem:[%s1 + $0x2b8] sm:$0xff]
    %v216 = vld [vmem:[%s1 + $0x2c0] sm:$0xff]
    %v217 = vld [vmem:[%s1 + $0x2c8] sm:$0xff]
    %v218 = vld [vmem:[%s1 + $0x2d0] sm:$0xff]
    %v219 = vld [vmem:[%s1 + $0x2d8] sm:$0xff]
    %v220 = vld [vmem:[%s1 + $0x2e0] sm:$0xff]
    %v221 = vld [vmem:[%s1 + $0x2e8] sm:$0xff]
    %v222 = vld [vmem:[%s1 + $0x2f0] sm:$0xff]
    %v223 = vld [vmem:[%s1 + $0x2f8] sm:$0xff]
    %v224 = vld [vmem:[%s1 + $0x300] sm:$0xff]
    %v225 = vld [vmem:[%s1 + $0x308] sm:$0xff]
    %v226 = vld [vmem:[%s1 + $0x310] sm:$0xff]
    %v227 = vld [vmem:[%s1 + $0x318] sm:$0xff]
    %v228 = vld [vmem:[%s1 + $0x320] sm:$0xff]
    %v229 = vld [vmem:[%s1 + $0x328] sm:$0xff]
    %v230 = vld [vmem:[%s1 + $0x330] sm:$0xff]
    %v231 = vld [vmem:[%s1 + $0x338] sm:$0xff]
    %v232 = vld [vmem:[%s1 + $0x340] sm:$0xff]
    %v233 = vld [vmem:[%s1 + $0x348] sm:$0xff]
    %v234 = vld [vmem:[%s1 + $0x350] sm:$0xff]
    %v235 = vld [vmem:[%s1 + $0x358] sm:$0xff]
    %v236 = vld [vmem:[%s1 + $0x360] sm:$0xff]
    %v237 = vld [vmem:[%s1 + $0x368] sm:$0xff]
    %v238 = vld [vmem:[%s1 + $0x370] sm:$0xff]
    %v239 = vld [vmem:[%s1 + $0x378] sm:$0xff]
    %v240 = vld [vmem:[%s1 + $0x380] sm:$0xff]
    %v241 = vld [vmem:[%s1 + $0x388] sm:$0xff]
    %v242 = vld [vmem:[%s1 + $0x390] sm:$0xff]
    %v243 = vld [vmem:[%s1 + $0x398] sm:$0xff]
    %v245 = vsel %vm34, %v83, 0
    %v248 = vsel %vm34, %v84, 0
    %v251 = vsel %vm34, %v126, 0
    %v254 = vsel %vm34, %v127, 0
    %256 = vmatpush.msra.mxu0 0.0
    %257 = vmatpush.msra.mxu0 0.0
    %258 = vmatpush.msra.mxu0 0.0
    %259 = vmatpush.msra.mxu0 0.0
    %260 = vmatpush.msra.mxu0 0.0
    %261 = vmatpush.msra.mxu0 0.0
    %262 = vmatpush.msra.mxu0 0.0
    %263 = vmatpush.msra.mxu0 0.0
    %264 = vmatpush.msra.mxu0 0.0
    %265 = vmatpush.msra.mxu0 0.0
    %266 = vmatpush.msra.mxu0 0.0
    %267 = vmatpush.msra.mxu0 0.0
    %268 = vmatpush.msra.mxu0 %v215
    %269 = vmatpush.msra.mxu0 %v186
    %270 = vmatpush.msra.mxu0 %v157
    %271 = vmatpush.msra.mxu0 %v128
    %272 = vmatmul.f32.gmra.mxu0 %v245
    %v273 = vpop.f32.mrf.mxu0
    %274 = vmatmul.f32.gmra.mxu0 %v248
    %v275 = vpop.f32.mrf.mxu0
    %276 = vmatmul.f32.gmra.mxu0 %v251
    %v277 = vpop.f32.mrf.mxu0
    %v278 = vadd.f32 0.0, %v277
    %279 = vmatmul.f32.gmra.mxu0 %v254
    %v280 = vpop.f32.mrf.mxu0
    %v281 = vadd.f32 0.0, %v280
    %282 = vdwg.mxu0
    %283 = vmatpush.msra.mxu0 0.0
    %284 = vmatpush.msra.mxu0 0.0
    %285 = vmatpush.msra.mxu0 0.0
    %286 = vmatpush.msra.mxu0 0.0
    %287 = vmatpush.msra.mxu0 0.0
    %288 = vmatpush.msra.mxu0 0.0
    %289 = vmatpush.msra.mxu0 0.0
    %290 = vmatpush.msra.mxu0 0.0
    %291 = vmatpush.msra.mxu0 0.0
    %292 = vmatpush.msra.mxu0 0.0
    %293 = vmatpush.msra.mxu0 0.0
    %294 = vmatpush.msra.mxu0 0.0
    %295 = vmatpush.msra.mxu0 %v216
    %296 = vmatpush.msra.mxu0 %v187
    %297 = vmatpush.msra.mxu0 %v158
    %298 = vmatpush.msra.mxu0 %v129
    %299 = vmatmul.f32.gmra.mxu0 %v245
    %v300 = vpop.f32.mrf.mxu0
    %301 = vmatmul.f32.gmra.mxu0 %v248
    %v302 = vpop.f32.mrf.mxu0
    %303 = vmatmul.f32.gmra.mxu0 %v251
    %v304 = vpop.f32.mrf.mxu0
    %v305 = vadd.f32 0.0, %v304
    %306 = vmatmul.f32.gmra.mxu0 %v254
    %v307 = vpop.f32.mrf.mxu0
    %v308 = vadd.f32 0.0, %v307
    %309 = vdwg.mxu0
    %310 = vmatpush.msra.mxu0 0.0
    %311 = vmatpush.msra.mxu0 0.0
    %312 = vmatpush.msra.mxu0 0.0
    %313 = vmatpush.msra.mxu0 0.0
    %314 = vmatpush.msra.mxu0 0.0
    %315 = vmatpush.msra.mxu0 0.0
    %316 = vmatpush.msra.mxu0 0.0
    %317 = vmatpush.msra.mxu0 0.0
    %318 = vmatpush.msra.mxu0 0.0
    %319 = vmatpush.msra.mxu0 0.0
    %320 = vmatpush.msra.mxu0 0.0
    %321 = vmatpush.msra.mxu0 0.0
    %322 = vmatpush.msra.mxu0 %v217
    %323 = vmatpush.msra.mxu0 %v188
    %324 = vmatpush.msra.mxu0 %v159
    %325 = vmatpush.msra.mxu0 %v130
    %326 = vmatmul.f32.gmra.mxu0 %v245
    %v327 = vpop.f32.mrf.mxu0
    %328 = vmatmul.f32.gmra.mxu0 %v248
    %v329 = vpop.f32.mrf.mxu0
    %330 = vmatmul.f32.gmra.mxu0 %v251
    %v331 = vpop.f32.mrf.mxu0
    %v332 = vadd.f32 0.0, %v331
    %333 = vmatmul.f32.gmra.mxu0 %v254
    %v334 = vpop.f32.mrf.mxu0
    %v335 = vadd.f32 0.0, %v334
    %336 = vdwg.mxu0
    %337 = vmatpush.msra.mxu0 0.0
    %338 = vmatpush.msra.mxu0 0.0
    %339 = vmatpush.msra.mxu0 0.0
    %340 = vmatpush.msra.mxu0 0.0
    %341 = vmatpush.msra.mxu0 0.0
    %342 = vmatpush.msra.mxu0 0.0
    %343 = vmatpush.msra.mxu0 0.0
    %344 = vmatpush.msra.mxu0 0.0
    %345 = vmatpush.msra.mxu0 0.0
    %346 = vmatpush.msra.mxu0 0.0
    %347 = vmatpush.msra.mxu0 0.0
    %348 = vmatpush.msra.mxu0 0.0
    %349 = vmatpush.msra.mxu0 %v218
    %350 = vmatpush.msra.mxu0 %v189
    %351 = vmatpush.msra.mxu0 %v160
    %352 = vmatpush.msra.mxu0 %v131
    %353 = vmatmul.f32.gmra.mxu0 %v245
    %v354 = vpop.f32.mrf.mxu0
    %355 = vmatmul.f32.gmra.mxu0 %v248
    %v356 = vpop.f32.mrf.mxu0
    %357 = vmatmul.f32.gmra.mxu0 %v251
    %v358 = vpop.f32.mrf.mxu0
    %v359 = vadd.f32 0.0, %v358
    %360 = vmatmul.f32.gmra.mxu0 %v254
    %v361 = vpop.f32.mrf.mxu0
    %v362 = vadd.f32 0.0, %v361
    %363 = vdwg.mxu0
    %364 = vmatpush.msra.mxu0 0.0
    %365 = vmatpush.msra.mxu0 0.0
    %366 = vmatpush.msra.mxu0 0.0
    %367 = vmatpush.msra.mxu0 0.0
    %368 = vmatpush.msra.mxu0 0.0
    %369 = vmatpush.msra.mxu0 0.0
    %370 = vmatpush.msra.mxu0 0.0
    %371 = vmatpush.msra.mxu0 0.0
    %372 = vmatpush.msra.mxu0 0.0
    %373 = vmatpush.msra.mxu0 0.0
    %374 = vmatpush.msra.mxu0 0.0
    %375 = vmatpush.msra.mxu0 0.0
    %376 = vmatpush.msra.mxu0 %v219
    %377 = vmatpush.msra.mxu0 %v190
    %378 = vmatpush.msra.mxu0 %v161
    %379 = vmatpush.msra.mxu0 %v132
    %380 = vmatmul.f32.gmra.mxu0 %v245
    %v381 = vpop.f32.mrf.mxu0
    %v382 = vadd.f32 0.0, %v381
    %383 = vmatmul.f32.gmra.mxu0 %v248
    %v384 = vpop.f32.mrf.mxu0
    %v385 = vadd.f32 0.0, %v384
    %386 = vmatmul.f32.gmra.mxu0 %v251
    %v387 = vpop.f32.mrf.mxu0
    %388 = vmatmul.f32.gmra.mxu0 %v254
    %v389 = vpop.f32.mrf.mxu0
    %390 = vdwg.mxu0
    %391 = vmatpush.msra.mxu0 0.0
    %392 = vmatpush.msra.mxu0 0.0
    %393 = vmatpush.msra.mxu0 0.0
    %394 = vmatpush.msra.mxu0 0.0
    %395 = vmatpush.msra.mxu0 0.0
    %396 = vmatpush.msra.mxu0 0.0
    %397 = vmatpush.msra.mxu0 0.0
    %398 = vmatpush.msra.mxu0 0.0
    %399 = vmatpush.msra.mxu0 0.0
    %400 = vmatpush.msra.mxu0 0.0
    %401 = vmatpush.msra.mxu0 0.0
    %402 = vmatpush.msra.mxu0 0.0
    %403 = vmatpush.msra.mxu0 %v220
    %404 = vmatpush.msra.mxu0 %v191
    %405 = vmatpush.msra.mxu0 %v162
    %406 = vmatpush.msra.mxu0 %v133
    %407 = vmatmul.f32.gmra.mxu0 %v245
    %v408 = vpop.f32.mrf.mxu0
    %v409 = vadd.f32 0.0, %v408
    %410 = vmatmul.f32.gmra.mxu0 %v248
    %v411 = vpop.f32.mrf.mxu0
    %v412 = vadd.f32 0.0, %v411
    %413 = vmatmul.f32.gmra.mxu0 %v251
    %v414 = vpop.f32.mrf.mxu0
    %415 = vmatmul.f32.gmra.mxu0 %v254
    %v416 = vpop.f32.mrf.mxu0
    %417 = vdwg.mxu0
    %418 = vmatpush.msra.mxu0 0.0
    %419 = vmatpush.msra.mxu0 0.0
    %420 = vmatpush.msra.mxu0 0.0
    %421 = vmatpush.msra.mxu0 0.0
    %422 = vmatpush.msra.mxu0 0.0
    %423 = vmatpush.msra.mxu0 0.0
    %424 = vmatpush.msra.mxu0 0.0
    %425 = vmatpush.msra.mxu0 0.0
    %426 = vmatpush.msra.mxu0 0.0
    %427 = vmatpush.msra.mxu0 0.0
    %428 = vmatpush.msra.mxu0 0.0
    %429 = vmatpush.msra.mxu0 0.0
    %430 = vmatpush.msra.mxu0 %v221
    %431 = vmatpush.msra.mxu0 %v192
    %432 = vmatpush.msra.mxu0 %v163
    %433 = vmatpush.msra.mxu0 %v134
    %434 = vmatmul.f32.gmra.mxu0 %v245
    %v435 = vpop.f32.mrf.mxu0
    %v436 = vadd.f32 0.0, %v435
    %437 = vmatmul.f32.gmra.mxu0 %v248
    %v438 = vpop.f32.mrf.mxu0
    %v439 = vadd.f32 0.0, %v438
    %440 = vmatmul.f32.gmra.mxu0 %v251
    %v441 = vpop.f32.mrf.mxu0
    %442 = vmatmul.f32.gmra.mxu0 %v254
    %v443 = vpop.f32.mrf.mxu0
    %444 = vdwg.mxu0
    %445 = vmatpush.msra.mxu0 0.0
    %446 = vmatpush.msra.mxu0 0.0
    %447 = vmatpush.msra.mxu0 0.0
    %448 = vmatpush.msra.mxu0 0.0
    %449 = vmatpush.msra.mxu0 0.0
    %450 = vmatpush.msra.mxu0 0.0
    %451 = vmatpush.msra.mxu0 0.0
    %452 = vmatpush.msra.mxu0 0.0
    %453 = vmatpush.msra.mxu0 0.0
    %454 = vmatpush.msra.mxu0 0.0
    %455 = vmatpush.msra.mxu0 0.0
    %456 = vmatpush.msra.mxu0 0.0
    %457 = vmatpush.msra.mxu0 %v222
    %458 = vmatpush.msra.mxu0 %v193
    %459 = vmatpush.msra.mxu0 %v164
    %460 = vmatpush.msra.mxu0 %v135
    %461 = vmatmul.f32.gmra.mxu0 %v245
    %v462 = vpop.f32.mrf.mxu0
    %v463 = vadd.f32 0.0, %v462
    %464 = vmatmul.f32.gmra.mxu0 %v248
    %v465 = vpop.f32.mrf.mxu0
    %v466 = vadd.f32 0.0, %v465
    %467 = vmatmul.f32.gmra.mxu0 %v251
    %v468 = vpop.f32.mrf.mxu0
    %469 = vmatmul.f32.gmra.mxu0 %v254
    %v470 = vpop.f32.mrf.mxu0
    %471 = vdwg.mxu0
    %472 = vmatpush.msra.mxu0 0.0
    %473 = vmatpush.msra.mxu0 0.0
    %474 = vmatpush.msra.mxu0 0.0
    %475 = vmatpush.msra.mxu0 0.0
    %476 = vmatpush.msra.mxu0 0.0
    %477 = vmatpush.msra.mxu0 0.0
    %478 = vmatpush.msra.mxu0 0.0
    %479 = vmatpush.msra.mxu0 0.0
    %480 = vmatpush.msra.mxu0 0.0
    %481 = vmatpush.msra.mxu0 0.0
    %482 = vmatpush.msra.mxu0 0.0
    %483 = vmatpush.msra.mxu0 0.0
    %484 = vmatpush.msra.mxu0 %v223
    %485 = vmatpush.msra.mxu0 %v194
    %486 = vmatpush.msra.mxu0 %v165
    %487 = vmatpush.msra.mxu0 %v136
    %488 = vmatmul.f32.gmra.mxu0 %v245
    %v489 = vpop.f32.mrf.mxu0
    %v490 = vadd.f32 0.0, %v489
    %491 = vmatmul.f32.gmra.mxu0 %v248
    %v492 = vpop.f32.mrf.mxu0
    %v493 = vadd.f32 0.0, %v492
    %494 = vmatmul.f32.gmra.mxu0 %v251
    %v495 = vpop.f32.mrf.mxu0
    %496 = vmatmul.f32.gmra.mxu0 %v254
    %v497 = vpop.f32.mrf.mxu0
    %498 = vdwg.mxu0
    %499 = vmatpush.msra.mxu0 0.0
    %500 = vmatpush.msra.mxu0 0.0
    %501 = vmatpush.msra.mxu0 0.0
    %502 = vmatpush.msra.mxu0 0.0
    %503 = vmatpush.msra.mxu0 0.0
    %504 = vmatpush.msra.mxu0 0.0
    %505 = vmatpush.msra.mxu0 0.0
    %506 = vmatpush.msra.mxu0 0.0
    %507 = vmatpush.msra.mxu0 0.0
    %508 = vmatpush.msra.mxu0 0.0
    %509 = vmatpush.msra.mxu0 0.0
    %510 = vmatpush.msra.mxu0 0.0
    %511 = vmatpush.msra.mxu0 %v224
    %512 = vmatpush.msra.mxu0 %v195
    %513 = vmatpush.msra.mxu0 %v166
    %514 = vmatpush.msra.mxu0 %v137
    %515 = vmatmul.f32.gmra.mxu0 %v245
    %v516 = vpop.f32.mrf.mxu0
    %517 = vmatmul.f32.gmra.mxu0 %v248
    %v518 = vpop.f32.mrf.mxu0
    %519 = vmatmul.f32.gmra.mxu0 %v251
    %v520 = vpop.f32.mrf.mxu0
    %v521 = vadd.f32 0.0, %v520
    %522 = vmatmul.f32.gmra.mxu0 %v254
    %v523 = vpop.f32.mrf.mxu0
    %v524 = vadd.f32 0.0, %v523
    %525 = vdwg.mxu0
    %526 = vmatpush.msra.mxu0 0.0
    %527 = vmatpush.msra.mxu0 0.0
    %528 = vmatpush.msra.mxu0 0.0
    %529 = vmatpush.msra.mxu0 0.0
    %530 = vmatpush.msra.mxu0 0.0
    %531 = vmatpush.msra.mxu0 0.0
    %532 = vmatpush.msra.mxu0 0.0
    %533 = vmatpush.msra.mxu0 0.0
    %534 = vmatpush.msra.mxu0 0.0
    %535 = vmatpush.msra.mxu0 0.0
    %536 = vmatpush.msra.mxu0 0.0
    %537 = vmatpush.msra.mxu0 0.0
    %538 = vmatpush.msra.mxu0 %v225
    %539 = vmatpush.msra.mxu0 %v196
    %540 = vmatpush.msra.mxu0 %v167
    %541 = vmatpush.msra.mxu0 %v138
    %542 = vmatmul.f32.gmra.mxu0 %v245
    %v543 = vpop.f32.mrf.mxu0
    %544 = vmatmul.f32.gmra.mxu0 %v248
    %v545 = vpop.f32.mrf.mxu0
    %546 = vmatmul.f32.gmra.mxu0 %v251
    %v547 = vpop.f32.mrf.mxu0
    %v548 = vadd.f32 0.0, %v547
    %549 = vmatmul.f32.gmra.mxu0 %v254
    %v550 = vpop.f32.mrf.mxu0
    %v551 = vadd.f32 0.0, %v550
    %552 = vdwg.mxu0
    %553 = vmatpush.msra.mxu0 0.0
    %554 = vmatpush.msra.mxu0 0.0
    %555 = vmatpush.msra.mxu0 0.0
    %556 = vmatpush.msra.mxu0 0.0
    %557 = vmatpush.msra.mxu0 0.0
    %558 = vmatpush.msra.mxu0 0.0
    %559 = vmatpush.msra.mxu0 0.0
    %560 = vmatpush.msra.mxu0 0.0
    %561 = vmatpush.msra.mxu0 0.0
    %562 = vmatpush.msra.mxu0 0.0
    %563 = vmatpush.msra.mxu0 0.0
    %564 = vmatpush.msra.mxu0 0.0
    %565 = vmatpush.msra.mxu0 %v226
    %566 = vmatpush.msra.mxu0 %v197
    %567 = vmatpush.msra.mxu0 %v168
    %568 = vmatpush.msra.mxu0 %v139
    %569 = vmatmul.f32.gmra.mxu0 %v245
    %v570 = vpop.f32.mrf.mxu0
    %571 = vmatmul.f32.gmra.mxu0 %v248
    %v572 = vpop.f32.mrf.mxu0
    %573 = vmatmul.f32.gmra.mxu0 %v251
    %v574 = vpop.f32.mrf.mxu0
    %v575 = vadd.f32 0.0, %v574
    %576 = vmatmul.f32.gmra.mxu0 %v254
    %v577 = vpop.f32.mrf.mxu0
    %v578 = vadd.f32 0.0, %v577
    %579 = vdwg.mxu0
    %580 = vmatpush.msra.mxu0 0.0
    %581 = vmatpush.msra.mxu0 0.0
    %582 = vmatpush.msra.mxu0 0.0
    %583 = vmatpush.msra.mxu0 0.0
    %584 = vmatpush.msra.mxu0 0.0
    %585 = vmatpush.msra.mxu0 0.0
    %586 = vmatpush.msra.mxu0 0.0
    %587 = vmatpush.msra.mxu0 0.0
    %588 = vmatpush.msra.mxu0 0.0
    %589 = vmatpush.msra.mxu0 0.0
    %590 = vmatpush.msra.mxu0 0.0
    %591 = vmatpush.msra.mxu0 0.0
    %592 = vmatpush.msra.mxu0 %v227
    %593 = vmatpush.msra.mxu0 %v198
    %594 = vmatpush.msra.mxu0 %v169
    %595 = vmatpush.msra.mxu0 %v140
    %596 = vmatmul.f32.gmra.mxu0 %v245
    %v597 = vpop.f32.mrf.mxu0
    %598 = vmatmul.f32.gmra.mxu0 %v248
    %v599 = vpop.f32.mrf.mxu0
    %600 = vmatmul.f32.gmra.mxu0 %v251
    %v601 = vpop.f32.mrf.mxu0
    %v602 = vadd.f32 0.0, %v601
    %603 = vmatmul.f32.gmra.mxu0 %v254
    %v604 = vpop.f32.mrf.mxu0
    %v605 = vadd.f32 0.0, %v604
    %606 = vdwg.mxu0
    %607 = vmatpush.msra.mxu0 0.0
    %608 = vmatpush.msra.mxu0 0.0
    %609 = vmatpush.msra.mxu0 0.0
    %610 = vmatpush.msra.mxu0 0.0
    %611 = vmatpush.msra.mxu0 0.0
    %612 = vmatpush.msra.mxu0 0.0
    %613 = vmatpush.msra.mxu0 0.0
    %614 = vmatpush.msra.mxu0 0.0
    %615 = vmatpush.msra.mxu0 0.0
    %616 = vmatpush.msra.mxu0 0.0
    %617 = vmatpush.msra.mxu0 0.0
    %618 = vmatpush.msra.mxu0 0.0
    %619 = vmatpush.msra.mxu0 %v228
    %620 = vmatpush.msra.mxu0 %v199
    %621 = vmatpush.msra.mxu0 %v170
    %622 = vmatpush.msra.mxu0 %v141
    %623 = vmatmul.f32.gmra.mxu0 %v245
    %v624 = vpop.f32.mrf.mxu0
    %625 = vmatmul.f32.gmra.mxu0 %v248
    %v626 = vpop.f32.mrf.mxu0
    %627 = vmatmul.f32.gmra.mxu0 %v251
    %v628 = vpop.f32.mrf.mxu0
    %v629 = vadd.f32 0.0, %v628
    %630 = vmatmul.f32.gmra.mxu0 %v254
    %v631 = vpop.f32.mrf.mxu0
    %v632 = vadd.f32 0.0, %v631
    %633 = vdwg.mxu0
    %634 = vmatpush.msra.mxu0 0.0
    %635 = vmatpush.msra.mxu0 0.0
    %636 = vmatpush.msra.mxu0 0.0
    %637 = vmatpush.msra.mxu0 0.0
    %638 = vmatpush.msra.mxu0 0.0
    %639 = vmatpush.msra.mxu0 0.0
    %640 = vmatpush.msra.mxu0 0.0
    %641 = vmatpush.msra.mxu0 0.0
    %642 = vmatpush.msra.mxu0 0.0
    %643 = vmatpush.msra.mxu0 0.0
    %644 = vmatpush.msra.mxu0 0.0
    %645 = vmatpush.msra.mxu0 0.0
    %646 = vmatpush.msra.mxu0 %v229
    %647 = vmatpush.msra.mxu0 %v200
    %648 = vmatpush.msra.mxu0 %v171
    %649 = vmatpush.msra.mxu0 %v142
    %650 = vmatmul.f32.gmra.mxu0 %v245
    %v651 = vpop.f32.mrf.mxu0
    %652 = vmatmul.f32.gmra.mxu0 %v248
    %v653 = vpop.f32.mrf.mxu0
    %654 = vmatmul.f32.gmra.mxu0 %v251
    %v655 = vpop.f32.mrf.mxu0
    %v656 = vadd.f32 0.0, %v655
    %657 = vmatmul.f32.gmra.mxu0 %v254
    %v658 = vpop.f32.mrf.mxu0
    %v659 = vadd.f32 0.0, %v658
    %660 = vdwg.mxu0
    %661 = vmatpush.msra.mxu0 0.0
    %662 = vmatpush.msra.mxu0 0.0
    %663 = vmatpush.msra.mxu0 0.0
    %664 = vmatpush.msra.mxu0 0.0
    %665 = vmatpush.msra.mxu0 0.0
    %666 = vmatpush.msra.mxu0 0.0
    %667 = vmatpush.msra.mxu0 0.0
    %668 = vmatpush.msra.mxu0 0.0
    %669 = vmatpush.msra.mxu0 0.0
    %670 = vmatpush.msra.mxu0 0.0
    %671 = vmatpush.msra.mxu0 0.0
    %672 = vmatpush.msra.mxu0 0.0
    %673 = vmatpush.msra.mxu0 %v230
    %674 = vmatpush.msra.mxu0 %v201
    %675 = vmatpush.msra.mxu0 %v172
    %676 = vmatpush.msra.mxu0 %v143
    %677 = vmatmul.f32.gmra.mxu0 %v245
    %v678 = vpop.f32.mrf.mxu0
    %679 = vmatmul.f32.gmra.mxu0 %v248
    %v680 = vpop.f32.mrf.mxu0
    %681 = vmatmul.f32.gmra.mxu0 %v251
    %v682 = vpop.f32.mrf.mxu0
    %v683 = vadd.f32 0.0, %v682
    %684 = vmatmul.f32.gmra.mxu0 %v254
    %v685 = vpop.f32.mrf.mxu0
    %v686 = vadd.f32 0.0, %v685
    %687 = vdwg.mxu0
    %688 = vmatpush.msra.mxu0 0.0
    %689 = vmatpush.msra.mxu0 0.0
    %690 = vmatpush.msra.mxu0 0.0
    %691 = vmatpush.msra.mxu0 0.0
    %692 = vmatpush.msra.mxu0 0.0
    %693 = vmatpush.msra.mxu0 0.0
    %694 = vmatpush.msra.mxu0 0.0
    %695 = vmatpush.msra.mxu0 0.0
    %696 = vmatpush.msra.mxu0 0.0
    %697 = vmatpush.msra.mxu0 0.0
    %698 = vmatpush.msra.mxu0 0.0
    %699 = vmatpush.msra.mxu0 0.0
    %700 = vmatpush.msra.mxu0 %v231
    %701 = vmatpush.msra.mxu0 %v202
    %702 = vmatpush.msra.mxu0 %v173
    %703 = vmatpush.msra.mxu0 %v144
    %704 = vmatmul.f32.gmra.mxu0 %v245
    %v705 = vpop.f32.mrf.mxu0
    %706 = vmatmul.f32.gmra.mxu0 %v248
    %v707 = vpop.f32.mrf.mxu0
    %708 = vmatmul.f32.gmra.mxu0 %v251
    %v709 = vpop.f32.mrf.mxu0
    %v710 = vadd.f32 0.0, %v709
    %711 = vmatmul.f32.gmra.mxu0 %v254
    %v712 = vpop.f32.mrf.mxu0
    %v713 = vadd.f32 0.0, %v712
    %714 = vdwg.mxu0
    %715 = vmatpush.msra.mxu0 0.0
    %716 = vmatpush.msra.mxu0 0.0
    %717 = vmatpush.msra.mxu0 0.0
    %718 = vmatpush.msra.mxu0 0.0
    %719 = vmatpush.msra.mxu0 0.0
    %720 = vmatpush.msra.mxu0 0.0
    %721 = vmatpush.msra.mxu0 0.0
    %722 = vmatpush.msra.mxu0 0.0
    %723 = vmatpush.msra.mxu0 0.0
    %724 = vmatpush.msra.mxu0 0.0
    %725 = vmatpush.msra.mxu0 0.0
    %726 = vmatpush.msra.mxu0 0.0
    %727 = vmatpush.msra.mxu0 %v232
    %728 = vmatpush.msra.mxu0 %v203
    %729 = vmatpush.msra.mxu0 %v174
    %730 = vmatpush.msra.mxu0 %v145
    %731 = vmatmul.f32.gmra.mxu0 %v245
    %v732 = vpop.f32.mrf.mxu0
    %733 = vmatmul.f32.gmra.mxu0 %v248
    %v734 = vpop.f32.mrf.mxu0
    %735 = vmatmul.f32.gmra.mxu0 %v251
    %v736 = vpop.f32.mrf.mxu0
    %v737 = vadd.f32 0.0, %v736
    %738 = vmatmul.f32.gmra.mxu0 %v254
    %v739 = vpop.f32.mrf.mxu0
    %v740 = vadd.f32 0.0, %v739
    %741 = vdwg.mxu0
    %742 = vmatpush.msra.mxu0 0.0
    %743 = vmatpush.msra.mxu0 0.0
    %744 = vmatpush.msra.mxu0 0.0
    %745 = vmatpush.msra.mxu0 0.0
    %746 = vmatpush.msra.mxu0 0.0
    %747 = vmatpush.msra.mxu0 0.0
    %748 = vmatpush.msra.mxu0 0.0
    %749 = vmatpush.msra.mxu0 0.0
    %750 = vmatpush.msra.mxu0 0.0
    %751 = vmatpush.msra.mxu0 0.0
    %752 = vmatpush.msra.mxu0 0.0
    %753 = vmatpush.msra.mxu0 0.0
    %754 = vmatpush.msra.mxu0 %v233
    %755 = vmatpush.msra.mxu0 %v204
    %756 = vmatpush.msra.mxu0 %v175
    %757 = vmatpush.msra.mxu0 %v146
    %758 = vmatmul.f32.gmra.mxu0 %v245
    %v759 = vpop.f32.mrf.mxu0
    %v760 = vadd.f32 0.0, %v759
    %761 = vmatmul.f32.gmra.mxu0 %v248
    %v762 = vpop.f32.mrf.mxu0
    %v763 = vadd.f32 0.0, %v762
    %764 = vmatmul.f32.gmra.mxu0 %v251
    %v765 = vpop.f32.mrf.mxu0
    %766 = vmatmul.f32.gmra.mxu0 %v254
    %v767 = vpop.f32.mrf.mxu0
    %768 = vdwg.mxu0
    %769 = vmatpush.msra.mxu0 0.0
    %770 = vmatpush.msra.mxu0 0.0
    %771 = vmatpush.msra.mxu0 0.0
    %772 = vmatpush.msra.mxu0 0.0
    %773 = vmatpush.msra.mxu0 0.0
    %774 = vmatpush.msra.mxu0 0.0
    %775 = vmatpush.msra.mxu0 0.0
    %776 = vmatpush.msra.mxu0 0.0
    %777 = vmatpush.msra.mxu0 0.0
    %778 = vmatpush.msra.mxu0 0.0
    %779 = vmatpush.msra.mxu0 0.0
    %780 = vmatpush.msra.mxu0 0.0
    %781 = vmatpush.msra.mxu0 %v234
    %782 = vmatpush.msra.mxu0 %v205
    %783 = vmatpush.msra.mxu0 %v176
    %784 = vmatpush.msra.mxu0 %v147
    %785 = vmatmul.f32.gmra.mxu0 %v245
    %v786 = vpop.f32.mrf.mxu0
    %v787 = vadd.f32 0.0, %v786
    %788 = vmatmul.f32.gmra.mxu0 %v248
    %v789 = vpop.f32.mrf.mxu0
    %v790 = vadd.f32 0.0, %v789
    %791 = vmatmul.f32.gmra.mxu0 %v251
    %v792 = vpop.f32.mrf.mxu0
    %793 = vmatmul.f32.gmra.mxu0 %v254
    %v794 = vpop.f32.mrf.mxu0
    %795 = vdwg.mxu0
    %796 = vmatpush.msra.mxu0 0.0
    %797 = vmatpush.msra.mxu0 0.0
    %798 = vmatpush.msra.mxu0 0.0
    %799 = vmatpush.msra.mxu0 0.0
    %800 = vmatpush.msra.mxu0 0.0
    %801 = vmatpush.msra.mxu0 0.0
    %802 = vmatpush.msra.mxu0 0.0
    %803 = vmatpush.msra.mxu0 0.0
    %804 = vmatpush.msra.mxu0 0.0
    %805 = vmatpush.msra.mxu0 0.0
    %806 = vmatpush.msra.mxu0 0.0
    %807 = vmatpush.msra.mxu0 0.0
    %808 = vmatpush.msra.mxu0 %v235
    %809 = vmatpush.msra.mxu0 %v206
    %810 = vmatpush.msra.mxu0 %v177
    %811 = vmatpush.msra.mxu0 %v148
    %812 = vmatmul.f32.gmra.mxu0 %v245
    %v813 = vpop.f32.mrf.mxu0
    %v814 = vadd.f32 0.0, %v813
    %815 = vmatmul.f32.gmra.mxu0 %v248
    %v816 = vpop.f32.mrf.mxu0
    %v817 = vadd.f32 0.0, %v816
    %818 = vmatmul.f32.gmra.mxu0 %v251
    %v819 = vpop.f32.mrf.mxu0
    %820 = vmatmul.f32.gmra.mxu0 %v254
    %v821 = vpop.f32.mrf.mxu0
    %822 = vdwg.mxu0
    %823 = vmatpush.msra.mxu0 0.0
    %824 = vmatpush.msra.mxu0 0.0
    %825 = vmatpush.msra.mxu0 0.0
    %826 = vmatpush.msra.mxu0 0.0
    %827 = vmatpush.msra.mxu0 0.0
    %828 = vmatpush.msra.mxu0 0.0
    %829 = vmatpush.msra.mxu0 0.0
    %830 = vmatpush.msra.mxu0 0.0
    %831 = vmatpush.msra.mxu0 0.0
    %832 = vmatpush.msra.mxu0 0.0
    %833 = vmatpush.msra.mxu0 0.0
    %834 = vmatpush.msra.mxu0 0.0
    %835 = vmatpush.msra.mxu0 %v236
    %836 = vmatpush.msra.mxu0 %v207
    %837 = vmatpush.msra.mxu0 %v178
    %838 = vmatpush.msra.mxu0 %v149
    %839 = vmatmul.f32.gmra.mxu0 %v245
    %v840 = vpop.f32.mrf.mxu0
    %v841 = vadd.f32 0.0, %v840
    %842 = vmatmul.f32.gmra.mxu0 %v248
    %v843 = vpop.f32.mrf.mxu0
    %v844 = vadd.f32 0.0, %v843
    %845 = vmatmul.f32.gmra.mxu0 %v251
    %v846 = vpop.f32.mrf.mxu0
    %847 = vmatmul.f32.gmra.mxu0 %v254
    %v848 = vpop.f32.mrf.mxu0
    %849 = vdwg.mxu0
    %850 = vmatpush.msra.mxu0 0.0
    %851 = vmatpush.msra.mxu0 0.0
    %852 = vmatpush.msra.mxu0 0.0
    %853 = vmatpush.msra.mxu0 0.0
    %854 = vmatpush.msra.mxu0 0.0
    %855 = vmatpush.msra.mxu0 0.0
    %856 = vmatpush.msra.mxu0 0.0
    %857 = vmatpush.msra.mxu0 0.0
    %858 = vmatpush.msra.mxu0 0.0
    %859 = vmatpush.msra.mxu0 0.0
    %860 = vmatpush.msra.mxu0 0.0
    %861 = vmatpush.msra.mxu0 0.0
    %862 = vmatpush.msra.mxu0 %v237
    %863 = vmatpush.msra.mxu0 %v208
    %864 = vmatpush.msra.mxu0 %v179
    %865 = vmatpush.msra.mxu0 %v150
    %866 = vmatmul.f32.gmra.mxu0 %v245
    %v867 = vpop.f32.mrf.mxu0
    %868 = vmatmul.f32.gmra.mxu0 %v248
    %v869 = vpop.f32.mrf.mxu0
    %870 = vmatmul.f32.gmra.mxu0 %v251
    %v871 = vpop.f32.mrf.mxu0
    %v872 = vadd.f32 0.0, %v871
    %873 = vmatmul.f32.gmra.mxu0 %v254
    %v874 = vpop.f32.mrf.mxu0
    %v875 = vadd.f32 0.0, %v874
    %876 = vdwg.mxu0
    %877 = vmatpush.msra.mxu0 0.0
    %878 = vmatpush.msra.mxu0 0.0
    %879 = vmatpush.msra.mxu0 0.0
    %880 = vmatpush.msra.mxu0 0.0
    %881 = vmatpush.msra.mxu0 0.0
    %882 = vmatpush.msra.mxu0 0.0
    %883 = vmatpush.msra.mxu0 0.0
    %884 = vmatpush.msra.mxu0 0.0
    %885 = vmatpush.msra.mxu0 0.0
    %886 = vmatpush.msra.mxu0 0.0
    %887 = vmatpush.msra.mxu0 0.0
    %888 = vmatpush.msra.mxu0 0.0
    %889 = vmatpush.msra.mxu0 %v238
    %890 = vmatpush.msra.mxu0 %v209
    %891 = vmatpush.msra.mxu0 %v180
    %892 = vmatpush.msra.mxu0 %v151
    %893 = vmatmul.f32.gmra.mxu0 %v245
    %v894 = vpop.f32.mrf.mxu0
    %895 = vmatmul.f32.gmra.mxu0 %v248
    %v896 = vpop.f32.mrf.mxu0
    %897 = vmatmul.f32.gmra.mxu0 %v251
    %v898 = vpop.f32.mrf.mxu0
    %v899 = vadd.f32 0.0, %v898
    %900 = vmatmul.f32.gmra.mxu0 %v254
    %v901 = vpop.f32.mrf.mxu0
    %v902 = vadd.f32 0.0, %v901
    %903 = vdwg.mxu0
    %904 = vmatpush.msra.mxu0 0.0
    %905 = vmatpush.msra.mxu0 0.0
    %906 = vmatpush.msra.mxu0 0.0
    %907 = vmatpush.msra.mxu0 0.0
    %908 = vmatpush.msra.mxu0 0.0
    %909 = vmatpush.msra.mxu0 0.0
    %910 = vmatpush.msra.mxu0 0.0
    %911 = vmatpush.msra.mxu0 0.0
    %912 = vmatpush.msra.mxu0 0.0
    %913 = vmatpush.msra.mxu0 0.0
    %914 = vmatpush.msra.mxu0 0.0
    %915 = vmatpush.msra.mxu0 0.0
    %916 = vmatpush.msra.mxu0 %v239
    %917 = vmatpush.msra.mxu0 %v210
    %918 = vmatpush.msra.mxu0 %v181
    %919 = vmatpush.msra.mxu0 %v152
    %920 = vmatmul.f32.gmra.mxu0 %v245
    %v921 = vpop.f32.mrf.mxu0
    %922 = vmatmul.f32.gmra.mxu0 %v248
    %v923 = vpop.f32.mrf.mxu0
    %924 = vmatmul.f32.gmra.mxu0 %v251
    %v925 = vpop.f32.mrf.mxu0
    %v926 = vadd.f32 0.0, %v925
    %927 = vmatmul.f32.gmra.mxu0 %v254
    %v928 = vpop.f32.mrf.mxu0
    %v929 = vadd.f32 0.0, %v928
    %930 = vdwg.mxu0
    %931 = vmatpush.msra.mxu0 0.0
    %932 = vmatpush.msra.mxu0 0.0
    %933 = vmatpush.msra.mxu0 0.0
    %934 = vmatpush.msra.mxu0 0.0
    %935 = vmatpush.msra.mxu0 0.0
    %936 = vmatpush.msra.mxu0 0.0
    %937 = vmatpush.msra.mxu0 0.0
    %938 = vmatpush.msra.mxu0 0.0
    %939 = vmatpush.msra.mxu0 0.0
    %940 = vmatpush.msra.mxu0 0.0
    %941 = vmatpush.msra.mxu0 0.0
    %942 = vmatpush.msra.mxu0 0.0
    %943 = vmatpush.msra.mxu0 %v240
    %944 = vmatpush.msra.mxu0 %v211
    %945 = vmatpush.msra.mxu0 %v182
    %946 = vmatpush.msra.mxu0 %v153
    %947 = vmatmul.f32.gmra.mxu0 %v245
    %v948 = vpop.f32.mrf.mxu0
    %949 = vmatmul.f32.gmra.mxu0 %v248
    %v950 = vpop.f32.mrf.mxu0
    %951 = vmatmul.f32.gmra.mxu0 %v251
    %v952 = vpop.f32.mrf.mxu0
    %v953 = vadd.f32 0.0, %v952
    %954 = vmatmul.f32.gmra.mxu0 %v254
    %v955 = vpop.f32.mrf.mxu0
    %v956 = vadd.f32 0.0, %v955
    %957 = vdwg.mxu0
    %958 = vmatpush.msra.mxu0 0.0
    %959 = vmatpush.msra.mxu0 0.0
    %960 = vmatpush.msra.mxu0 0.0
    %961 = vmatpush.msra.mxu0 0.0
    %962 = vmatpush.msra.mxu0 0.0
    %963 = vmatpush.msra.mxu0 0.0
    %964 = vmatpush.msra.mxu0 0.0
    %965 = vmatpush.msra.mxu0 0.0
    %966 = vmatpush.msra.mxu0 0.0
    %967 = vmatpush.msra.mxu0 0.0
    %968 = vmatpush.msra.mxu0 0.0
    %969 = vmatpush.msra.mxu0 0.0
    %970 = vmatpush.msra.mxu0 %v241
    %971 = vmatpush.msra.mxu0 %v212
    %972 = vmatpush.msra.mxu0 %v183
    %973 = vmatpush.msra.mxu0 %v154
    %974 = vmatmul.f32.gmra.mxu0 %v245
    %v975 = vpop.f32.mrf.mxu0
    %976 = vmatmul.f32.gmra.mxu0 %v248
    %v977 = vpop.f32.mrf.mxu0
    %978 = vmatmul.f32.gmra.mxu0 %v251
    %v979 = vpop.f32.mrf.mxu0
    %v980 = vadd.f32 0.0, %v979
    %981 = vmatmul.f32.gmra.mxu0 %v254
    %v982 = vpop.f32.mrf.mxu0
    %v983 = vadd.f32 0.0, %v982
    %984 = vdwg.mxu0
    %985 = vmatpush.msra.mxu0 0.0
    %986 = vmatpush.msra.mxu0 0.0
    %987 = vmatpush.msra.mxu0 0.0
    %988 = vmatpush.msra.mxu0 0.0
    %989 = vmatpush.msra.mxu0 0.0
    %990 = vmatpush.msra.mxu0 0.0
    %991 = vmatpush.msra.mxu0 0.0
    %992 = vmatpush.msra.mxu0 0.0
    %993 = vmatpush.msra.mxu0 0.0
    %994 = vmatpush.msra.mxu0 0.0
    %995 = vmatpush.msra.mxu0 0.0
    %996 = vmatpush.msra.mxu0 0.0
    %997 = vmatpush.msra.mxu0 %v242
    %998 = vmatpush.msra.mxu0 %v213
    %999 = vmatpush.msra.mxu0 %v184
    %1000 = vmatpush.msra.mxu0 %v155
    %1001 = vmatmul.f32.gmra.mxu0 %v245
    %v1002 = vpop.f32.mrf.mxu0
    %v1003 = vadd.f32 0.0, %v1002
    %1004 = vmatmul.f32.gmra.mxu0 %v248
    %v1005 = vpop.f32.mrf.mxu0
    %v1006 = vadd.f32 0.0, %v1005
    %1007 = vmatmul.f32.gmra.mxu0 %v251
    %v1008 = vpop.f32.mrf.mxu0
    %1009 = vmatmul.f32.gmra.mxu0 %v254
    %v1010 = vpop.f32.mrf.mxu0
    %1011 = vdwg.mxu0
    %1012 = vmatpush.msra.mxu0 0.0
    %1013 = vmatpush.msra.mxu0 0.0
    %1014 = vmatpush.msra.mxu0 0.0
    %1015 = vmatpush.msra.mxu0 0.0
    %1016 = vmatpush.msra.mxu0 0.0
    %1017 = vmatpush.msra.mxu0 0.0
    %1018 = vmatpush.msra.mxu0 0.0
    %1019 = vmatpush.msra.mxu0 0.0
    %1020 = vmatpush.msra.mxu0 0.0
    %1021 = vmatpush.msra.mxu0 0.0
    %1022 = vmatpush.msra.mxu0 0.0
    %1023 = vmatpush.msra.mxu0 0.0
    %1024 = vmatpush.msra.mxu0 %v243
    %1025 = vmatpush.msra.mxu0 %v214
    %1026 = vmatpush.msra.mxu0 %v185
    %1027 = vmatpush.msra.mxu0 %v156
    %1028 = vmatmul.f32.gmra.mxu0 %v245
    %v1029 = vpop.f32.mrf.mxu0
    %1030 = vmatmul.f32.gmra.mxu0 %v248
    %v1031 = vpop.f32.mrf.mxu0
    %1032 = vmatmul.f32.gmra.mxu0 %v251
    %v1033 = vpop.f32.mrf.mxu0
    %v1034 = vadd.f32 0.0, %v1033
    %1035 = vmatmul.f32.gmra.mxu0 %v254
    %v1036 = vpop.f32.mrf.mxu0
    %v1037 = vadd.f32 0.0, %v1036
    %1038 = vdwg.mxu0
    %v1039 = vld [vmem:[%s4] sm:$0xff]
    %v1040 = vld [vmem:[%s4 + $0x10] sm:$0xff]
    %v1041 = vld [vmem:[%s2] sm:$0xff]
    %v1042 = vld [vmem:[%s2 + $0x8] sm:$0xff]
    %v1043 = vld [vmem:[%s2 + $0x10] sm:$0xff]
    %v1044 = vld [vmem:[%s2 + $0x18] sm:$0xff]
    %v1045 = vld [vmem:[%s2 + $0x20] sm:$0xff]
    %v1046 = vld [vmem:[%s2 + $0x28] sm:$0xff]
    %v1047 = vld [vmem:[%s2 + $0x30] sm:$0xff]
    %v1048 = vld [vmem:[%s2 + $0x38] sm:$0xff]
    %v1049 = vld [vmem:[%s2 + $0x40] sm:$0xff]
    %v1050 = vld [vmem:[%s2 + $0x48] sm:$0xff]
    %v1051 = vld [vmem:[%s2 + $0x50] sm:$0xff]
    %v1052 = vld [vmem:[%s2 + $0x58] sm:$0xff]
    %v1053 = vld [vmem:[%s2 + $0x60] sm:$0xff]
    %v1054 = vld [vmem:[%s2 + $0x68] sm:$0xff]
    %v1055 = vld [vmem:[%s2 + $0x70] sm:$0xff]
    %v1056 = vld [vmem:[%s2 + $0x78] sm:$0xff]
    %v1057 = vld [vmem:[%s2 + $0x80] sm:$0xff]
    %v1058 = vld [vmem:[%s2 + $0x88] sm:$0xff]
    %v1059 = vld [vmem:[%s2 + $0x90] sm:$0xff]
    %v1060 = vld [vmem:[%s2 + $0x98] sm:$0xff]
    %v1061 = vld [vmem:[%s2 + $0xa0] sm:$0xff]
    %v1062 = vld [vmem:[%s2 + $0xa8] sm:$0xff]
    %v1063 = vld [vmem:[%s2 + $0xb0] sm:$0xff]
    %v1064 = vld [vmem:[%s2 + $0xb8] sm:$0xff]
    %v1065 = vld [vmem:[%s2 + $0xc0] sm:$0xff]
    %v1066 = vld [vmem:[%s2 + $0xc8] sm:$0xff]
    %v1067 = vld [vmem:[%s2 + $0xd0] sm:$0xff]
    %v1068 = vld [vmem:[%s2 + $0xd8] sm:$0xff]
    %v1069 = vld [vmem:[%s2 + $0xe0] sm:$0xff]
    %v1070 = vld [vmem:[%s2 + $0xe8] sm:$0xff]
    %v1071 = vld [vmem:[%s2 + $0xf0] sm:$0xff]
    %v1072 = vld [vmem:[%s2 + $0xf8] sm:$0xff]
    %v1073 = vld [vmem:[%s2 + $0x100] sm:$0xff]
    %v1074 = vld [vmem:[%s2 + $0x108] sm:$0xff]
    %v1075 = vld [vmem:[%s2 + $0x110] sm:$0xff]
    %v1076 = vld [vmem:[%s2 + $0x118] sm:$0xff]
    %v1077 = vld [vmem:[%s2 + $0x120] sm:$0xff]
    %v1078 = vld [vmem:[%s2 + $0x128] sm:$0xff]
    %v1079 = vld [vmem:[%s2 + $0x130] sm:$0xff]
    %v1080 = vld [vmem:[%s2 + $0x138] sm:$0xff]
    %v1081 = vld [vmem:[%s2 + $0x140] sm:$0xff]
    %v1082 = vld [vmem:[%s2 + $0x148] sm:$0xff]
    %v1083 = vld [vmem:[%s2 + $0x150] sm:$0xff]
    %v1084 = vld [vmem:[%s2 + $0x158] sm:$0xff]
    %v1085 = vld [vmem:[%s2 + $0x160] sm:$0xff]
    %v1086 = vld [vmem:[%s2 + $0x168] sm:$0xff]
    %v1087 = vld [vmem:[%s2 + $0x170] sm:$0xff]
    %v1088 = vld [vmem:[%s2 + $0x178] sm:$0xff]
    %v1089 = vld [vmem:[%s2 + $0x180] sm:$0xff]
    %v1090 = vld [vmem:[%s2 + $0x188] sm:$0xff]
    %v1091 = vld [vmem:[%s2 + $0x190] sm:$0xff]
    %v1092 = vld [vmem:[%s2 + $0x198] sm:$0xff]
    %v1093 = vld [vmem:[%s2 + $0x1a0] sm:$0xff]
    %v1094 = vld [vmem:[%s2 + $0x1a8] sm:$0xff]
    %v1095 = vld [vmem:[%s2 + $0x1b0] sm:$0xff]
    %v1096 = vld [vmem:[%s2 + $0x1b8] sm:$0xff]
    %v1097 = vld [vmem:[%s2 + $0x1c0] sm:$0xff]
    %v1098 = vld [vmem:[%s2 + $0x1c8] sm:$0xff]
    %v1099 = vld [vmem:[%s2 + $0x1d0] sm:$0xff]
    %v1100 = vld [vmem:[%s2 + $0x1d8] sm:$0xff]
    %v1101 = vld [vmem:[%s2 + $0x1e0] sm:$0xff]
    %v1102 = vld [vmem:[%s2 + $0x1e8] sm:$0xff]
    %v1103 = vld [vmem:[%s2 + $0x1f0] sm:$0xff]
    %v1104 = vld [vmem:[%s2 + $0x1f8] sm:$0xff]
    %1105 = vmatpush.msra.mxu0 %v1101
    %1106 = vmatpush.msra.mxu0 %v1097
    %1107 = vmatpush.msra.mxu0 %v1093
    %1108 = vmatpush.msra.mxu0 %v1089
    %1109 = vmatpush.msra.mxu0 %v1085
    %1110 = vmatpush.msra.mxu0 %v1081
    %1111 = vmatpush.msra.mxu0 %v1077
    %1112 = vmatpush.msra.mxu0 %v1073
    %1113 = vmatpush.msra.mxu0 %v1069
    %1114 = vmatpush.msra.mxu0 %v1065
    %1115 = vmatpush.msra.mxu0 %v1061
    %1116 = vmatpush.msra.mxu0 %v1057
    %1117 = vmatpush.msra.mxu0 %v1053
    %1118 = vmatpush.msra.mxu0 %v1049
    %1119 = vmatpush.msra.mxu0 %v1045
    %1120 = vmatpush.msra.mxu0 %v1041
    %1121 = vmatmul.f32.gmra.mxu0 %v1039
    %v1122 = vpop.f32.mrf.mxu0
    %v1123 = vadd.f32 0.0, %v1122
    %1124 = vmatmul.f32.gmra.mxu0 %v1040
    %v1125 = vpop.f32.mrf.mxu0
    %v1126 = vadd.f32 0.0, %v1125
    %1127 = vdwg.mxu0
    %1128 = vmatpush.msra.mxu0 %v1102
    %1129 = vmatpush.msra.mxu0 %v1098
    %1130 = vmatpush.msra.mxu0 %v1094
    %1131 = vmatpush.msra.mxu0 %v1090
    %1132 = vmatpush.msra.mxu0 %v1086
    %1133 = vmatpush.msra.mxu0 %v1082
    %1134 = vmatpush.msra.mxu0 %v1078
    %1135 = vmatpush.msra.mxu0 %v1074
    %1136 = vmatpush.msra.mxu0 %v1070
    %1137 = vmatpush.msra.mxu0 %v1066
    %1138 = vmatpush.msra.mxu0 %v1062
    %1139 = vmatpush.msra.mxu0 %v1058
    %1140 = vmatpush.msra.mxu0 %v1054
    %1141 = vmatpush.msra.mxu0 %v1050
    %1142 = vmatpush.msra.mxu0 %v1046
    %1143 = vmatpush.msra.mxu0 %v1042
    %1144 = vmatmul.f32.gmra.mxu0 %v1039
    %v1145 = vpop.f32.mrf.mxu0
    %v1146 = vadd.f32 0.0, %v1145
    %1147 = vmatmul.f32.gmra.mxu0 %v1040
    %v1148 = vpop.f32.mrf.mxu0
    %v1149 = vadd.f32 0.0, %v1148
    %1150 = vdwg.mxu0
    %1151 = vmatpush.msra.mxu0 %v1103
    %1152 = vmatpush.msra.mxu0 %v1099
    %1153 = vmatpush.msra.mxu0 %v1095
    %1154 = vmatpush.msra.mxu0 %v1091
    %1155 = vmatpush.msra.mxu0 %v1087
    %1156 = vmatpush.msra.mxu0 %v1083
    %1157 = vmatpush.msra.mxu0 %v1079
    %1158 = vmatpush.msra.mxu0 %v1075
    %1159 = vmatpush.msra.mxu0 %v1071
    %1160 = vmatpush.msra.mxu0 %v1067
    %1161 = vmatpush.msra.mxu0 %v1063
    %1162 = vmatpush.msra.mxu0 %v1059
    %1163 = vmatpush.msra.mxu0 %v1055
    %1164 = vmatpush.msra.mxu0 %v1051
    %1165 = vmatpush.msra.mxu0 %v1047
    %1166 = vmatpush.msra.mxu0 %v1043
    %1167 = vmatmul.f32.gmra.mxu0 %v1039
    %v1168 = vpop.f32.mrf.mxu0
    %v1169 = vadd.f32 0.0, %v1168
    %1170 = vmatmul.f32.gmra.mxu0 %v1040
    %v1171 = vpop.f32.mrf.mxu0
    %v1172 = vadd.f32 0.0, %v1171
    %1173 = vdwg.mxu0
    %1174 = vmatpush.msra.mxu0 %v1104
    %1175 = vmatpush.msra.mxu0 %v1100
    %1176 = vmatpush.msra.mxu0 %v1096
    %1177 = vmatpush.msra.mxu0 %v1092
    %1178 = vmatpush.msra.mxu0 %v1088
    %1179 = vmatpush.msra.mxu0 %v1084
    %1180 = vmatpush.msra.mxu0 %v1080
    %1181 = vmatpush.msra.mxu0 %v1076
    %1182 = vmatpush.msra.mxu0 %v1072
    %1183 = vmatpush.msra.mxu0 %v1068
    %1184 = vmatpush.msra.mxu0 %v1064
    %1185 = vmatpush.msra.mxu0 %v1060
    %1186 = vmatpush.msra.mxu0 %v1056
    %1187 = vmatpush.msra.mxu0 %v1052
    %1188 = vmatpush.msra.mxu0 %v1048
    %1189 = vmatpush.msra.mxu0 %v1044
    %1190 = vmatmul.f32.gmra.mxu0 %v1039
    %v1191 = vpop.f32.mrf.mxu0
    %v1192 = vadd.f32 0.0, %v1191
    %1193 = vmatmul.f32.gmra.mxu0 %v1040
    %v1194 = vpop.f32.mrf.mxu0
    %v1195 = vadd.f32 0.0, %v1194
    %1196 = vdwg.mxu0
    %v1197 = vld [vmem:[%s2 + $0x200] sm:$0xff]
    %v1198 = vld [vmem:[%s2 + $0x208] sm:$0xff]
    %v1199 = vld [vmem:[%s2 + $0x210] sm:$0xff]
    %v1200 = vld [vmem:[%s2 + $0x218] sm:$0xff]
    %v1201 = vld [vmem:[%s2 + $0x220] sm:$0xff]
    %v1202 = vld [vmem:[%s2 + $0x228] sm:$0xff]
    %v1203 = vld [vmem:[%s2 + $0x230] sm:$0xff]
    %v1204 = vld [vmem:[%s2 + $0x238] sm:$0xff]
    %s1205 = scalar_lea.vmem %s2, 576
    %v1206 = vld [vmem:[%s1205] ss:$8 sm:$0xf]
    %v1208 = vperm.slane %v1206, 0
    %v1209 = vperm.slane %v1206, 1
    %v1210 = vperm.slane %v1206, 2
    %v1211 = vperm.slane %v1206, 3
    %v1216 = vadd.f32 %v382, %v1208
    %v1217 = vadd.f32 %v409, %v1209
    %v1218 = vadd.f32 %v436, %v1210
    %v1219 = vadd.f32 %v463, %v1211
    %v1220 = vadd.f32 %v385, %v1208
    %v1221 = vadd.f32 %v412, %v1209
    %v1222 = vadd.f32 %v439, %v1210
    %v1223 = vadd.f32 %v466, %v1211
    %v1224 = vmul.f32 %v1216, %v1197
    %v1225 = vmul.f32 %v1217, %v1198
    %v1226 = vmul.f32 %v1218, %v1199
    %v1227 = vmul.f32 %v1219, %v1200
    %v1228 = vmul.f32 %v1220, %v1201
    %v1229 = vmul.f32 %v1221, %v1202
    %v1230 = vmul.f32 %v1222, %v1203
    %v1231 = vmul.f32 %v1223, %v1204
    %vm1232 = vcmask 130048
    %v1234 = vsel %vm1232, 1.0, 0
    %1236 = vmatpush.msra.mxu0 0.0
    %1237 = vmatpush.msra.mxu0 0.0
    %1238 = vmatpush.msra.mxu0 0.0
    %1239 = vmatpush.msra.mxu0 0.0
    %1240 = vmatpush.msra.mxu0 0.0
    %1241 = vmatpush.msra.mxu0 0.0
    %1242 = vmatpush.msra.mxu0 0.0
    %1243 = vmatpush.msra.mxu0 0.0
    %1244 = vmatpush.msra.mxu0 0.0
    %1245 = vmatpush.msra.mxu0 0.0
    %1246 = vmatpush.msra.mxu0 0.0
    %1247 = vmatpush.msra.mxu0 0.0
    %1248 = vmatpush.msra.mxu0 0.0
    %1249 = vmatpush.msra.mxu0 0.0
    %1250 = vmatpush.msra.mxu0 %v1228
    %1251 = vmatpush.msra.mxu0 %v1224
    %1252 = vmatmul.f32.gmra.mxu0 %v1234
    %v1253 = vpop.f32.mrf.mxu0
    %v1254 = vadd.f32 0.0, %v1253
    %1255 = vmatmul.f32.gmra.mxu0 %v1234
    %v1256 = vpop.f32.mrf.mxu0
    %v1257 = vadd.f32 0.0, %v1256
    %1258 = vdwg.mxu0
    %1259 = vmatpush.msra.mxu0 0.0
    %1260 = vmatpush.msra.mxu0 0.0
    %1261 = vmatpush.msra.mxu0 0.0
    %1262 = vmatpush.msra.mxu0 0.0
    %1263 = vmatpush.msra.mxu0 0.0
    %1264 = vmatpush.msra.mxu0 0.0
    %1265 = vmatpush.msra.mxu0 0.0
    %1266 = vmatpush.msra.mxu0 0.0
    %1267 = vmatpush.msra.mxu0 0.0
    %1268 = vmatpush.msra.mxu0 0.0
    %1269 = vmatpush.msra.mxu0 0.0
    %1270 = vmatpush.msra.mxu0 0.0
    %1271 = vmatpush.msra.mxu0 0.0
    %1272 = vmatpush.msra.mxu0 0.0
    %1273 = vmatpush.msra.mxu0 %v1229
    %1274 = vmatpush.msra.mxu0 %v1225
    %1275 = vmatmul.f32.gmra.mxu0 %v1234
    %v1276 = vpop.f32.mrf.mxu0
    %v1277 = vadd.f32 0.0, %v1276
    %1278 = vmatmul.f32.gmra.mxu0 %v1234
    %v1279 = vpop.f32.mrf.mxu0
    %v1280 = vadd.f32 0.0, %v1279
    %1281 = vdwg.mxu0
    %1282 = vmatpush.msra.mxu0 0.0
    %1283 = vmatpush.msra.mxu0 0.0
    %1284 = vmatpush.msra.mxu0 0.0
    %1285 = vmatpush.msra.mxu0 0.0
    %1286 = vmatpush.msra.mxu0 0.0
    %1287 = vmatpush.msra.mxu0 0.0
    %1288 = vmatpush.msra.mxu0 0.0
    %1289 = vmatpush.msra.mxu0 0.0
    %1290 = vmatpush.msra.mxu0 0.0
    %1291 = vmatpush.msra.mxu0 0.0
    %1292 = vmatpush.msra.mxu0 0.0
    %1293 = vmatpush.msra.mxu0 0.0
    %1294 = vmatpush.msra.mxu0 0.0
    %1295 = vmatpush.msra.mxu0 0.0
    %1296 = vmatpush.msra.mxu0 %v1230
    %1297 = vmatpush.msra.mxu0 %v1226
    %1298 = vmatmul.f32.gmra.mxu0 %v1234
    %v1299 = vpop.f32.mrf.mxu0
    %v1300 = vadd.f32 0.0, %v1299
    %1301 = vmatmul.f32.gmra.mxu0 %v1234
    %v1302 = vpop.f32.mrf.mxu0
    %v1303 = vadd.f32 0.0, %v1302
    %1304 = vdwg.mxu0
    %1305 = vmatpush.msra.mxu0 0.0
    %1306 = vmatpush.msra.mxu0 0.0
    %1307 = vmatpush.msra.mxu0 0.0
    %1308 = vmatpush.msra.mxu0 0.0
    %1309 = vmatpush.msra.mxu0 0.0
    %1310 = vmatpush.msra.mxu0 0.0
    %1311 = vmatpush.msra.mxu0 0.0
    %1312 = vmatpush.msra.mxu0 0.0
    %1313 = vmatpush.msra.mxu0 0.0
    %1314 = vmatpush.msra.mxu0 0.0
    %1315 = vmatpush.msra.mxu0 0.0
    %1316 = vmatpush.msra.mxu0 0.0
    %1317 = vmatpush.msra.mxu0 0.0
    %1318 = vmatpush.msra.mxu0 0.0
    %1319 = vmatpush.msra.mxu0 %v1231
    %1320 = vmatpush.msra.mxu0 %v1227
    %1321 = vmatmul.f32.gmra.mxu0 %v1234
    %v1322 = vpop.f32.mrf.mxu0
    %v1323 = vadd.f32 0.0, %v1322
    %1324 = vmatmul.f32.gmra.mxu0 %v1234
    %v1325 = vpop.f32.mrf.mxu0
    %v1326 = vadd.f32 0.0, %v1325
    %1327 = vdwg.mxu0
    %v1328 = vadd.f32 %v278, %v1254
    %v1329 = vadd.f32 %v305, %v1277
    %v1330 = vadd.f32 %v332, %v1300
    %v1331 = vadd.f32 %v359, %v1323
    %v1332 = vadd.f32 %v281, %v1257
    %v1333 = vadd.f32 %v308, %v1280
    %v1334 = vadd.f32 %v335, %v1303
    %v1335 = vadd.f32 %v362, %v1326
    %v1336 = vadd.f32 %v1328, %v1123
    %v1337 = vadd.f32 %v1329, %v1146
    %v1338 = vadd.f32 %v1330, %v1169
    %v1339 = vadd.f32 %v1331, %v1192
    %v1340 = vadd.f32 %v1332, %v1126
    %v1341 = vadd.f32 %v1333, %v1149
    %v1342 = vadd.f32 %v1334, %v1172
    %v1343 = vadd.f32 %v1335, %v1195
    %s1344 = scalar_lea.vmem %s2, 577
    %v1345 = vld [vmem:[%s1344] ss:$8 sm:$0xf]
    %v1347 = vperm.slane %v1345, 0
    %v1348 = vperm.slane %v1345, 1
    %v1349 = vperm.slane %v1345, 2
    %v1350 = vperm.slane %v1345, 3
    %v1355 = vadd.f32 %v629, %v1347
    %v1356 = vadd.f32 %v656, %v1348
    %v1357 = vadd.f32 %v683, %v1349
    %v1358 = vadd.f32 %v710, %v1350
    %v1359 = vadd.f32 %v632, %v1347
    %v1360 = vadd.f32 %v659, %v1348
    %v1361 = vadd.f32 %v686, %v1349
    %v1362 = vadd.f32 %v713, %v1350
    %v1363 = vmul.f32 %v1355, %v1197
    %v1364 = vmul.f32 %v1356, %v1198
    %v1365 = vmul.f32 %v1357, %v1199
    %v1366 = vmul.f32 %v1358, %v1200
    %v1367 = vmul.f32 %v1359, %v1201
    %v1368 = vmul.f32 %v1360, %v1202
    %v1369 = vmul.f32 %v1361, %v1203
    %v1370 = vmul.f32 %v1362, %v1204
    %1371 = vmatpush.msra.mxu0 0.0
    %1372 = vmatpush.msra.mxu0 0.0
    %1373 = vmatpush.msra.mxu0 0.0
    %1374 = vmatpush.msra.mxu0 0.0
    %1375 = vmatpush.msra.mxu0 0.0
    %1376 = vmatpush.msra.mxu0 0.0
    %1377 = vmatpush.msra.mxu0 0.0
    %1378 = vmatpush.msra.mxu0 0.0
    %1379 = vmatpush.msra.mxu0 0.0
    %1380 = vmatpush.msra.mxu0 0.0
    %1381 = vmatpush.msra.mxu0 0.0
    %1382 = vmatpush.msra.mxu0 0.0
    %1383 = vmatpush.msra.mxu0 0.0
    %1384 = vmatpush.msra.mxu0 0.0
    %1385 = vmatpush.msra.mxu0 %v1367
    %1386 = vmatpush.msra.mxu0 %v1363
    %1387 = vmatmul.f32.gmra.mxu0 %v1234
    %v1388 = vpop.f32.mrf.mxu0
    %v1389 = vadd.f32 0.0, %v1388
    %1390 = vmatmul.f32.gmra.mxu0 %v1234
    %v1391 = vpop.f32.mrf.mxu0
    %v1392 = vadd.f32 0.0, %v1391
    %1393 = vdwg.mxu0
    %1394 = vmatpush.msra.mxu0 0.0
    %1395 = vmatpush.msra.mxu0 0.0
    %1396 = vmatpush.msra.mxu0 0.0
    %1397 = vmatpush.msra.mxu0 0.0
    %1398 = vmatpush.msra.mxu0 0.0
    %1399 = vmatpush.msra.mxu0 0.0
    %1400 = vmatpush.msra.mxu0 0.0
    %1401 = vmatpush.msra.mxu0 0.0
    %1402 = vmatpush.msra.mxu0 0.0
    %1403 = vmatpush.msra.mxu0 0.0
    %1404 = vmatpush.msra.mxu0 0.0
    %1405 = vmatpush.msra.mxu0 0.0
    %1406 = vmatpush.msra.mxu0 0.0
    %1407 = vmatpush.msra.mxu0 0.0
    %1408 = vmatpush.msra.mxu0 %v1368
    %1409 = vmatpush.msra.mxu0 %v1364
    %1410 = vmatmul.f32.gmra.mxu0 %v1234
    %v1411 = vpop.f32.mrf.mxu0
    %v1412 = vadd.f32 0.0, %v1411
    %1413 = vmatmul.f32.gmra.mxu0 %v1234
    %v1414 = vpop.f32.mrf.mxu0
    %v1415 = vadd.f32 0.0, %v1414
    %1416 = vdwg.mxu0
    %1417 = vmatpush.msra.mxu0 0.0
    %1418 = vmatpush.msra.mxu0 0.0
    %1419 = vmatpush.msra.mxu0 0.0
    %1420 = vmatpush.msra.mxu0 0.0
    %1421 = vmatpush.msra.mxu0 0.0
    %1422 = vmatpush.msra.mxu0 0.0
    %1423 = vmatpush.msra.mxu0 0.0
    %1424 = vmatpush.msra.mxu0 0.0
    %1425 = vmatpush.msra.mxu0 0.0
    %1426 = vmatpush.msra.mxu0 0.0
    %1427 = vmatpush.msra.mxu0 0.0
    %1428 = vmatpush.msra.mxu0 0.0
    %1429 = vmatpush.msra.mxu0 0.0
    %1430 = vmatpush.msra.mxu0 0.0
    %1431 = vmatpush.msra.mxu0 %v1369
    %1432 = vmatpush.msra.mxu0 %v1365
    %1433 = vmatmul.f32.gmra.mxu0 %v1234
    %v1434 = vpop.f32.mrf.mxu0
    %v1435 = vadd.f32 0.0, %v1434
    %1436 = vmatmul.f32.gmra.mxu0 %v1234
    %v1437 = vpop.f32.mrf.mxu0
    %v1438 = vadd.f32 0.0, %v1437
    %1439 = vdwg.mxu0
    %1440 = vmatpush.msra.mxu0 0.0
    %1441 = vmatpush.msra.mxu0 0.0
    %1442 = vmatpush.msra.mxu0 0.0
    %1443 = vmatpush.msra.mxu0 0.0
    %1444 = vmatpush.msra.mxu0 0.0
    %1445 = vmatpush.msra.mxu0 0.0
    %1446 = vmatpush.msra.mxu0 0.0
    %1447 = vmatpush.msra.mxu0 0.0
    %1448 = vmatpush.msra.mxu0 0.0
    %1449 = vmatpush.msra.mxu0 0.0
    %1450 = vmatpush.msra.mxu0 0.0
    %1451 = vmatpush.msra.mxu0 0.0
    %1452 = vmatpush.msra.mxu0 0.0
    %1453 = vmatpush.msra.mxu0 0.0
    %1454 = vmatpush.msra.mxu0 %v1370
    %1455 = vmatpush.msra.mxu0 %v1366
    %1456 = vmatmul.f32.gmra.mxu0 %v1234
    %v1457 = vpop.f32.mrf.mxu0
    %v1458 = vadd.f32 0.0, %v1457
    %1459 = vmatmul.f32.gmra.mxu0 %v1234
    %v1460 = vpop.f32.mrf.mxu0
    %v1461 = vadd.f32 0.0, %v1460
    %1462 = vdwg.mxu0
    %v1463 = vadd.f32 %v521, %v1389
    %v1464 = vadd.f32 %v548, %v1412
    %v1465 = vadd.f32 %v575, %v1435
    %v1466 = vadd.f32 %v602, %v1458
    %v1467 = vadd.f32 %v524, %v1392
    %v1468 = vadd.f32 %v551, %v1415
    %v1469 = vadd.f32 %v578, %v1438
    %v1470 = vadd.f32 %v605, %v1461
    %s1471 = scalar_lea.vmem %s2, 578
    %v1472 = vld [vmem:[%s1471] ss:$8 sm:$0xf]
    %v1474 = vperm.slane %v1472, 0
    %v1475 = vperm.slane %v1472, 1
    %v1476 = vperm.slane %v1472, 2
    %v1477 = vperm.slane %v1472, 3
    %v1482 = vadd.f32 %v872, %v1474
    %v1483 = vadd.f32 %v899, %v1475
    %v1484 = vadd.f32 %v926, %v1476
    %v1485 = vadd.f32 %v953, %v1477
    %v1486 = vadd.f32 %v875, %v1474
    %v1487 = vadd.f32 %v902, %v1475
    %v1488 = vadd.f32 %v929, %v1476
    %v1489 = vadd.f32 %v956, %v1477
    %v1490 = vmul.f32 %v1482, %v1197
    %v1491 = vmul.f32 %v1483, %v1198
    %v1492 = vmul.f32 %v1484, %v1199
    %v1493 = vmul.f32 %v1485, %v1200
    %v1494 = vmul.f32 %v1486, %v1201
    %v1495 = vmul.f32 %v1487, %v1202
    %v1496 = vmul.f32 %v1488, %v1203
    %v1497 = vmul.f32 %v1489, %v1204
    %1498 = vmatpush.msra.mxu0 0.0
    %1499 = vmatpush.msra.mxu0 0.0
    %1500 = vmatpush.msra.mxu0 0.0
    %1501 = vmatpush.msra.mxu0 0.0
    %1502 = vmatpush.msra.mxu0 0.0
    %1503 = vmatpush.msra.mxu0 0.0
    %1504 = vmatpush.msra.mxu0 0.0
    %1505 = vmatpush.msra.mxu0 0.0
    %1506 = vmatpush.msra.mxu0 0.0
    %1507 = vmatpush.msra.mxu0 0.0
    %1508 = vmatpush.msra.mxu0 0.0
    %1509 = vmatpush.msra.mxu0 0.0
    %1510 = vmatpush.msra.mxu0 0.0
    %1511 = vmatpush.msra.mxu0 0.0
    %1512 = vmatpush.msra.mxu0 %v1494
    %1513 = vmatpush.msra.mxu0 %v1490
    %1514 = vmatmul.f32.gmra.mxu0 %v1234
    %v1515 = vpop.f32.mrf.mxu0
    %v1516 = vadd.f32 0.0, %v1515
    %1517 = vmatmul.f32.gmra.mxu0 %v1234
    %v1518 = vpop.f32.mrf.mxu0
    %v1519 = vadd.f32 0.0, %v1518
    %1520 = vdwg.mxu0
    %1521 = vmatpush.msra.mxu0 0.0
    %1522 = vmatpush.msra.mxu0 0.0
    %1523 = vmatpush.msra.mxu0 0.0
    %1524 = vmatpush.msra.mxu0 0.0
    %1525 = vmatpush.msra.mxu0 0.0
    %1526 = vmatpush.msra.mxu0 0.0
    %1527 = vmatpush.msra.mxu0 0.0
    %1528 = vmatpush.msra.mxu0 0.0
    %1529 = vmatpush.msra.mxu0 0.0
    %1530 = vmatpush.msra.mxu0 0.0
    %1531 = vmatpush.msra.mxu0 0.0
    %1532 = vmatpush.msra.mxu0 0.0
    %1533 = vmatpush.msra.mxu0 0.0
    %1534 = vmatpush.msra.mxu0 0.0
    %1535 = vmatpush.msra.mxu0 %v1495
    %1536 = vmatpush.msra.mxu0 %v1491
    %1537 = vmatmul.f32.gmra.mxu0 %v1234
    %v1538 = vpop.f32.mrf.mxu0
    %v1539 = vadd.f32 0.0, %v1538
    %1540 = vmatmul.f32.gmra.mxu0 %v1234
    %v1541 = vpop.f32.mrf.mxu0
    %v1542 = vadd.f32 0.0, %v1541
    %1543 = vdwg.mxu0
    %1544 = vmatpush.msra.mxu0 0.0
    %1545 = vmatpush.msra.mxu0 0.0
    %1546 = vmatpush.msra.mxu0 0.0
    %1547 = vmatpush.msra.mxu0 0.0
    %1548 = vmatpush.msra.mxu0 0.0
    %1549 = vmatpush.msra.mxu0 0.0
    %1550 = vmatpush.msra.mxu0 0.0
    %1551 = vmatpush.msra.mxu0 0.0
    %1552 = vmatpush.msra.mxu0 0.0
    %1553 = vmatpush.msra.mxu0 0.0
    %1554 = vmatpush.msra.mxu0 0.0
    %1555 = vmatpush.msra.mxu0 0.0
    %1556 = vmatpush.msra.mxu0 0.0
    %1557 = vmatpush.msra.mxu0 0.0
    %1558 = vmatpush.msra.mxu0 %v1496
    %1559 = vmatpush.msra.mxu0 %v1492
    %1560 = vmatmul.f32.gmra.mxu0 %v1234
    %v1561 = vpop.f32.mrf.mxu0
    %v1562 = vadd.f32 0.0, %v1561
    %1563 = vmatmul.f32.gmra.mxu0 %v1234
    %v1564 = vpop.f32.mrf.mxu0
    %v1565 = vadd.f32 0.0, %v1564
    %1566 = vdwg.mxu0
    %1567 = vmatpush.msra.mxu0 0.0
    %1568 = vmatpush.msra.mxu0 0.0
    %1569 = vmatpush.msra.mxu0 0.0
    %1570 = vmatpush.msra.mxu0 0.0
    %1571 = vmatpush.msra.mxu0 0.0
    %1572 = vmatpush.msra.mxu0 0.0
    %1573 = vmatpush.msra.mxu0 0.0
    %1574 = vmatpush.msra.mxu0 0.0
    %1575 = vmatpush.msra.mxu0 0.0
    %1576 = vmatpush.msra.mxu0 0.0
    %1577 = vmatpush.msra.mxu0 0.0
    %1578 = vmatpush.msra.mxu0 0.0
    %1579 = vmatpush.msra.mxu0 0.0
    %1580 = vmatpush.msra.mxu0 0.0
    %1581 = vmatpush.msra.mxu0 %v1497
    %1582 = vmatpush.msra.mxu0 %v1493
    %1583 = vmatmul.f32.gmra.mxu0 %v1234
    %v1584 = vpop.f32.mrf.mxu0
    %v1585 = vadd.f32 0.0, %v1584
    %1586 = vmatmul.f32.gmra.mxu0 %v1234
    %v1587 = vpop.f32.mrf.mxu0
    %v1588 = vadd.f32 0.0, %v1587
    %1589 = vdwg.mxu0
    %v1590 = vadd.f32 %v760, %v1516
    %v1591 = vadd.f32 %v787, %v1539
    %v1592 = vadd.f32 %v814, %v1562
    %v1593 = vadd.f32 %v841, %v1585
    %v1594 = vadd.f32 %v763, %v1519
    %v1595 = vadd.f32 %v790, %v1542
    %v1596 = vadd.f32 %v817, %v1565
    %v1597 = vadd.f32 %v844, %v1588
    %v1598 = vxor.u32 %v1336, 2147483648
    %v1599 = vxor.u32 %v1337, 2147483648
    %v1600 = vxor.u32 %v1338, 2147483648
    %v1601 = vxor.u32 %v1339, 2147483648
    %v1602 = vxor.u32 %v1463, 2147483648
    %v1603 = vxor.u32 %v1464, 2147483648
    %v1604 = vxor.u32 %v1465, 2147483648
    %v1605 = vxor.u32 %v1466, 2147483648
    %v1606 = vxor.u32 %v1340, 2147483648
    %v1607 = vxor.u32 %v1341, 2147483648
    %v1608 = vxor.u32 %v1342, 2147483648
    %v1609 = vxor.u32 %v1343, 2147483648
    %v1610 = vxor.u32 %v1467, 2147483648
    %v1611 = vxor.u32 %v1468, 2147483648
    %v1612 = vxor.u32 %v1469, 2147483648
    %v1613 = vxor.u32 %v1470, 2147483648
    %v1614 = vmul.f32 %v1598, 1.442695
    %v1615 = vpow.pop %v1614
    %v1616 = vmul.f32 %v1599, 1.442695
    %v1617 = vpow.pop %v1616
    %v1618 = vmul.f32 %v1600, 1.442695
    %v1619 = vpow.pop %v1618
    %v1620 = vmul.f32 %v1601, 1.442695
    %v1621 = vpow.pop %v1620
    %v1622 = vmul.f32 %v1602, 1.442695
    %v1623 = vpow.pop %v1622
    %v1624 = vmul.f32 %v1603, 1.442695
    %v1625 = vpow.pop %v1624
    %v1626 = vmul.f32 %v1604, 1.442695
    %v1627 = vpow.pop %v1626
    %v1628 = vmul.f32 %v1605, 1.442695
    %v1629 = vpow.pop %v1628
    %v1630 = vmul.f32 %v1606, 1.442695
    %v1631 = vpow.pop %v1630
    %v1632 = vmul.f32 %v1607, 1.442695
    %v1633 = vpow.pop %v1632
    %v1634 = vmul.f32 %v1608, 1.442695
    %v1635 = vpow.pop %v1634
    %v1636 = vmul.f32 %v1609, 1.442695
    %v1637 = vpow.pop %v1636
    %v1638 = vmul.f32 %v1610, 1.442695
    %v1639 = vpow.pop %v1638
    %v1640 = vmul.f32 %v1611, 1.442695
    %v1641 = vpow.pop %v1640
    %v1642 = vmul.f32 %v1612, 1.442695
    %v1643 = vpow.pop %v1642
    %v1644 = vmul.f32 %v1613, 1.442695
    %v1645 = vpow.pop %v1644
    %v1646 = vadd.f32 %v1615, 1.0
    %v1647 = vadd.f32 %v1617, 1.0
    %v1648 = vadd.f32 %v1619, 1.0
    %v1649 = vadd.f32 %v1621, 1.0
    %v1650 = vadd.f32 %v1623, 1.0
    %v1651 = vadd.f32 %v1625, 1.0
    %v1652 = vadd.f32 %v1627, 1.0
    %v1653 = vadd.f32 %v1629, 1.0
    %v1654 = vadd.f32 %v1631, 1.0
    %v1655 = vadd.f32 %v1633, 1.0
    %v1656 = vadd.f32 %v1635, 1.0
    %v1657 = vadd.f32 %v1637, 1.0
    %v1658 = vadd.f32 %v1639, 1.0
    %v1659 = vadd.f32 %v1641, 1.0
    %v1660 = vadd.f32 %v1643, 1.0
    %v1661 = vadd.f32 %v1645, 1.0
    %v1662 = vrcp.pop %v1646
    %v1663 = vmul.f32 %v1646, %v1662
    %v1664 = vsub.f32 1.0, %v1663
    %v1665 = vmul.f32 %v1662, %v1664
    %v1666 = vadd.f32 %v1662, %v1665
    %vm1667 = vweird.f32 %v1646
    %vm1668 = vweird.f32 %v1662
    %vm1669 = vmor %vm1667, %vm1668
    %v1670 = vsel %vm1669, %v1662, %v1666
    %v1671 = vand.u32 2147483647, %v1646
    %vm1672 = vcmp.eq.f32.partialorder %v1671, 8.507059e+37
    %v1673 = vand.u32 %v1646, 2147483648
    %v1674 = vor.u32 1.1754944e-38, %v1673
    %v1675 = vsel %vm1672, %v1674, %v1670
    %v1676 = vmul.f32 1.0, %v1675
    %v1677 = vrcp.pop %v1647
    %v1678 = vmul.f32 %v1647, %v1677
    %v1679 = vsub.f32 1.0, %v1678
    %v1680 = vmul.f32 %v1677, %v1679
    %v1681 = vadd.f32 %v1677, %v1680
    %vm1682 = vweird.f32 %v1647
    %vm1683 = vweird.f32 %v1677
    %vm1684 = vmor %vm1682, %vm1683
    %v1685 = vsel %vm1684, %v1677, %v1681
    %v1686 = vand.u32 2147483647, %v1647
    %vm1687 = vcmp.eq.f32.partialorder %v1686, 8.507059e+37
    %v1688 = vand.u32 %v1647, 2147483648
    %v1689 = vor.u32 1.1754944e-38, %v1688
    %v1690 = vsel %vm1687, %v1689, %v1685
    %v1691 = vmul.f32 1.0, %v1690
    %v1692 = vrcp.pop %v1648
    %v1693 = vmul.f32 %v1648, %v1692
    %v1694 = vsub.f32 1.0, %v1693
    %v1695 = vmul.f32 %v1692, %v1694
    %v1696 = vadd.f32 %v1692, %v1695
    %vm1697 = vweird.f32 %v1648
    %vm1698 = vweird.f32 %v1692
    %vm1699 = vmor %vm1697, %vm1698
    %v1700 = vsel %vm1699, %v1692, %v1696
    %v1701 = vand.u32 2147483647, %v1648
    %vm1702 = vcmp.eq.f32.partialorder %v1701, 8.507059e+37
    %v1703 = vand.u32 %v1648, 2147483648
    %v1704 = vor.u32 1.1754944e-38, %v1703
    %v1705 = vsel %vm1702, %v1704, %v1700
    %v1706 = vmul.f32 1.0, %v1705
    %v1707 = vrcp.pop %v1649
    %v1708 = vmul.f32 %v1649, %v1707
    %v1709 = vsub.f32 1.0, %v1708
    %v1710 = vmul.f32 %v1707, %v1709
    %v1711 = vadd.f32 %v1707, %v1710
    %vm1712 = vweird.f32 %v1649
    %vm1713 = vweird.f32 %v1707
    %vm1714 = vmor %vm1712, %vm1713
    %v1715 = vsel %vm1714, %v1707, %v1711
    %v1716 = vand.u32 2147483647, %v1649
    %vm1717 = vcmp.eq.f32.partialorder %v1716, 8.507059e+37
    %v1718 = vand.u32 %v1649, 2147483648
    %v1719 = vor.u32 1.1754944e-38, %v1718
    %v1720 = vsel %vm1717, %v1719, %v1715
    %v1721 = vmul.f32 1.0, %v1720
    %v1722 = vrcp.pop %v1650
    %v1723 = vmul.f32 %v1650, %v1722
    %v1724 = vsub.f32 1.0, %v1723
    %v1725 = vmul.f32 %v1722, %v1724
    %v1726 = vadd.f32 %v1722, %v1725
    %vm1727 = vweird.f32 %v1650
    %vm1728 = vweird.f32 %v1722
    %vm1729 = vmor %vm1727, %vm1728
    %v1730 = vsel %vm1729, %v1722, %v1726
    %v1731 = vand.u32 2147483647, %v1650
    %vm1732 = vcmp.eq.f32.partialorder %v1731, 8.507059e+37
    %v1733 = vand.u32 %v1650, 2147483648
    %v1734 = vor.u32 1.1754944e-38, %v1733
    %v1735 = vsel %vm1732, %v1734, %v1730
    %v1736 = vmul.f32 1.0, %v1735
    %v1737 = vrcp.pop %v1651
    %v1738 = vmul.f32 %v1651, %v1737
    %v1739 = vsub.f32 1.0, %v1738
    %v1740 = vmul.f32 %v1737, %v1739
    %v1741 = vadd.f32 %v1737, %v1740
    %vm1742 = vweird.f32 %v1651
    %vm1743 = vweird.f32 %v1737
    %vm1744 = vmor %vm1742, %vm1743
    %v1745 = vsel %vm1744, %v1737, %v1741
    %v1746 = vand.u32 2147483647, %v1651
    %vm1747 = vcmp.eq.f32.partialorder %v1746, 8.507059e+37
    %v1748 = vand.u32 %v1651, 2147483648
    %v1749 = vor.u32 1.1754944e-38, %v1748
    %v1750 = vsel %vm1747, %v1749, %v1745
    %v1751 = vmul.f32 1.0, %v1750
    %v1752 = vrcp.pop %v1652
    %v1753 = vmul.f32 %v1652, %v1752
    %v1754 = vsub.f32 1.0, %v1753
    %v1755 = vmul.f32 %v1752, %v1754
    %v1756 = vadd.f32 %v1752, %v1755
    %vm1757 = vweird.f32 %v1652
    %vm1758 = vweird.f32 %v1752
    %vm1759 = vmor %vm1757, %vm1758
    %v1760 = vsel %vm1759, %v1752, %v1756
    %v1761 = vand.u32 2147483647, %v1652
    %vm1762 = vcmp.eq.f32.partialorder %v1761, 8.507059e+37
    %v1763 = vand.u32 %v1652, 2147483648
    %v1764 = vor.u32 1.1754944e-38, %v1763
    %v1765 = vsel %vm1762, %v1764, %v1760
    %v1766 = vmul.f32 1.0, %v1765
    %v1767 = vrcp.pop %v1653
    %v1768 = vmul.f32 %v1653, %v1767
    %v1769 = vsub.f32 1.0, %v1768
    %v1770 = vmul.f32 %v1767, %v1769
    %v1771 = vadd.f32 %v1767, %v1770
    %vm1772 = vweird.f32 %v1653
    %vm1773 = vweird.f32 %v1767
    %vm1774 = vmor %vm1772, %vm1773
    %v1775 = vsel %vm1774, %v1767, %v1771
    %v1776 = vand.u32 2147483647, %v1653
    %vm1777 = vcmp.eq.f32.partialorder %v1776, 8.507059e+37
    %v1778 = vand.u32 %v1653, 2147483648
    %v1779 = vor.u32 1.1754944e-38, %v1778
    %v1780 = vsel %vm1777, %v1779, %v1775
    %v1781 = vmul.f32 1.0, %v1780
    %v1782 = vrcp.pop %v1654
    %v1783 = vmul.f32 %v1654, %v1782
    %v1784 = vsub.f32 1.0, %v1783
    %v1785 = vmul.f32 %v1782, %v1784
    %v1786 = vadd.f32 %v1782, %v1785
    %vm1787 = vweird.f32 %v1654
    %vm1788 = vweird.f32 %v1782
    %vm1789 = vmor %vm1787, %vm1788
    %v1790 = vsel %vm1789, %v1782, %v1786
    %v1791 = vand.u32 2147483647, %v1654
    %vm1792 = vcmp.eq.f32.partialorder %v1791, 8.507059e+37
    %v1793 = vand.u32 %v1654, 2147483648
    %v1794 = vor.u32 1.1754944e-38, %v1793
    %v1795 = vsel %vm1792, %v1794, %v1790
    %v1796 = vmul.f32 1.0, %v1795
    %v1797 = vrcp.pop %v1655
    %v1798 = vmul.f32 %v1655, %v1797
    %v1799 = vsub.f32 1.0, %v1798
    %v1800 = vmul.f32 %v1797, %v1799
    %v1801 = vadd.f32 %v1797, %v1800
    %vm1802 = vweird.f32 %v1655
    %vm1803 = vweird.f32 %v1797
    %vm1804 = vmor %vm1802, %vm1803
    %v1805 = vsel %vm1804, %v1797, %v1801
    %v1806 = vand.u32 2147483647, %v1655
    %vm1807 = vcmp.eq.f32.partialorder %v1806, 8.507059e+37
    %v1808 = vand.u32 %v1655, 2147483648
    %v1809 = vor.u32 1.1754944e-38, %v1808
    %v1810 = vsel %vm1807, %v1809, %v1805
    %v1811 = vmul.f32 1.0, %v1810
    %v1812 = vrcp.pop %v1656
    %v1813 = vmul.f32 %v1656, %v1812
    %v1814 = vsub.f32 1.0, %v1813
    %v1815 = vmul.f32 %v1812, %v1814
    %v1816 = vadd.f32 %v1812, %v1815
    %vm1817 = vweird.f32 %v1656
    %vm1818 = vweird.f32 %v1812
    %vm1819 = vmor %vm1817, %vm1818
    %v1820 = vsel %vm1819, %v1812, %v1816
    %v1821 = vand.u32 2147483647, %v1656
    %vm1822 = vcmp.eq.f32.partialorder %v1821, 8.507059e+37
    %v1823 = vand.u32 %v1656, 2147483648
    %v1824 = vor.u32 1.1754944e-38, %v1823
    %v1825 = vsel %vm1822, %v1824, %v1820
    %v1826 = vmul.f32 1.0, %v1825
    %v1827 = vrcp.pop %v1657
    %v1828 = vmul.f32 %v1657, %v1827
    %v1829 = vsub.f32 1.0, %v1828
    %v1830 = vmul.f32 %v1827, %v1829
    %v1831 = vadd.f32 %v1827, %v1830
    %vm1832 = vweird.f32 %v1657
    %vm1833 = vweird.f32 %v1827
    %vm1834 = vmor %vm1832, %vm1833
    %v1835 = vsel %vm1834, %v1827, %v1831
    %v1836 = vand.u32 2147483647, %v1657
    %vm1837 = vcmp.eq.f32.partialorder %v1836, 8.507059e+37
    %v1838 = vand.u32 %v1657, 2147483648
    %v1839 = vor.u32 1.1754944e-38, %v1838
    %v1840 = vsel %vm1837, %v1839, %v1835
    %v1841 = vmul.f32 1.0, %v1840
    %v1842 = vrcp.pop %v1658
    %v1843 = vmul.f32 %v1658, %v1842
    %v1844 = vsub.f32 1.0, %v1843
    %v1845 = vmul.f32 %v1842, %v1844
    %v1846 = vadd.f32 %v1842, %v1845
    %vm1847 = vweird.f32 %v1658
    %vm1848 = vweird.f32 %v1842
    %vm1849 = vmor %vm1847, %vm1848
    %v1850 = vsel %vm1849, %v1842, %v1846
    %v1851 = vand.u32 2147483647, %v1658
    %vm1852 = vcmp.eq.f32.partialorder %v1851, 8.507059e+37
    %v1853 = vand.u32 %v1658, 2147483648
    %v1854 = vor.u32 1.1754944e-38, %v1853
    %v1855 = vsel %vm1852, %v1854, %v1850
    %v1856 = vmul.f32 1.0, %v1855
    %v1857 = vrcp.pop %v1659
    %v1858 = vmul.f32 %v1659, %v1857
    %v1859 = vsub.f32 1.0, %v1858
    %v1860 = vmul.f32 %v1857, %v1859
    %v1861 = vadd.f32 %v1857, %v1860
    %vm1862 = vweird.f32 %v1659
    %vm1863 = vweird.f32 %v1857
    %vm1864 = vmor %vm1862, %vm1863
    %v1865 = vsel %vm1864, %v1857, %v1861
    %v1866 = vand.u32 2147483647, %v1659
    %vm1867 = vcmp.eq.f32.partialorder %v1866, 8.507059e+37
    %v1868 = vand.u32 %v1659, 2147483648
    %v1869 = vor.u32 1.1754944e-38, %v1868
    %v1870 = vsel %vm1867, %v1869, %v1865
    %v1871 = vmul.f32 1.0, %v1870
    %v1872 = vrcp.pop %v1660
    %v1873 = vmul.f32 %v1660, %v1872
    %v1874 = vsub.f32 1.0, %v1873
    %v1875 = vmul.f32 %v1872, %v1874
    %v1876 = vadd.f32 %v1872, %v1875
    %vm1877 = vweird.f32 %v1660
    %vm1878 = vweird.f32 %v1872
    %vm1879 = vmor %vm1877, %vm1878
    %v1880 = vsel %vm1879, %v1872, %v1876
    %v1881 = vand.u32 2147483647, %v1660
    %vm1882 = vcmp.eq.f32.partialorder %v1881, 8.507059e+37
    %v1883 = vand.u32 %v1660, 2147483648
    %v1884 = vor.u32 1.1754944e-38, %v1883
    %v1885 = vsel %vm1882, %v1884, %v1880
    %v1886 = vmul.f32 1.0, %v1885
    %v1887 = vrcp.pop %v1661
    %v1888 = vmul.f32 %v1661, %v1887
    %v1889 = vsub.f32 1.0, %v1888
    %v1890 = vmul.f32 %v1887, %v1889
    %v1891 = vadd.f32 %v1887, %v1890
    %vm1892 = vweird.f32 %v1661
    %vm1893 = vweird.f32 %v1887
    %vm1894 = vmor %vm1892, %vm1893
    %v1895 = vsel %vm1894, %v1887, %v1891
    %v1896 = vand.u32 2147483647, %v1661
    %vm1897 = vcmp.eq.f32.partialorder %v1896, 8.507059e+37
    %v1898 = vand.u32 %v1661, 2147483648
    %v1899 = vor.u32 1.1754944e-38, %v1898
    %v1900 = vsel %vm1897, %v1899, %v1895
    %v1901 = vmul.f32 1.0, %v1900
    %v1902 = vld [vmem:[%s3 + $0x50] sm:$0xff]
    %v1903 = vld [vmem:[%s3 + $0x58] sm:$0xff]
    %v1904 = vld [vmem:[%s3 + $0x60] sm:$0xff]
    %v1905 = vld [vmem:[%s3 + $0x68] sm:$0xff]
    %v1906 = vld [vmem:[%s3 + $0x70] sm:$0xff]
    %v1907 = vld [vmem:[%s3 + $0x78] sm:$0xff]
    %v1908 = vld [vmem:[%s3 + $0x80] sm:$0xff]
    %v1909 = vld [vmem:[%s3 + $0x88] sm:$0xff]
    %v1910 = vld [vmem:[%s3 + $0x90] sm:$0xff]
    %v1911 = vld [vmem:[%s3 + $0x98] sm:$0xff]
    %v1912 = vld [vmem:[%s3 + $0xa0] sm:$0xff]
    %v1913 = vld [vmem:[%s3 + $0xa8] sm:$0xff]
    %v1914 = vld [vmem:[%s3 + $0xb0] sm:$0xff]
    %v1915 = vld [vmem:[%s3 + $0xb8] sm:$0xff]
    %v1916 = vld [vmem:[%s3 + $0xc0] sm:$0xff]
    %v1917 = vld [vmem:[%s3 + $0xc8] sm:$0xff]
    %v1918 = vld [vmem:[%s3 + $0xd0] sm:$0xff]
    %v1919 = vld [vmem:[%s3 + $0xd8] sm:$0xff]
    %v1920 = vld [vmem:[%s3 + $0xe0] sm:$0xff]
    %v1921 = vld [vmem:[%s3 + $0xe8] sm:$0xff]
    %v1922 = vld [vmem:[%s3 + $0xf0] sm:$0xff]
    %v1923 = vld [vmem:[%s3 + $0xf8] sm:$0xff]
    %v1924 = vld [vmem:[%s3 + $0x100] sm:$0xff]
    %v1925 = vld [vmem:[%s3 + $0x108] sm:$0xff]
    %v1926 = vld [vmem:[%s3 + $0x110] sm:$0xff]
    %v1927 = vld [vmem:[%s3 + $0x118] sm:$0xff]
    %v1928 = vld [vmem:[%s3 + $0x120] sm:$0xff]
    %v1929 = vld [vmem:[%s3 + $0x128] sm:$0xff]
    %v1930 = vld [vmem:[%s3 + $0x130] sm:$0xff]
    %v1931 = vld [vmem:[%s3 + $0x138] sm:$0xff]
    %v1932 = vld [vmem:[%s3 + $0x140] sm:$0xff]
    %v1933 = vld [vmem:[%s3 + $0x148] sm:$0xff]
    %v1934 = vld [vmem:[%s3 + $0x150] sm:$0xff]
    %v1935 = vld [vmem:[%s3 + $0x158] sm:$0xff]
    %v1936 = vld [vmem:[%s3 + $0x160] sm:$0xff]
    %v1937 = vld [vmem:[%s3 + $0x168] sm:$0xff]
    %v1938 = vld [vmem:[%s3 + $0x170] sm:$0xff]
    %v1939 = vld [vmem:[%s3 + $0x178] sm:$0xff]
    %v1940 = vld [vmem:[%s3 + $0x180] sm:$0xff]
    %v1941 = vld [vmem:[%s3 + $0x188] sm:$0xff]
    %v1942 = vld [vmem:[%s3 + $0x190] sm:$0xff]
    %v1943 = vld [vmem:[%s3 + $0x198] sm:$0xff]
    %v1944 = vld [vmem:[%s3 + $0x1a0] sm:$0xff]
    %v1945 = vld [vmem:[%s3 + $0x1a8] sm:$0xff]
    %v1946 = vld [vmem:[%s3 + $0x1b0] sm:$0xff]
    %v1947 = vld [vmem:[%s3 + $0x1b8] sm:$0xff]
    %v1948 = vld [vmem:[%s3 + $0x1c0] sm:$0xff]
    %v1949 = vld [vmem:[%s3 + $0x1c8] sm:$0xff]
    %v1950 = vld [vmem:[%s3 + $0x1d0] sm:$0xff]
    %v1951 = vld [vmem:[%s3 + $0x1d8] sm:$0xff]
    %v1952 = vld [vmem:[%s3 + $0x1e0] sm:$0xff]
    %v1953 = vld [vmem:[%s3 + $0x1e8] sm:$0xff]
    %v1954 = vld [vmem:[%s3 + $0x1f0] sm:$0xff]
    %v1955 = vld [vmem:[%s3 + $0x1f8] sm:$0xff]
    %v1956 = vld [vmem:[%s3 + $0x200] sm:$0xff]
    %v1957 = vld [vmem:[%s3 + $0x208] sm:$0xff]
    %v1958 = vld [vmem:[%s3 + $0x210] sm:$0xff]
    %v1959 = vld [vmem:[%s3 + $0x218] sm:$0xff]
    %v1960 = vld [vmem:[%s3 + $0x220] sm:$0xff]
    %v1961 = vld [vmem:[%s3 + $0x228] sm:$0xff]
    %v1962 = vld [vmem:[%s3 + $0x230] sm:$0xff]
    %v1963 = vld [vmem:[%s3 + $0x238] sm:$0xff]
    %v1964 = vld [vmem:[%s3 + $0x240] sm:$0xff]
    %v1965 = vld [vmem:[%s3 + $0x248] sm:$0xff]
    %v1966 = vld [vmem:[%s3 + $0x250] sm:$0xff]
    %v1967 = vld [vmem:[%s3 + $0x258] sm:$0xff]
    %v1968 = vld [vmem:[%s3 + $0x260] sm:$0xff]
    %v1969 = vld [vmem:[%s3 + $0x268] sm:$0xff]
    %v1970 = vld [vmem:[%s3 + $0x270] sm:$0xff]
    %v1971 = vld [vmem:[%s3 + $0x278] sm:$0xff]
    %v1972 = vld [vmem:[%s3 + $0x280] sm:$0xff]
    %v1973 = vld [vmem:[%s3 + $0x288] sm:$0xff]
    %v1974 = vld [vmem:[%s3 + $0x290] sm:$0xff]
    %v1975 = vld [vmem:[%s3 + $0x298] sm:$0xff]
    %v1976 = vld [vmem:[%s3 + $0x2a0] sm:$0xff]
    %v1977 = vld [vmem:[%s3 + $0x2a8] sm:$0xff]
    %v1978 = vld [vmem:[%s3 + $0x2b0] sm:$0xff]
    %v1979 = vld [vmem:[%s3 + $0x2b8] sm:$0xff]
    %v1980 = vld [vmem:[%s3 + $0x2c0] sm:$0xff]
    %v1981 = vld [vmem:[%s3 + $0x2c8] sm:$0xff]
    %v1982 = vld [vmem:[%s3 + $0x2d0] sm:$0xff]
    %v1983 = vld [vmem:[%s3 + $0x2d8] sm:$0xff]
    %v1984 = vld [vmem:[%s3 + $0x2e0] sm:$0xff]
    %v1985 = vld [vmem:[%s3 + $0x2e8] sm:$0xff]
    %v1986 = vld [vmem:[%s3 + $0x2f0] sm:$0xff]
    %v1987 = vld [vmem:[%s3 + $0x2f8] sm:$0xff]
    %v1988 = vld [vmem:[%s3 + $0x300] sm:$0xff]
    %v1989 = vld [vmem:[%s3 + $0x308] sm:$0xff]
    %v1990 = vld [vmem:[%s3 + $0x310] sm:$0xff]
    %v1991 = vld [vmem:[%s3 + $0x318] sm:$0xff]
    %v1992 = vld [vmem:[%s3 + $0x320] sm:$0xff]
    %v1993 = vld [vmem:[%s3 + $0x328] sm:$0xff]
    %v1994 = vld [vmem:[%s3 + $0x330] sm:$0xff]
    %v1995 = vld [vmem:[%s3 + $0x338] sm:$0xff]
    %v1996 = vld [vmem:[%s3 + $0x340] sm:$0xff]
    %v1997 = vld [vmem:[%s3 + $0x348] sm:$0xff]
    %v1998 = vld [vmem:[%s3 + $0x350] sm:$0xff]
    %v1999 = vld [vmem:[%s3 + $0x358] sm:$0xff]
    %v2000 = vld [vmem:[%s3 + $0x360] sm:$0xff]
    %v2001 = vld [vmem:[%s3 + $0x368] sm:$0xff]
    %v2002 = vld [vmem:[%s3 + $0x370] sm:$0xff]
    %v2003 = vld [vmem:[%s3 + $0x378] sm:$0xff]
    %v2004 = vld [vmem:[%s3 + $0x380] sm:$0xff]
    %v2005 = vld [vmem:[%s3 + $0x388] sm:$0xff]
    %v2006 = vld [vmem:[%s3 + $0x390] sm:$0xff]
    %v2007 = vld [vmem:[%s3 + $0x398] sm:$0xff]
    %v2008 = vld [vmem:[%s3 + $0x3a0] sm:$0xff]
    %v2009 = vld [vmem:[%s3 + $0x3a8] sm:$0xff]
    %v2010 = vld [vmem:[%s3 + $0x3b0] sm:$0xff]
    %v2011 = vld [vmem:[%s3 + $0x3b8] sm:$0xff]
    %v2012 = vld [vmem:[%s3 + $0x3c0] sm:$0xff]
    %v2013 = vld [vmem:[%s3 + $0x3c8] sm:$0xff]
    %v2014 = vld [vmem:[%s3 + $0x3d0] sm:$0xff]
    %v2015 = vld [vmem:[%s3 + $0x3d8] sm:$0xff]
    %v2016 = vld [vmem:[%s3 + $0x3e0] sm:$0xff]
    %v2017 = vld [vmem:[%s3 + $0x3e8] sm:$0xff]
    %v2018 = vld [vmem:[%s3 + $0x3f0] sm:$0xff]
    %v2019 = vld [vmem:[%s3 + $0x3f8] sm:$0xff]
    %v2020 = vld [vmem:[%s3 + $0x400] sm:$0xff]
    %v2021 = vld [vmem:[%s3 + $0x408] sm:$0xff]
    %v2022 = vld [vmem:[%s3 + $0x410] sm:$0xff]
    %v2023 = vld [vmem:[%s3 + $0x418] sm:$0xff]
    %v2024 = vld [vmem:[%s3 + $0x420] sm:$0xff]
    %v2025 = vld [vmem:[%s3 + $0x428] sm:$0xff]
    %v2026 = vld [vmem:[%s3 + $0x430] sm:$0xff]
    %v2027 = vld [vmem:[%s3 + $0x438] sm:$0xff]
    %v2028 = vld [vmem:[%s3 + $0x440] sm:$0xff]
    %v2029 = vld [vmem:[%s3 + $0x448] sm:$0xff]
    %2030 = vmatpush.msra.mxu0 %v1917
    %2031 = vmatpush.msra.mxu0 %v1916
    %2032 = vmatpush.msra.mxu0 %v1915
    %2033 = vmatpush.msra.mxu0 %v1914
    %2034 = vmatpush.msra.mxu0 %v1913
    %2035 = vmatpush.msra.mxu0 %v1912
    %2036 = vmatpush.msra.mxu0 %v1911
    %2037 = vmatpush.msra.mxu0 %v1910
    %2038 = vmatpush.msra.mxu0 %v1909
    %2039 = vmatpush.msra.mxu0 %v1908
    %2040 = vmatpush.msra.mxu0 %v1907
    %2041 = vmatpush.msra.mxu0 %v1906
    %2042 = vmatpush.msra.mxu0 %v1905
    %2043 = vmatpush.msra.mxu0 %v1904
    %2044 = vmatpush.msra.mxu0 %v1903
    %2045 = vmatpush.msra.mxu0 %v1902
    %2046 = vmatmul.f32.gmra.mxu0 %v1676
    %v2047 = vpop.f32.mrf.mxu0
    %v2048 = vadd.f32 0.0, %v2047
    %2049 = vmatmul.f32.gmra.mxu0 %v1796
    %v2050 = vpop.f32.mrf.mxu0
    %v2051 = vadd.f32 0.0, %v2050
    %2052 = vdwg.mxu0
    %2053 = vmatpush.msra.mxu0 %v1933
    %2054 = vmatpush.msra.mxu0 %v1932
    %2055 = vmatpush.msra.mxu0 %v1931
    %2056 = vmatpush.msra.mxu0 %v1930
    %2057 = vmatpush.msra.mxu0 %v1929
    %2058 = vmatpush.msra.mxu0 %v1928
    %2059 = vmatpush.msra.mxu0 %v1927
    %2060 = vmatpush.msra.mxu0 %v1926
    %2061 = vmatpush.msra.mxu0 %v1925
    %2062 = vmatpush.msra.mxu0 %v1924
    %2063 = vmatpush.msra.mxu0 %v1923
    %2064 = vmatpush.msra.mxu0 %v1922
    %2065 = vmatpush.msra.mxu0 %v1921
    %2066 = vmatpush.msra.mxu0 %v1920
    %2067 = vmatpush.msra.mxu0 %v1919
    %2068 = vmatpush.msra.mxu0 %v1918
    %2069 = vmatmul.f32.gmra.mxu0 %v1691
    %v2070 = vpop.f32.mrf.mxu0
    %v2071 = vadd.f32 %v2048, %v2070
    %2072 = vmatmul.f32.gmra.mxu0 %v1811
    %v2073 = vpop.f32.mrf.mxu0
    %v2074 = vadd.f32 %v2051, %v2073
    %2075 = vdwg.mxu0
    %2076 = vmatpush.msra.mxu0 %v1949
    %2077 = vmatpush.msra.mxu0 %v1948
    %2078 = vmatpush.msra.mxu0 %v1947
    %2079 = vmatpush.msra.mxu0 %v1946
    %2080 = vmatpush.msra.mxu0 %v1945
    %2081 = vmatpush.msra.mxu0 %v1944
    %2082 = vmatpush.msra.mxu0 %v1943
    %2083 = vmatpush.msra.mxu0 %v1942
    %2084 = vmatpush.msra.mxu0 %v1941
    %2085 = vmatpush.msra.mxu0 %v1940
    %2086 = vmatpush.msra.mxu0 %v1939
    %2087 = vmatpush.msra.mxu0 %v1938
    %2088 = vmatpush.msra.mxu0 %v1937
    %2089 = vmatpush.msra.mxu0 %v1936
    %2090 = vmatpush.msra.mxu0 %v1935
    %2091 = vmatpush.msra.mxu0 %v1934
    %2092 = vmatmul.f32.gmra.mxu0 %v1706
    %v2093 = vpop.f32.mrf.mxu0
    %v2094 = vadd.f32 %v2071, %v2093
    %2095 = vmatmul.f32.gmra.mxu0 %v1826
    %v2096 = vpop.f32.mrf.mxu0
    %v2097 = vadd.f32 %v2074, %v2096
    %2098 = vdwg.mxu0
    %2099 = vmatpush.msra.mxu0 %v1965
    %2100 = vmatpush.msra.mxu0 %v1964
    %2101 = vmatpush.msra.mxu0 %v1963
    %2102 = vmatpush.msra.mxu0 %v1962
    %2103 = vmatpush.msra.mxu0 %v1961
    %2104 = vmatpush.msra.mxu0 %v1960
    %2105 = vmatpush.msra.mxu0 %v1959
    %2106 = vmatpush.msra.mxu0 %v1958
    %2107 = vmatpush.msra.mxu0 %v1957
    %2108 = vmatpush.msra.mxu0 %v1956
    %2109 = vmatpush.msra.mxu0 %v1955
    %2110 = vmatpush.msra.mxu0 %v1954
    %2111 = vmatpush.msra.mxu0 %v1953
    %2112 = vmatpush.msra.mxu0 %v1952
    %2113 = vmatpush.msra.mxu0 %v1951
    %2114 = vmatpush.msra.mxu0 %v1950
    %2115 = vmatmul.f32.gmra.mxu0 %v1721
    %v2116 = vpop.f32.mrf.mxu0
    %v2117 = vadd.f32 %v2094, %v2116
    %2118 = vmatmul.f32.gmra.mxu0 %v1841
    %v2119 = vpop.f32.mrf.mxu0
    %v2120 = vadd.f32 %v2097, %v2119
    %2121 = vdwg.mxu0
    %2122 = vmatpush.msra.mxu0 %v1981
    %2123 = vmatpush.msra.mxu0 %v1980
    %2124 = vmatpush.msra.mxu0 %v1979
    %2125 = vmatpush.msra.mxu0 %v1978
    %2126 = vmatpush.msra.mxu0 %v1977
    %2127 = vmatpush.msra.mxu0 %v1976
    %2128 = vmatpush.msra.mxu0 %v1975
    %2129 = vmatpush.msra.mxu0 %v1974
    %2130 = vmatpush.msra.mxu0 %v1973
    %2131 = vmatpush.msra.mxu0 %v1972
    %2132 = vmatpush.msra.mxu0 %v1971
    %2133 = vmatpush.msra.mxu0 %v1970
    %2134 = vmatpush.msra.mxu0 %v1969
    %2135 = vmatpush.msra.mxu0 %v1968
    %2136 = vmatpush.msra.mxu0 %v1967
    %2137 = vmatpush.msra.mxu0 %v1966
    %2138 = vmatmul.f32.gmra.mxu0 %v1736
    %v2139 = vpop.f32.mrf.mxu0
    %v2140 = vadd.f32 %v2117, %v2139
    %2141 = vmatmul.f32.gmra.mxu0 %v1856
    %v2142 = vpop.f32.mrf.mxu0
    %v2143 = vadd.f32 %v2120, %v2142
    %2144 = vdwg.mxu0
    %2145 = vmatpush.msra.mxu0 %v1997
    %2146 = vmatpush.msra.mxu0 %v1996
    %2147 = vmatpush.msra.mxu0 %v1995
    %2148 = vmatpush.msra.mxu0 %v1994
    %2149 = vmatpush.msra.mxu0 %v1993
    %2150 = vmatpush.msra.mxu0 %v1992
    %2151 = vmatpush.msra.mxu0 %v1991
    %2152 = vmatpush.msra.mxu0 %v1990
    %2153 = vmatpush.msra.mxu0 %v1989
    %2154 = vmatpush.msra.mxu0 %v1988
    %2155 = vmatpush.msra.mxu0 %v1987
    %2156 = vmatpush.msra.mxu0 %v1986
    %2157 = vmatpush.msra.mxu0 %v1985
    %2158 = vmatpush.msra.mxu0 %v1984
    %2159 = vmatpush.msra.mxu0 %v1983
    %2160 = vmatpush.msra.mxu0 %v1982
    %2161 = vmatmul.f32.gmra.mxu0 %v1751
    %v2162 = vpop.f32.mrf.mxu0
    %v2163 = vadd.f32 %v2140, %v2162
    %2164 = vmatmul.f32.gmra.mxu0 %v1871
    %v2165 = vpop.f32.mrf.mxu0
    %v2166 = vadd.f32 %v2143, %v2165
    %2167 = vdwg.mxu0
    %2168 = vmatpush.msra.mxu0 %v2013
    %2169 = vmatpush.msra.mxu0 %v2012
    %2170 = vmatpush.msra.mxu0 %v2011
    %2171 = vmatpush.msra.mxu0 %v2010
    %2172 = vmatpush.msra.mxu0 %v2009
    %2173 = vmatpush.msra.mxu0 %v2008
    %2174 = vmatpush.msra.mxu0 %v2007
    %2175 = vmatpush.msra.mxu0 %v2006
    %2176 = vmatpush.msra.mxu0 %v2005
    %2177 = vmatpush.msra.mxu0 %v2004
    %2178 = vmatpush.msra.mxu0 %v2003
    %2179 = vmatpush.msra.mxu0 %v2002
    %2180 = vmatpush.msra.mxu0 %v2001
    %2181 = vmatpush.msra.mxu0 %v2000
    %2182 = vmatpush.msra.mxu0 %v1999
    %2183 = vmatpush.msra.mxu0 %v1998
    %2184 = vmatmul.f32.gmra.mxu0 %v1766
    %v2185 = vpop.f32.mrf.mxu0
    %v2186 = vadd.f32 %v2163, %v2185
    %2187 = vmatmul.f32.gmra.mxu0 %v1886
    %v2188 = vpop.f32.mrf.mxu0
    %v2189 = vadd.f32 %v2166, %v2188
    %2190 = vdwg.mxu0
    %2191 = vmatpush.msra.mxu0 %v2029
    %2192 = vmatpush.msra.mxu0 %v2028
    %2193 = vmatpush.msra.mxu0 %v2027
    %2194 = vmatpush.msra.mxu0 %v2026
    %2195 = vmatpush.msra.mxu0 %v2025
    %2196 = vmatpush.msra.mxu0 %v2024
    %2197 = vmatpush.msra.mxu0 %v2023
    %2198 = vmatpush.msra.mxu0 %v2022
    %2199 = vmatpush.msra.mxu0 %v2021
    %2200 = vmatpush.msra.mxu0 %v2020
    %2201 = vmatpush.msra.mxu0 %v2019
    %2202 = vmatpush.msra.mxu0 %v2018
    %2203 = vmatpush.msra.mxu0 %v2017
    %2204 = vmatpush.msra.mxu0 %v2016
    %2205 = vmatpush.msra.mxu0 %v2015
    %2206 = vmatpush.msra.mxu0 %v2014
    %2207 = vmatmul.f32.gmra.mxu0 %v1781
    %v2208 = vpop.f32.mrf.mxu0
    %v2209 = vadd.f32 %v2186, %v2208
    %2210 = vmatmul.f32.gmra.mxu0 %v1901
    %v2211 = vpop.f32.mrf.mxu0
    %v2212 = vadd.f32 %v2189, %v2211
    %2213 = vdwg.mxu0
    %v2214 = vld [vmem:[%s4 + $0x8] sm:$0xff]
    %v2215 = vld [vmem:[%s4 + $0x18] sm:$0xff]
    %vm2216 = vcmp.gt.f32.partialorder %v2214, 0.0
    %vm2217 = vcmp.gt.f32.partialorder %v2215, 0.0
    %v2218 = vsel %vm2216, %v2209, -1e+30
    %v2219 = vsel %vm2217, %v2212, -1e+30
    %v2220 = vsel %vm34, %v2218, -inf
    %2221 = vmax.xlane.f32.xlu0 %v2220
    %v2222 = vpop.xlane.xlu0 %2221
    %v2223 = vsel %vm34, %v2219, -inf
    %2224 = vmax.xlane.f32.xlu0 %v2223
    %v2225 = vpop.xlane.xlu0 %2224
    %v2226 = vsub.f32 %v2218, %v2222
    %v2227 = vsub.f32 %v2219, %v2225
    %v2228 = vmul.f32 %v2226, 1.442695
    %v2229 = vpow.pop %v2228
    %v2230 = vmul.f32 %v2227, 1.442695
    %v2231 = vpow.pop %v2230
    %v2232 = vmul.f32 %v2229, %v2214
    %v2233 = vmul.f32 %v2231, %v2215
    %v2234 = vsel %vm34, %v2232, 0.0
    %2235 = vadd.xlane.f32.xlu0 %v2234
    %v2236 = vpop.xlane.xlu0 %2235
    %v2237 = vsel %vm34, %v2233, 0.0
    %2238 = vadd.xlane.f32.xlu0 %v2237
    %v2239 = vpop.xlane.xlu0 %2238
    %vm2240 = vcmp.gt.f32.partialorder %v2236, 0.0
    %vm2241 = vcmp.gt.f32.partialorder %v2239, 0.0
    %v2242 = vsel %vm2240, %v2236, 1.0
    %v2243 = vsel %vm2241, %v2239, 1.0
    %v2244 = vrcp.pop %v2242
    %v2245 = vrcp.pop %v2243
    %v2247 = vsel %vm34, %v2232, 0
    %v2250 = vsel %vm34, %v2233, 0
    %2252 = vmatpush.msra.mxu0 0.0
    %2253 = vmatpush.msra.mxu0 0.0
    %2254 = vmatpush.msra.mxu0 0.0
    %2255 = vmatpush.msra.mxu0 0.0
    %2256 = vmatpush.msra.mxu0 0.0
    %2257 = vmatpush.msra.mxu0 0.0
    %2258 = vmatpush.msra.mxu0 0.0
    %2259 = vmatpush.msra.mxu0 0.0
    %2260 = vmatpush.msra.mxu0 0.0
    %2261 = vmatpush.msra.mxu0 0.0
    %2262 = vmatpush.msra.mxu0 0.0
    %2263 = vmatpush.msra.mxu0 0.0
    %2264 = vmatpush.msra.mxu0 %v740
    %2265 = vmatpush.msra.mxu0 %v737
    %2266 = vmatpush.msra.mxu0 %v493
    %2267 = vmatpush.msra.mxu0 %v490
    %2268 = vmatmul.f32.gmra.mxu0 %v2247
    %v2269 = vpop.f32.mrf.mxu0
    %v2270 = vadd.f32 0.0, %v2269
    %2271 = vmatmul.f32.gmra.mxu0 %v2250
    %v2272 = vpop.f32.mrf.mxu0
    %v2273 = vadd.f32 0.0, %v2272
    %2274 = vdwg.mxu0
    %v2275 = vmul.f32 %v2270, %v2244
    %v2276 = vmul.f32 %v2273, %v2245
    %v2277 = vperm.slane %v21, 5
    %v2279 = vsel %vm34, %v2275, 0
    %v2282 = vsel %vm34, %v2276, 0
    %2284 = vmatpush.msra.mxu0 0.0
    %2285 = vmatpush.msra.mxu0 0.0
    %2286 = vmatpush.msra.mxu0 0.0
    %2287 = vmatpush.msra.mxu0 0.0
    %2288 = vmatpush.msra.mxu0 0.0
    %2289 = vmatpush.msra.mxu0 0.0
    %2290 = vmatpush.msra.mxu0 0.0
    %2291 = vmatpush.msra.mxu0 0.0
    %2292 = vmatpush.msra.mxu0 0.0
    %2293 = vmatpush.msra.mxu0 0.0
    %2294 = vmatpush.msra.mxu0 0.0
    %2295 = vmatpush.msra.mxu0 0.0
    %2296 = vmatpush.msra.mxu0 %v29
    %2297 = vmatpush.msra.mxu0 %v28
    %2298 = vmatpush.msra.mxu0 %v27
    %2299 = vmatpush.msra.mxu0 %v26
    %2300 = vmatmul.f32.gmra.mxu0 %v2279
    %v2301 = vpop.f32.mrf.mxu0
    %v2302 = vadd.f32 %v2277, %v2301
    %2303 = vmatmul.f32.gmra.mxu0 %v2282
    %v2304 = vpop.f32.mrf.mxu0
    %v2305 = vadd.f32 %v2277, %v2304
    %2306 = vdwg.mxu0
    %v2307 = vadd.f32 %v2302, %v1034
    %v2308 = vadd.f32 %v2305, %v1037
    %vm2309 = vcmp.gt.f32.partialorder %v2307, 0.0
    %vm2310 = vcmp.gt.f32.partialorder %v2308, 0.0
    %v2311 = vperm.slane %v21, 7
    %v2312 = vmul.f32 %v2311, %v2307
    %v2313 = vmul.f32 %v2311, %v2308
    %v2314 = vsel %vm2309, %v2307, %v2312
    %v2315 = vsel %vm2310, %v2308, %v2313
    %v2316 = vxor.u32 %v1590, 2147483648
    %v2317 = vxor.u32 %v1591, 2147483648
    %v2318 = vxor.u32 %v1592, 2147483648
    %v2319 = vxor.u32 %v1593, 2147483648
    %v2320 = vxor.u32 %v1594, 2147483648
    %v2321 = vxor.u32 %v1595, 2147483648
    %v2322 = vxor.u32 %v1596, 2147483648
    %v2323 = vxor.u32 %v1597, 2147483648
    %v2324 = vmul.f32 %v2316, 1.442695
    %v2325 = vpow.pop %v2324
    %v2326 = vmul.f32 %v2317, 1.442695
    %v2327 = vpow.pop %v2326
    %v2328 = vmul.f32 %v2318, 1.442695
    %v2329 = vpow.pop %v2328
    %v2330 = vmul.f32 %v2319, 1.442695
    %v2331 = vpow.pop %v2330
    %v2332 = vmul.f32 %v2320, 1.442695
    %v2333 = vpow.pop %v2332
    %v2334 = vmul.f32 %v2321, 1.442695
    %v2335 = vpow.pop %v2334
    %v2336 = vmul.f32 %v2322, 1.442695
    %v2337 = vpow.pop %v2336
    %v2338 = vmul.f32 %v2323, 1.442695
    %v2339 = vpow.pop %v2338
    %v2340 = vadd.f32 %v2325, 1.0
    %v2341 = vadd.f32 %v2327, 1.0
    %v2342 = vadd.f32 %v2329, 1.0
    %v2343 = vadd.f32 %v2331, 1.0
    %v2344 = vadd.f32 %v2333, 1.0
    %v2345 = vadd.f32 %v2335, 1.0
    %v2346 = vadd.f32 %v2337, 1.0
    %v2347 = vadd.f32 %v2339, 1.0
    %v2348 = vrcp.pop %v2340
    %v2349 = vmul.f32 %v2340, %v2348
    %v2350 = vsub.f32 1.0, %v2349
    %v2351 = vmul.f32 %v2348, %v2350
    %v2352 = vadd.f32 %v2348, %v2351
    %vm2353 = vweird.f32 %v2340
    %vm2354 = vweird.f32 %v2348
    %vm2355 = vmor %vm2353, %vm2354
    %v2356 = vsel %vm2355, %v2348, %v2352
    %v2357 = vand.u32 2147483647, %v2340
    %vm2358 = vcmp.eq.f32.partialorder %v2357, 8.507059e+37
    %v2359 = vand.u32 %v2340, 2147483648
    %v2360 = vor.u32 1.1754944e-38, %v2359
    %v2361 = vsel %vm2358, %v2360, %v2356
    %v2362 = vmul.f32 1.0, %v2361
    %v2363 = vrcp.pop %v2341
    %v2364 = vmul.f32 %v2341, %v2363
    %v2365 = vsub.f32 1.0, %v2364
    %v2366 = vmul.f32 %v2363, %v2365
    %v2367 = vadd.f32 %v2363, %v2366
    %vm2368 = vweird.f32 %v2341
    %vm2369 = vweird.f32 %v2363
    %vm2370 = vmor %vm2368, %vm2369
    %v2371 = vsel %vm2370, %v2363, %v2367
    %v2372 = vand.u32 2147483647, %v2341
    %vm2373 = vcmp.eq.f32.partialorder %v2372, 8.507059e+37
    %v2374 = vand.u32 %v2341, 2147483648
    %v2375 = vor.u32 1.1754944e-38, %v2374
    %v2376 = vsel %vm2373, %v2375, %v2371
    %v2377 = vmul.f32 1.0, %v2376
    %v2378 = vrcp.pop %v2342
    %v2379 = vmul.f32 %v2342, %v2378
    %v2380 = vsub.f32 1.0, %v2379
    %v2381 = vmul.f32 %v2378, %v2380
    %v2382 = vadd.f32 %v2378, %v2381
    %vm2383 = vweird.f32 %v2342
    %vm2384 = vweird.f32 %v2378
    %vm2385 = vmor %vm2383, %vm2384
    %v2386 = vsel %vm2385, %v2378, %v2382
    %v2387 = vand.u32 2147483647, %v2342
    %vm2388 = vcmp.eq.f32.partialorder %v2387, 8.507059e+37
    %v2389 = vand.u32 %v2342, 2147483648
    %v2390 = vor.u32 1.1754944e-38, %v2389
    %v2391 = vsel %vm2388, %v2390, %v2386
    %v2392 = vmul.f32 1.0, %v2391
    %v2393 = vrcp.pop %v2343
    %v2394 = vmul.f32 %v2343, %v2393
    %v2395 = vsub.f32 1.0, %v2394
    %v2396 = vmul.f32 %v2393, %v2395
    %v2397 = vadd.f32 %v2393, %v2396
    %vm2398 = vweird.f32 %v2343
    %vm2399 = vweird.f32 %v2393
    %vm2400 = vmor %vm2398, %vm2399
    %v2401 = vsel %vm2400, %v2393, %v2397
    %v2402 = vand.u32 2147483647, %v2343
    %vm2403 = vcmp.eq.f32.partialorder %v2402, 8.507059e+37
    %v2404 = vand.u32 %v2343, 2147483648
    %v2405 = vor.u32 1.1754944e-38, %v2404
    %v2406 = vsel %vm2403, %v2405, %v2401
    %v2407 = vmul.f32 1.0, %v2406
    %v2408 = vrcp.pop %v2344
    %v2409 = vmul.f32 %v2344, %v2408
    %v2410 = vsub.f32 1.0, %v2409
    %v2411 = vmul.f32 %v2408, %v2410
    %v2412 = vadd.f32 %v2408, %v2411
    %vm2413 = vweird.f32 %v2344
    %vm2414 = vweird.f32 %v2408
    %vm2415 = vmor %vm2413, %vm2414
    %v2416 = vsel %vm2415, %v2408, %v2412
    %v2417 = vand.u32 2147483647, %v2344
    %vm2418 = vcmp.eq.f32.partialorder %v2417, 8.507059e+37
    %v2419 = vand.u32 %v2344, 2147483648
    %v2420 = vor.u32 1.1754944e-38, %v2419
    %v2421 = vsel %vm2418, %v2420, %v2416
    %v2422 = vmul.f32 1.0, %v2421
    %v2423 = vrcp.pop %v2345
    %v2424 = vmul.f32 %v2345, %v2423
    %v2425 = vsub.f32 1.0, %v2424
    %v2426 = vmul.f32 %v2423, %v2425
    %v2427 = vadd.f32 %v2423, %v2426
    %vm2428 = vweird.f32 %v2345
    %vm2429 = vweird.f32 %v2423
    %vm2430 = vmor %vm2428, %vm2429
    %v2431 = vsel %vm2430, %v2423, %v2427
    %v2432 = vand.u32 2147483647, %v2345
    %vm2433 = vcmp.eq.f32.partialorder %v2432, 8.507059e+37
    %v2434 = vand.u32 %v2345, 2147483648
    %v2435 = vor.u32 1.1754944e-38, %v2434
    %v2436 = vsel %vm2433, %v2435, %v2431
    %v2437 = vmul.f32 1.0, %v2436
    %v2438 = vrcp.pop %v2346
    %v2439 = vmul.f32 %v2346, %v2438
    %v2440 = vsub.f32 1.0, %v2439
    %v2441 = vmul.f32 %v2438, %v2440
    %v2442 = vadd.f32 %v2438, %v2441
    %vm2443 = vweird.f32 %v2346
    %vm2444 = vweird.f32 %v2438
    %vm2445 = vmor %vm2443, %vm2444
    %v2446 = vsel %vm2445, %v2438, %v2442
    %v2447 = vand.u32 2147483647, %v2346
    %vm2448 = vcmp.eq.f32.partialorder %v2447, 8.507059e+37
    %v2449 = vand.u32 %v2346, 2147483648
    %v2450 = vor.u32 1.1754944e-38, %v2449
    %v2451 = vsel %vm2448, %v2450, %v2446
    %v2452 = vmul.f32 1.0, %v2451
    %v2453 = vrcp.pop %v2347
    %v2454 = vmul.f32 %v2347, %v2453
    %v2455 = vsub.f32 1.0, %v2454
    %v2456 = vmul.f32 %v2453, %v2455
    %v2457 = vadd.f32 %v2453, %v2456
    %vm2458 = vweird.f32 %v2347
    %vm2459 = vweird.f32 %v2453
    %vm2460 = vmor %vm2458, %vm2459
    %v2461 = vsel %vm2460, %v2453, %v2457
    %v2462 = vand.u32 2147483647, %v2347
    %vm2463 = vcmp.eq.f32.partialorder %v2462, 8.507059e+37
    %v2464 = vand.u32 %v2347, 2147483648
    %v2465 = vor.u32 1.1754944e-38, %v2464
    %v2466 = vsel %vm2463, %v2465, %v2461
    %v2467 = vmul.f32 1.0, %v2466
    %v2468 = vld [vmem:[%s3 + $0x450] sm:$0xff]
    %v2469 = vld [vmem:[%s3 + $0x458] sm:$0xff]
    %v2470 = vld [vmem:[%s3 + $0x460] sm:$0xff]
    %v2471 = vld [vmem:[%s3 + $0x468] sm:$0xff]
    %v2472 = vld [vmem:[%s3 + $0x470] sm:$0xff]
    %v2473 = vld [vmem:[%s3 + $0x478] sm:$0xff]
    %v2474 = vld [vmem:[%s3 + $0x480] sm:$0xff]
    %v2475 = vld [vmem:[%s3 + $0x488] sm:$0xff]
    %v2476 = vld [vmem:[%s3 + $0x490] sm:$0xff]
    %v2477 = vld [vmem:[%s3 + $0x498] sm:$0xff]
    %v2478 = vld [vmem:[%s3 + $0x4a0] sm:$0xff]
    %v2479 = vld [vmem:[%s3 + $0x4a8] sm:$0xff]
    %v2480 = vld [vmem:[%s3 + $0x4b0] sm:$0xff]
    %v2481 = vld [vmem:[%s3 + $0x4b8] sm:$0xff]
    %v2482 = vld [vmem:[%s3 + $0x4c0] sm:$0xff]
    %v2483 = vld [vmem:[%s3 + $0x4c8] sm:$0xff]
    %v2484 = vld [vmem:[%s3 + $0x4d0] sm:$0xff]
    %v2485 = vld [vmem:[%s3 + $0x4d8] sm:$0xff]
    %v2486 = vld [vmem:[%s3 + $0x4e0] sm:$0xff]
    %v2487 = vld [vmem:[%s3 + $0x4e8] sm:$0xff]
    %v2488 = vld [vmem:[%s3 + $0x4f0] sm:$0xff]
    %v2489 = vld [vmem:[%s3 + $0x4f8] sm:$0xff]
    %v2490 = vld [vmem:[%s3 + $0x500] sm:$0xff]
    %v2491 = vld [vmem:[%s3 + $0x508] sm:$0xff]
    %v2492 = vld [vmem:[%s3 + $0x510] sm:$0xff]
    %v2493 = vld [vmem:[%s3 + $0x518] sm:$0xff]
    %v2494 = vld [vmem:[%s3 + $0x520] sm:$0xff]
    %v2495 = vld [vmem:[%s3 + $0x528] sm:$0xff]
    %v2496 = vld [vmem:[%s3 + $0x530] sm:$0xff]
    %v2497 = vld [vmem:[%s3 + $0x538] sm:$0xff]
    %v2498 = vld [vmem:[%s3 + $0x540] sm:$0xff]
    %v2499 = vld [vmem:[%s3 + $0x548] sm:$0xff]
    %v2500 = vld [vmem:[%s3 + $0x550] sm:$0xff]
    %v2501 = vld [vmem:[%s3 + $0x558] sm:$0xff]
    %v2502 = vld [vmem:[%s3 + $0x560] sm:$0xff]
    %v2503 = vld [vmem:[%s3 + $0x568] sm:$0xff]
    %v2504 = vld [vmem:[%s3 + $0x570] sm:$0xff]
    %v2505 = vld [vmem:[%s3 + $0x578] sm:$0xff]
    %v2506 = vld [vmem:[%s3 + $0x580] sm:$0xff]
    %v2507 = vld [vmem:[%s3 + $0x588] sm:$0xff]
    %v2508 = vld [vmem:[%s3 + $0x590] sm:$0xff]
    %v2509 = vld [vmem:[%s3 + $0x598] sm:$0xff]
    %v2510 = vld [vmem:[%s3 + $0x5a0] sm:$0xff]
    %v2511 = vld [vmem:[%s3 + $0x5a8] sm:$0xff]
    %v2512 = vld [vmem:[%s3 + $0x5b0] sm:$0xff]
    %v2513 = vld [vmem:[%s3 + $0x5b8] sm:$0xff]
    %v2514 = vld [vmem:[%s3 + $0x5c0] sm:$0xff]
    %v2515 = vld [vmem:[%s3 + $0x5c8] sm:$0xff]
    %v2516 = vld [vmem:[%s3 + $0x5d0] sm:$0xff]
    %v2517 = vld [vmem:[%s3 + $0x5d8] sm:$0xff]
    %v2518 = vld [vmem:[%s3 + $0x5e0] sm:$0xff]
    %v2519 = vld [vmem:[%s3 + $0x5e8] sm:$0xff]
    %v2520 = vld [vmem:[%s3 + $0x5f0] sm:$0xff]
    %v2521 = vld [vmem:[%s3 + $0x5f8] sm:$0xff]
    %v2522 = vld [vmem:[%s3 + $0x600] sm:$0xff]
    %v2523 = vld [vmem:[%s3 + $0x608] sm:$0xff]
    %v2524 = vld [vmem:[%s3 + $0x610] sm:$0xff]
    %v2525 = vld [vmem:[%s3 + $0x618] sm:$0xff]
    %v2526 = vld [vmem:[%s3 + $0x620] sm:$0xff]
    %v2527 = vld [vmem:[%s3 + $0x628] sm:$0xff]
    %v2528 = vld [vmem:[%s3 + $0x630] sm:$0xff]
    %v2529 = vld [vmem:[%s3 + $0x638] sm:$0xff]
    %v2530 = vld [vmem:[%s3 + $0x640] sm:$0xff]
    %v2531 = vld [vmem:[%s3 + $0x648] sm:$0xff]
    %2532 = vmatpush.msra.mxu0 %v2483
    %2533 = vmatpush.msra.mxu0 %v2482
    %2534 = vmatpush.msra.mxu0 %v2481
    %2535 = vmatpush.msra.mxu0 %v2480
    %2536 = vmatpush.msra.mxu0 %v2479
    %2537 = vmatpush.msra.mxu0 %v2478
    %2538 = vmatpush.msra.mxu0 %v2477
    %2539 = vmatpush.msra.mxu0 %v2476
    %2540 = vmatpush.msra.mxu0 %v2475
    %2541 = vmatpush.msra.mxu0 %v2474
    %2542 = vmatpush.msra.mxu0 %v2473
    %2543 = vmatpush.msra.mxu0 %v2472
    %2544 = vmatpush.msra.mxu0 %v2471
    %2545 = vmatpush.msra.mxu0 %v2470
    %2546 = vmatpush.msra.mxu0 %v2469
    %2547 = vmatpush.msra.mxu0 %v2468
    %2548 = vmatmul.f32.gmra.mxu0 %v2362
    %v2549 = vpop.f32.mrf.mxu0
    %v2550 = vadd.f32 0.0, %v2549
    %2551 = vmatmul.f32.gmra.mxu0 %v2422
    %v2552 = vpop.f32.mrf.mxu0
    %v2553 = vadd.f32 0.0, %v2552
    %2554 = vdwg.mxu0
    %2555 = vmatpush.msra.mxu0 %v2499
    %2556 = vmatpush.msra.mxu0 %v2498
    %2557 = vmatpush.msra.mxu0 %v2497
    %2558 = vmatpush.msra.mxu0 %v2496
    %2559 = vmatpush.msra.mxu0 %v2495
    %2560 = vmatpush.msra.mxu0 %v2494
    %2561 = vmatpush.msra.mxu0 %v2493
    %2562 = vmatpush.msra.mxu0 %v2492
    %2563 = vmatpush.msra.mxu0 %v2491
    %2564 = vmatpush.msra.mxu0 %v2490
    %2565 = vmatpush.msra.mxu0 %v2489
    %2566 = vmatpush.msra.mxu0 %v2488
    %2567 = vmatpush.msra.mxu0 %v2487
    %2568 = vmatpush.msra.mxu0 %v2486
    %2569 = vmatpush.msra.mxu0 %v2485
    %2570 = vmatpush.msra.mxu0 %v2484
    %2571 = vmatmul.f32.gmra.mxu0 %v2377
    %v2572 = vpop.f32.mrf.mxu0
    %v2573 = vadd.f32 %v2550, %v2572
    %2574 = vmatmul.f32.gmra.mxu0 %v2437
    %v2575 = vpop.f32.mrf.mxu0
    %v2576 = vadd.f32 %v2553, %v2575
    %2577 = vdwg.mxu0
    %2578 = vmatpush.msra.mxu0 %v2515
    %2579 = vmatpush.msra.mxu0 %v2514
    %2580 = vmatpush.msra.mxu0 %v2513
    %2581 = vmatpush.msra.mxu0 %v2512
    %2582 = vmatpush.msra.mxu0 %v2511
    %2583 = vmatpush.msra.mxu0 %v2510
    %2584 = vmatpush.msra.mxu0 %v2509
    %2585 = vmatpush.msra.mxu0 %v2508
    %2586 = vmatpush.msra.mxu0 %v2507
    %2587 = vmatpush.msra.mxu0 %v2506
    %2588 = vmatpush.msra.mxu0 %v2505
    %2589 = vmatpush.msra.mxu0 %v2504
    %2590 = vmatpush.msra.mxu0 %v2503
    %2591 = vmatpush.msra.mxu0 %v2502
    %2592 = vmatpush.msra.mxu0 %v2501
    %2593 = vmatpush.msra.mxu0 %v2500
    %2594 = vmatmul.f32.gmra.mxu0 %v2392
    %v2595 = vpop.f32.mrf.mxu0
    %v2596 = vadd.f32 %v2573, %v2595
    %2597 = vmatmul.f32.gmra.mxu0 %v2452
    %v2598 = vpop.f32.mrf.mxu0
    %v2599 = vadd.f32 %v2576, %v2598
    %2600 = vdwg.mxu0
    %2601 = vmatpush.msra.mxu0 %v2531
    %2602 = vmatpush.msra.mxu0 %v2530
    %2603 = vmatpush.msra.mxu0 %v2529
    %2604 = vmatpush.msra.mxu0 %v2528
    %2605 = vmatpush.msra.mxu0 %v2527
    %2606 = vmatpush.msra.mxu0 %v2526
    %2607 = vmatpush.msra.mxu0 %v2525
    %2608 = vmatpush.msra.mxu0 %v2524
    %2609 = vmatpush.msra.mxu0 %v2523
    %2610 = vmatpush.msra.mxu0 %v2522
    %2611 = vmatpush.msra.mxu0 %v2521
    %2612 = vmatpush.msra.mxu0 %v2520
    %2613 = vmatpush.msra.mxu0 %v2519
    %2614 = vmatpush.msra.mxu0 %v2518
    %2615 = vmatpush.msra.mxu0 %v2517
    %2616 = vmatpush.msra.mxu0 %v2516
    %2617 = vmatmul.f32.gmra.mxu0 %v2407
    %v2618 = vpop.f32.mrf.mxu0
    %v2619 = vadd.f32 %v2596, %v2618
    %2620 = vmatmul.f32.gmra.mxu0 %v2467
    %v2621 = vpop.f32.mrf.mxu0
    %v2622 = vadd.f32 %v2599, %v2621
    %2623 = vdwg.mxu0
    %2626 = vrot.lane.b32.xlu0 %v2619, 32
    %v2627 = vpop.permute.xlu0 %2626
    %2628 = vrot.lane.b32.xlu0 %v2622, 32
    %v2629 = vpop.permute.xlu0 %2628
    %v2632 = vsel %vm2216, %v2627, -1e+30
    %v2633 = vsel %vm2217, %v2629, -1e+30
    %vm2634 = vcmask 523520
    %v2635 = vsel %vm2634, %v2632, -inf
    %2636 = vmax.xlane.f32.xlu0 %v2635
    %v2637 = vpop.xlane.xlu0 %2636
    %v2638 = vsel %vm2634, %v2633, -inf
    %2639 = vmax.xlane.f32.xlu0 %v2638
    %v2640 = vpop.xlane.xlu0 %2639
    %v2641 = vsub.f32 %v2632, %v2637
    %v2642 = vsub.f32 %v2633, %v2640
    %v2643 = vmul.f32 %v2641, 1.442695
    %v2644 = vpow.pop %v2643
    %v2645 = vmul.f32 %v2642, 1.442695
    %v2646 = vpow.pop %v2645
    %v2647 = vmul.f32 %v2644, %v2214
    %v2648 = vmul.f32 %v2646, %v2215
    %2651 = vrot.lane.b32.xlu0 %v2647, 96
    %v2652 = vpop.permute.xlu0 %2651
    %2653 = vrot.lane.b32.xlu0 %v2648, 96
    %v2654 = vpop.permute.xlu0 %2653
    %v2657 = vsel %vm34, %v2652, 0.0
    %2658 = vadd.xlane.f32.xlu0 %v2657
    %v2659 = vpop.xlane.xlu0 %2658
    %v2660 = vsel %vm34, %v2654, 0.0
    %2661 = vadd.xlane.f32.xlu0 %v2660
    %v2662 = vpop.xlane.xlu0 %2661
    %vm2663 = vcmp.gt.f32.partialorder %v2659, 0.0
    %vm2664 = vcmp.gt.f32.partialorder %v2662, 0.0
    %v2665 = vsel %vm2663, %v2659, 1.0
    %v2666 = vsel %vm2664, %v2662, 1.0
    %v2667 = vrcp.pop %v2665
    %v2668 = vrcp.pop %v2666
    %v2669 = vsel %vm34, %v2652, 0
    %v2671 = vsel %vm34, %v2654, 0
    %2673 = vmatpush.msra.mxu0 0.0
    %2674 = vmatpush.msra.mxu0 0.0
    %2675 = vmatpush.msra.mxu0 0.0
    %2676 = vmatpush.msra.mxu0 0.0
    %2677 = vmatpush.msra.mxu0 0.0
    %2678 = vmatpush.msra.mxu0 0.0
    %2679 = vmatpush.msra.mxu0 0.0
    %2680 = vmatpush.msra.mxu0 0.0
    %2681 = vmatpush.msra.mxu0 0.0
    %2682 = vmatpush.msra.mxu0 0.0
    %2683 = vmatpush.msra.mxu0 0.0
    %2684 = vmatpush.msra.mxu0 0.0
    %2685 = vmatpush.msra.mxu0 0.0
    %2686 = vmatpush.msra.mxu0 0.0
    %2687 = vmatpush.msra.mxu0 %v983
    %2688 = vmatpush.msra.mxu0 %v980
    %2689 = vmatmul.f32.gmra.mxu0 %v2669
    %v2690 = vpop.f32.mrf.mxu0
    %v2691 = vadd.f32 0.0, %v2690
    %2692 = vmatmul.f32.gmra.mxu0 %v2671
    %v2693 = vpop.f32.mrf.mxu0
    %v2694 = vadd.f32 0.0, %v2693
    %2695 = vdwg.mxu0
    %v2696 = vmul.f32 %v2691, %v2667
    %v2697 = vmul.f32 %v2694, %v2668
    %v2698 = vperm.slane %v21, 4
    %v2700 = vsel %vm34, %v2696, 0
    %v2703 = vsel %vm34, %v2697, 0
    %2705 = vmatpush.msra.mxu0 0.0
    %2706 = vmatpush.msra.mxu0 0.0
    %2707 = vmatpush.msra.mxu0 0.0
    %2708 = vmatpush.msra.mxu0 0.0
    %2709 = vmatpush.msra.mxu0 0.0
    %2710 = vmatpush.msra.mxu0 0.0
    %2711 = vmatpush.msra.mxu0 0.0
    %2712 = vmatpush.msra.mxu0 0.0
    %2713 = vmatpush.msra.mxu0 0.0
    %2714 = vmatpush.msra.mxu0 0.0
    %2715 = vmatpush.msra.mxu0 0.0
    %2716 = vmatpush.msra.mxu0 0.0
    %2717 = vmatpush.msra.mxu0 %v25
    %2718 = vmatpush.msra.mxu0 %v24
    %2719 = vmatpush.msra.mxu0 %v23
    %2720 = vmatpush.msra.mxu0 %v22
    %2721 = vmatmul.f32.gmra.mxu0 %v2700
    %v2722 = vpop.f32.mrf.mxu0
    %v2723 = vadd.f32 %v2698, %v2722
    %2724 = vmatmul.f32.gmra.mxu0 %v2703
    %v2725 = vpop.f32.mrf.mxu0
    %v2726 = vadd.f32 %v2698, %v2725
    %2727 = vdwg.mxu0
    %v2728 = vadd.f32 %v2723, %v1003
    %v2729 = vadd.f32 %v2726, %v1006
    %vm2730 = vcmp.gt.f32.partialorder %v2728, 0.0
    %vm2731 = vcmp.gt.f32.partialorder %v2729, 0.0
    %v2732 = vperm.slane %v21, 6
    %v2733 = vmul.f32 %v2732, %v2728
    %v2734 = vmul.f32 %v2732, %v2729
    %v2735 = vsel %vm2730, %v2728, %v2733
    %v2736 = vsel %vm2731, %v2729, %v2734
    %2737 = vst.msk [vmem:[#allocation2] sm:$0xff] %vm34, %v2735
    %2738 = vst.msk [vmem:[#allocation2 + $0x8] sm:$0xff] %vm34, %v2736
    %2739 = vst.msk [vmem:[#allocation2 + $0x10] sm:$0xff] %vm34, %v2314
    %2740 = vst.msk [vmem:[#allocation2 + $0x18] sm:$0xff] %vm34, %v2315
    // Predicated region
    $region22: #{tpu_custom_call.1} parent=1 // pred_check
      _
    $region23: #{tpu_custom_call.1} parent=1 // pred_check_branch
      %2742 = sbr.rel (0) target = $region25
    $region24: #{tpu_custom_call.1} parent=1 // pred_region
      %2744 = vsyncadd [#allocation3], 0
      %s2745 = sshll.u32 [#allocation2], 4
      %s2746 = int_to_ptr.vmem [resolvable:$true] %s2745
      %s2747 = sshll.u32 %s5, 4
      %s2748 = int_to_ptr.hbm [resolvable:$true] %s2747
      %2753 = dma.vmem_to_hbm [thread:$0]  %s2746, 512, %s2748, [#allocation3], 128, 128, 8
    $region25: #{tpu_custom_call.1} parent=1 // pred_fallthru
      _
    // Predicated region
    $region26: #{tpu_custom_call.1} parent=1 // pred_check
      _
    $region27: #{tpu_custom_call.1} parent=1 // pred_check_branch
      %2755 = sbr.rel (0) target = $region29
    $region28: #{tpu_custom_call.1} parent=1 // pred_region
      %2757 = dma.done [#allocation3], 512
    $region29: #{tpu_custom_call.1} parent=1 // pred_fallthru
      _
    %2758 = vsyncpa [#allocation3], 1

</llo_original>
